<compile_context>
chip_gen: v6e
topology: v6e:2x2x1
jax: 0.10.0
libtpu: 0.0.40
codegen_flags: <defaults>
</compile_context>

<pallas_src>
import functools

import jax
import jax.numpy as jnp
from jax.experimental import pallas as pl
from jax.experimental.pallas import tpu as pltpu


# ----------------------------------------------------------------------------
# Pallas kernels
# ----------------------------------------------------------------------------
def _round_up(x, m):
    return ((x + m - 1) // m) * m


_TM = 512  # M rows per grid step (review sweet-spot 512-1024; fits scoped VMEM)


def _mm_bias_kernel(x_ref, w_ref, b_ref, o_ref, *, relu):
    acc = jnp.dot(x_ref[...], w_ref[...], preferred_element_type=jnp.float32)
    acc = acc + b_ref[...]
    if relu:
        acc = jnp.maximum(acc, 0.0)
    o_ref[...] = acc


def matmul_bias(x, w, b, relu=False):
    """Fused y = x @ w + b (optional ReLU).  x:[M,K], w:[K,N], b:[N] -> f32 [M,N].

    bf16 operands / f32 accumulate; M tiled and pipelined; K and N are NOT
    padded (kernel blocks cover their full extent).
    """
    M, K = x.shape
    N = w.shape[1]
    xb = x.astype(jnp.bfloat16)
    wb = w.astype(jnp.bfloat16)
    bf = b.astype(jnp.float32).reshape(1, N)

    Mp = _round_up(M, 8)
    if Mp <= _TM:
        tm = Mp                      # single M tile, still no K/N padding
    else:
        tm = _TM                     # multiple of 8
        Mp = _round_up(M, _TM)
    if Mp != M:
        xb = jnp.pad(xb, ((0, Mp - M), (0, 0)))
    grid = (Mp // tm,)

    out = pl.pallas_call(
        functools.partial(_mm_bias_kernel, relu=relu),
        out_shape=jax.ShapeDtypeStruct((Mp, N), jnp.float32),
        grid=grid,
        in_specs=[
            pl.BlockSpec((tm, K), lambda i: (i, 0)),   # streamed / pipelined over M
            pl.BlockSpec((K, N), lambda i: (0, 0)),    # weights stay VMEM-resident
            pl.BlockSpec((1, N), lambda i: (0, 0)),    # bias stays resident
        ],
        out_specs=pl.BlockSpec((tm, N), lambda i: (i, 0)),
        compiler_params=pltpu.CompilerParams(
            dimension_semantics=("parallel",),         # megacore split on v7x
            vmem_limit_bytes=32 * 1024 * 1024,         # explicit budget (v5e/v7x safe)
        ),
    )(xb, wb, bf)
    return out[:M] if Mp != M else out


def _relproj_kernel(x_ref, a_ref, o_ref):
    x = x_ref[...]
    a = a_ref[...]
    # F.normalize(v, dim=1) = v / max(||v||, 1e-12) = v * rsqrt(max(||v||^2, 1e-24))
    xn = x * jax.lax.rsqrt(jnp.maximum(jnp.sum(x * x, axis=1, keepdims=True), 1e-24))
    an = a * jax.lax.rsqrt(jnp.maximum(jnp.sum(a * a, axis=1, keepdims=True), 1e-24))
    # einsum('im,jm->ij'): contract dim 1 of BOTH operands (no explicit transpose).
    o_ref[...] = jax.lax.dot_general(
        xn, an, dimension_numbers=(((1,), (1,)), ((), ())),
        preferred_element_type=jnp.float32)


def relative_projection(x, anchors):
    """Cosine-similarity matrix between L2-normalized rows of x and anchors."""
    B, D = x.shape
    A = anchors.shape[0]
    return pl.pallas_call(
        _relproj_kernel,
        out_shape=jax.ShapeDtypeStruct((B, A), jnp.float32),
        grid=(1,),
        in_specs=[
            pl.BlockSpec((B, D), lambda i: (0, 0)),
            pl.BlockSpec((A, D), lambda i: (0, 0)),
        ],
        out_specs=pl.BlockSpec((B, A), lambda i: (0, 0)),
        compiler_params=pltpu.CompilerParams(vmem_limit_bytes=32 * 1024 * 1024),
    )(x.astype(jnp.float32), anchors.astype(jnp.float32))


# ----------------------------------------------------------------------------
# Conv lowering (NHWC glue: im2col / dilation in XLA, fused matmul in Pallas)
# ----------------------------------------------------------------------------
def _im2col_nhwc(x, k, stride, pad_lo, pad_hi, out_dtype=jnp.bfloat16):
    """x: [N,H,W,C] -> patches [N*OH*OW, k*k*C] with K ordered (kh, kw, C)."""
    N, H, W, C = x.shape
    xp = jnp.pad(x, ((0, 0), (pad_lo, pad_hi), (pad_lo, pad_hi), (0, 0)))
    Hp, Wp = H + pad_lo + pad_hi, W + pad_lo + pad_hi
    OH = (Hp - k) // stride + 1
    OW = (Wp - k) // stride + 1
    cols = []
    for kh in range(k):
        for kw in range(k):
            cols.append(
                xp[:,
                   kh:kh + stride * (OH - 1) + 1:stride,
                   kw:kw + stride * (OW - 1) + 1:stride, :])
    patches = jnp.stack(cols, axis=3)                     # [N, OH, OW, k*k, C]
    patches = patches.reshape(N * OH * OW, k * k * C).astype(out_dtype)
    return patches, (N, OH, OW)


def conv2d_nhwc(x, wmat, b, k, stride, padding, relu=False):
    """x: NHWC, wmat: pre-packed [k*k*Cin, Cout] (bf16)."""
    patches, (N, OH, OW) = _im2col_nhwc(x, k, stride, padding, padding)
    y = matmul_bias(patches, wmat, b, relu=relu)          # [N*OH*OW, Cout]
    return y.reshape(N, OH, OW, -1)


def conv_transpose2d_nhwc(x, wmat, b, k, stride, padding, output_padding, relu=False):
    """x: NHWC, wmat: pre-packed equivalent direct-conv matrix [k*k*Cin, Cout]."""
    N, H, W, C = x.shape
    if stride > 1:  # dilate input with (stride-1) zeros between elements
        xd = jnp.zeros((N, (H - 1) * stride + 1, (W - 1) * stride + 1, C), x.dtype)
        xd = xd.at[:, ::stride, ::stride, :].set(x)
    else:
        xd = x
    pad_lo = k - 1 - padding
    pad_hi = k - 1 - padding + output_padding
    assert pad_lo >= 0, "conv_transpose2d lowering assumes padding <= k-1"
    patches, (N2, OH, OW) = _im2col_nhwc(xd, k, 1, pad_lo, pad_hi)
    y = matmul_bias(patches, wmat, b, relu=relu)
    return y.reshape(N2, OH, OW, -1)


# ----------------------------------------------------------------------------
# Parameters: PyTorch-layout init + one-time conversion to kernel layout
# ----------------------------------------------------------------------------
def init_params(key, layer_size, hidden_size):
    """Random params in PyTorch layouts (Conv2d / ConvTranspose2d / Linear)."""
    L = layer_size
    ks = jax.random.split(key, 14)

    def u(k, shape, fan_in):
        bound = 1.0 / (fan_in ** 0.5)
        return jax.random.uniform(k, shape, jnp.float32, -bound, bound)

    return {
        "enc_c1_w": u(ks[0], (L, 1, 3, 3), 9),
        "enc_c1_b": u(ks[1], (L,), 9),
        "enc_c2_w": u(ks[2], (2 * L, L, 3, 3), L * 9),
        "enc_c2_b": u(ks[3], (2 * L,), L * 9),
        "enc_fc_w": u(ks[4], (hidden_size, 7 * 7 * 2 * L), 7 * 7 * 2 * L),
        "enc_fc_b": u(ks[5], (hidden_size,), 7 * 7 * 2 * L),
        "dec_fc_w": u(ks[6], (7 * 7 * L, hidden_size), hidden_size),
        "dec_fc_b": u(ks[7], (7 * 7 * L,), hidden_size),
        "dec_t1_w": u(ks[8], (L, 2 * L, 3, 3), L * 9),
        "dec_t1_b": u(ks[9], (2 * L,), L * 9),
        "dec_t2_w": u(ks[10], (2 * L, L, 3, 3), 2 * L * 9),
        "dec_t2_b": u(ks[11], (L,), 2 * L * 9),
        "dec_t3_w": u(ks[12], (L, 1, 3, 3), L * 9),
        "dec_t3_b": u(ks[13], (1,), L * 9),
    }


def prepare_params(p, layer_size):
    """One-time (init-time) conversion of PyTorch-layout params to kernel layout.

    Conv weights -> [k*k*Cin, Cout] bf16 matrices (K ordered (kh,kw,Cin)),
    FC weights -> [K, N] bf16 with flatten/unflatten index order remapped from
    PyTorch's (C,H,W) to our NHWC (H,W,C) so semantics are preserved exactly.
    """
    L = layer_size

    def conv_mat(w):   # [Cout, Cin, k, k] -> [k*k*Cin, Cout]
        Cout, Cin, k, _ = w.shape
        return jnp.transpose(w, (2, 3, 1, 0)).reshape(k * k * Cin, Cout).astype(jnp.bfloat16)

    def convT_mat(w):  # [Cin, Cout, k, k] -> equivalent direct-conv [k*k*Cin, Cout]
        Cin, Cout, k, _ = w.shape
        wf = jnp.flip(w, axis=(2, 3))                       # spatial flip
        return jnp.transpose(wf, (2, 3, 0, 1)).reshape(k * k * Cin, Cout).astype(jnp.bfloat16)

    # encoder FC: columns were indexed in NCHW-flatten order (C,H,W) -> (H,W,C)
    hid_e = p["enc_fc_w"].shape[0]
    We = p["enc_fc_w"].reshape(hid_e, 2 * L, 7, 7).transpose(0, 2, 3, 1)
    enc_fc_w = jnp.transpose(We.reshape(hid_e, 7 * 7 * 2 * L)).astype(jnp.bfloat16)  # [K, hid]

    # decoder FC: rows were indexed in (C,H,W) unflatten order -> (H,W,C)
    hid_d = p["dec_fc_w"].shape[1]
    Wd = p["dec_fc_w"].reshape(L, 7, 7, hid_d).transpose(1, 2, 0, 3).reshape(7 * 7 * L, hid_d)
    dec_fc_w = jnp.transpose(Wd).astype(jnp.bfloat16)                                # [hid, 7*7*L]
    dec_fc_b = p["dec_fc_b"].reshape(L, 7, 7).transpose(1, 2, 0).reshape(-1).astype(jnp.float32)

    return {
        "enc_c1_w": conv_mat(p["enc_c1_w"]), "enc_c1_b": p["enc_c1_b"].astype(jnp.float32),
        "enc_c2_w": conv_mat(p["enc_c2_w"]), "enc_c2_b": p["enc_c2_b"].astype(jnp.float32),
        "enc_fc_w": enc_fc_w, "enc_fc_b": p["enc_fc_b"].astype(jnp.float32),
        "dec_fc_w": dec_fc_w, "dec_fc_b": dec_fc_b,
        "dec_t1_w": convT_mat(p["dec_t1_w"]), "dec_t1_b": p["dec_t1_b"].astype(jnp.float32),
        "dec_t2_w": convT_mat(p["dec_t2_w"]), "dec_t2_b": p["dec_t2_b"].astype(jnp.float32),
        "dec_t3_w": convT_mat(p["dec_t3_w"]), "dec_t3_b": p["dec_t3_b"].astype(jnp.float32),
    }


# ----------------------------------------------------------------------------
# AutoEncoder forward (matches the PyTorch module; activations are NHWC inside)
# ----------------------------------------------------------------------------
def encoder(p, x_nhwc):
    h = conv2d_nhwc(x_nhwc, p["enc_c1_w"], p["enc_c1_b"], 3, stride=2, padding=1, relu=True)
    h = conv2d_nhwc(h,       p["enc_c2_w"], p["enc_c2_b"], 3, stride=2, padding=1, relu=True)
    h = h.reshape(h.shape[0], -1)                           # flatten (H,W,C)
    return matmul_bias(h, p["enc_fc_w"], p["enc_fc_b"], relu=False)


def decoder(p, z, layer_size):
    L = layer_size
    h = matmul_bias(z, p["dec_fc_w"], p["dec_fc_b"], relu=True)      # (H,W,C)-ordered
    h = h.reshape(h.shape[0], 7, 7, L)                                # NHWC unflatten
    h = conv_transpose2d_nhwc(h, p["dec_t1_w"], p["dec_t1_b"], 3, 2, 1, 1, relu=True)
    h = conv_transpose2d_nhwc(h, p["dec_t2_w"], p["dec_t2_b"], 3, 2, 1, 1, relu=True)
    h = conv_transpose2d_nhwc(h, p["dec_t3_w"], p["dec_t3_b"], 3, 1, 1, 0, relu=False)
    return h                                                          # NHWC


def autoencoder_forward(p, x_nchw, layer_size, anchors_nchw=None, use_relative_space=False):
    x = jnp.transpose(x_nchw, (0, 2, 3, 1))                 # NCHW -> NHWC once
    if use_relative_space:
        a = jnp.transpose(anchors_nchw, (0, 2, 3, 1))
        B = x.shape[0]
        enc_both = encoder(p, jnp.concatenate([x, a], axis=0))   # single batched pass
        encoded, new_anchors = enc_both[:B], enc_both[B:]         # (no_grad is grad-only)
        encoded = relative_projection(encoded, new_anchors)
    else:
        encoded = encoder(p, x)
    out = decoder(p, encoded, layer_size)
    return jnp.transpose(out, (0, 3, 1, 2))                 # NHWC -> NCHW at the boundary


# ----------------------------------------------------------------------------
if __name__ == "__main__":
    key = jax.random.PRNGKey(0)
    kx, ka, kp1, kp2 = jax.random.split(key, 4)

    LAYER_SIZE = 8          # Conv2d channel multiplier (kept small)
    HIDDEN_SIZE = 32        # latent size for the non-relative path
    x = jax.random.normal(kx, (2, 1, 28, 28), jnp.float32)           # NCHW
    anchors = jax.random.normal(ka, (16, 1, 28, 28), jnp.float32)    # NCHW

    # default path: use_relative_space=False
    params = prepare_params(init_params(kp1, LAYER_SIZE, HIDDEN_SIZE), LAYER_SIZE)
    fwd = jax.jit(lambda p, xx: autoencoder_forward(p, xx, LAYER_SIZE))
    out = jax.block_until_ready(fwd(params, x))
    assert out.shape == (2, 1, 28, 28), out.shape

    # relative-space path: hidden_size == number of anchors
    params_rel = prepare_params(init_params(kp2, LAYER_SIZE, anchors.shape[0]), LAYER_SIZE)
    fwd_rel = jax.jit(lambda p, xx, aa: autoencoder_forward(
        p, xx, LAYER_SIZE, anchors_nchw=aa, use_relative_space=True))
    out_rel = jax.block_until_ready(fwd_rel(params_rel, x, anchors))
    assert out_rel.shape == (2, 1, 28, 28), out_rel.shape

    print("KERNEL_OK")
</pallas_src>

<mosaic_0001>
module attributes {stable_mosaic.version = 11 : i64} {
  func.func @_mm_bias_kernel(%arg0: i32, %arg1: memref<392x9xbf16, #tpu.memory_space<vmem>>, %arg2: memref<9x8xbf16, #tpu.memory_space<vmem>>, %arg3: memref<1x8xf32, #tpu.memory_space<vmem>>, %arg4: memref<392x8xf32, #tpu.memory_space<vmem>>) attributes {dimension_semantics = [#tpu.dimension_semantics<parallel>], iteration_bounds = array<i64: 1>, scalar_prefetch = 0 : i64, scratch_operands = 0 : i64, tpu.core_type = #tpu.core_type<tc>, window_params = [{transform_indices = @transform_0, window_bounds = array<i64: 392, 9>}, {pipeline_mode = #tpu.pipeline_mode<synchronous>, transform_indices = @transform_1, window_bounds = array<i64: 9, 8>}, {pipeline_mode = #tpu.pipeline_mode<synchronous>, transform_indices = @transform_2, window_bounds = array<i64: 1, 8>}, {transform_indices = @transform_3, window_bounds = array<i64: 392, 8>}]} {
    %c0 = arith.constant 0 : index
    %c0_0 = arith.constant 0 : index
    %0 = vector.load %arg1[%c0, %c0_0] : memref<392x9xbf16, #tpu.memory_space<vmem>>, vector<392x9xbf16>
    %c0_1 = arith.constant 0 : index
    %c0_2 = arith.constant 0 : index
    %1 = vector.load %arg2[%c0_1, %c0_2] : memref<9x8xbf16, #tpu.memory_space<vmem>>, vector<9x8xbf16>
    %cst = arith.constant dense<0.000000e+00> : vector<392x8xf32>
    %2 = tpu.matmul %0, %1, %cst {dimension_numbers = #tpu.dot_dimension_numbers<[1], [0], [0], [1], [0, 0, 1, 1], [], []>} : vector<392x9xbf16>, vector<9x8xbf16>, vector<392x8xf32> -> vector<392x8xf32>
    %c0_3 = arith.constant 0 : index
    %c0_4 = arith.constant 0 : index
    %3 = vector.load %arg3[%c0_3, %c0_4] : memref<1x8xf32, #tpu.memory_space<vmem>>, vector<1x8xf32>
    %4 = vector.broadcast %3 : vector<1x8xf32> to vector<392x8xf32>
    %5 = arith.addf %2, %4 : vector<392x8xf32>
    %cst_5 = arith.constant 0.000000e+00 : f32
    %6 = vector.broadcast %cst_5 : f32 to vector<392x8xf32>
    %7 = arith.maximumf %5, %6 : vector<392x8xf32>
    %c0_6 = arith.constant 0 : index
    %c0_7 = arith.constant 0 : index
    %8 = vector.load %arg4[%c0_6, %c0_7] : memref<392x8xf32, #tpu.memory_space<vmem>>, vector<392x8xf32>
    tpu.vector_store %arg4[%c0_6, %c0_7], %7 {strides = array<i32>} : memref<392x8xf32, #tpu.memory_space<vmem>>, vector<392x8xf32>,
    return
  }
  func.func @transform_0(%arg0: i32) -> (i32, i32) {
    %c0_i32 = arith.constant 0 : i32
    %c0_i32_0 = arith.constant 0 : i32
    return %arg0, %c0_i32 : i32, i32
  }
  func.func @transform_1(%arg0: i32) -> (i32, i32) {
    %c0_i32 = arith.constant 0 : i32
    %c0_i32_0 = arith.constant 0 : i32
    %c0_i32_1 = arith.constant 0 : i32
    return %c0_i32, %c0_i32_0 : i32, i32
  }
  func.func @transform_2(%arg0: i32) -> (i32, i32) {
    %c0_i32 = arith.constant 0 : i32
    %c0_i32_0 = arith.constant 0 : i32
    %c0_i32_1 = arith.constant 0 : i32
    return %c0_i32, %c0_i32_0 : i32, i32
  }
  func.func @transform_3(%arg0: i32) -> (i32, i32) {
    %c0_i32 = arith.constant 0 : i32
    %c0_i32_0 = arith.constant 0 : i32
    return %arg0, %c0_i32 : i32, i32
  }
}

module attributes {stable_mosaic.version = 11 : i64} {
  func.func @_mm_bias_kernel(%arg0: i32, %arg1: memref<104x72xbf16, #tpu.memory_space<vmem>>, %arg2: memref<72x16xbf16, #tpu.memory_space<vmem>>, %arg3: memref<1x16xf32, #tpu.memory_space<vmem>>, %arg4: memref<104x16xf32, #tpu.memory_space<vmem>>) attributes {dimension_semantics = [#tpu.dimension_semantics<parallel>], iteration_bounds = array<i64: 1>, scalar_prefetch = 0 : i64, scratch_operands = 0 : i64, tpu.core_type = #tpu.core_type<tc>, window_params = [{transform_indices = @transform_0, window_bounds = array<i64: 104, 72>}, {pipeline_mode = #tpu.pipeline_mode<synchronous>, transform_indices = @transform_1, window_bounds = array<i64: 72, 16>}, {pipeline_mode = #tpu.pipeline_mode<synchronous>, transform_indices = @transform_2, window_bounds = array<i64: 1, 16>}, {transform_indices = @transform_3, window_bounds = array<i64: 104, 16>}]} {
    %c0 = arith.constant 0 : index
    %c0_0 = arith.constant 0 : index
    %0 = vector.load %arg1[%c0, %c0_0] : memref<104x72xbf16, #tpu.memory_space<vmem>>, vector<104x72xbf16>
    %c0_1 = arith.constant 0 : index
    %c0_2 = arith.constant 0 : index
    %1 = vector.load %arg2[%c0_1, %c0_2] : memref<72x16xbf16, #tpu.memory_space<vmem>>, vector<72x16xbf16>
    %cst = arith.constant dense<0.000000e+00> : vector<104x16xf32>
    %2 = tpu.matmul %0, %1, %cst {dimension_numbers = #tpu.dot_dimension_numbers<[1], [0], [0], [1], [0, 0, 1, 1], [], []>} : vector<104x72xbf16>, vector<72x16xbf16>, vector<104x16xf32> -> vector<104x16xf32>
    %c0_3 = arith.constant 0 : index
    %c0_4 = arith.constant 0 : index
    %3 = vector.load %arg3[%c0_3, %c0_4] : memref<1x16xf32, #tpu.memory_space<vmem>>, vector<1x16xf32>
    %4 = vector.broadcast %3 : vector<1x16xf32> to vector<104x16xf32>
    %5 = arith.addf %2, %4 : vector<104x16xf32>
    %cst_5 = arith.constant 0.000000e+00 : f32
    %6 = vector.broadcast %cst_5 : f32 to vector<104x16xf32>
    %7 = arith.maximumf %5, %6 : vector<104x16xf32>
    %c0_6 = arith.constant 0 : index
    %c0_7 = arith.constant 0 : index
    %8 = vector.load %arg4[%c0_6, %c0_7] : memref<104x16xf32, #tpu.memory_space<vmem>>, vector<104x16xf32>
    tpu.vector_store %arg4[%c0_6, %c0_7], %7 {strides = array<i32>} : memref<104x16xf32, #tpu.memory_space<vmem>>, vector<104x16xf32>,
    return
  }
  func.func @transform_0(%arg0: i32) -> (i32, i32) {
    %c0_i32 = arith.constant 0 : i32
    %c0_i32_0 = arith.constant 0 : i32
    return %arg0, %c0_i32 : i32, i32
  }
  func.func @transform_1(%arg0: i32) -> (i32, i32) {
    %c0_i32 = arith.constant 0 : i32
    %c0_i32_0 = arith.constant 0 : i32
    %c0_i32_1 = arith.constant 0 : i32
    return %c0_i32, %c0_i32_0 : i32, i32
  }
  func.func @transform_2(%arg0: i32) -> (i32, i32) {
    %c0_i32 = arith.constant 0 : i32
    %c0_i32_0 = arith.constant 0 : i32
    %c0_i32_1 = arith.constant 0 : i32
    return %c0_i32, %c0_i32_0 : i32, i32
  }
  func.func @transform_3(%arg0: i32) -> (i32, i32) {
    %c0_i32 = arith.constant 0 : i32
    %c0_i32_0 = arith.constant 0 : i32
    return %arg0, %c0_i32 : i32, i32
  }
}

module attributes {stable_mosaic.version = 11 : i64} {
  func.func @_mm_bias_kernel(%arg0: i32, %arg1: memref<8x32xbf16, #tpu.memory_space<vmem>>, %arg2: memref<32x392xbf16, #tpu.memory_space<vmem>>, %arg3: memref<1x392xf32, #tpu.memory_space<vmem>>, %arg4: memref<8x392xf32, #tpu.memory_space<vmem>>) attributes {dimension_semantics = [#tpu.dimension_semantics<parallel>], iteration_bounds = array<i64: 1>, scalar_prefetch = 0 : i64, scratch_operands = 0 : i64, tpu.core_type = #tpu.core_type<tc>, window_params = [{transform_indices = @transform_0, window_bounds = array<i64: 8, 32>}, {pipeline_mode = #tpu.pipeline_mode<synchronous>, transform_indices = @transform_1, window_bounds = array<i64: 32, 392>}, {pipeline_mode = #tpu.pipeline_mode<synchronous>, transform_indices = @transform_2, window_bounds = array<i64: 1, 392>}, {transform_indices = @transform_3, window_bounds = array<i64: 8, 392>}]} {
    %c0 = arith.constant 0 : index
    %c0_0 = arith.constant 0 : index
    %0 = vector.load %arg1[%c0, %c0_0] : memref<8x32xbf16, #tpu.memory_space<vmem>>, vector<8x32xbf16>
    %c0_1 = arith.constant 0 : index
    %c0_2 = arith.constant 0 : index
    %1 = vector.load %arg2[%c0_1, %c0_2] : memref<32x392xbf16, #tpu.memory_space<vmem>>, vector<32x392xbf16>
    %cst = arith.constant dense<0.000000e+00> : vector<8x392xf32>
    %2 = tpu.matmul %0, %1, %cst {dimension_numbers = #tpu.dot_dimension_numbers<[1], [0], [0], [1], [0, 0, 1, 1], [], []>} : vector<8x32xbf16>, vector<32x392xbf16>, vector<8x392xf32> -> vector<8x392xf32>
    %c0_3 = arith.constant 0 : index
    %c0_4 = arith.constant 0 : index
    %3 = vector.load %arg3[%c0_3, %c0_4] : memref<1x392xf32, #tpu.memory_space<vmem>>, vector<1x392xf32>
    %4 = vector.broadcast %3 : vector<1x392xf32> to vector<8x392xf32>
    %5 = arith.addf %2, %4 : vector<8x392xf32>
    %cst_5 = arith.constant 0.000000e+00 : f32
    %6 = vector.broadcast %cst_5 : f32 to vector<8x392xf32>
    %7 = arith.maximumf %5, %6 : vector<8x392xf32>
    %c0_6 = arith.constant 0 : index
    %c0_7 = arith.constant 0 : index
    %8 = vector.load %arg4[%c0_6, %c0_7] : memref<8x392xf32, #tpu.memory_space<vmem>>, vector<8x392xf32>
    tpu.vector_store %arg4[%c0_6, %c0_7], %7 {strides = array<i32>} : memref<8x392xf32, #tpu.memory_space<vmem>>, vector<8x392xf32>,
    return
  }
  func.func @transform_0(%arg0: i32) -> (i32, i32) {
    %c0_i32 = arith.constant 0 : i32
    %c0_i32_0 = arith.constant 0 : i32
    return %arg0, %c0_i32 : i32, i32
  }
  func.func @transform_1(%arg0: i32) -> (i32, i32) {
    %c0_i32 = arith.constant 0 : i32
    %c0_i32_0 = arith.constant 0 : i32
    %c0_i32_1 = arith.constant 0 : i32
    return %c0_i32, %c0_i32_0 : i32, i32
  }
  func.func @transform_2(%arg0: i32) -> (i32, i32) {
    %c0_i32 = arith.constant 0 : i32
    %c0_i32_0 = arith.constant 0 : i32
    %c0_i32_1 = arith.constant 0 : i32
    return %c0_i32, %c0_i32_0 : i32, i32
  }
  func.func @transform_3(%arg0: i32) -> (i32, i32) {
    %c0_i32 = arith.constant 0 : i32
    %c0_i32_0 = arith.constant 0 : i32
    return %arg0, %c0_i32 : i32, i32
  }
}

module attributes {stable_mosaic.version = 11 : i64} {
  func.func @_mm_bias_kernel(%arg0: i32, %arg1: memref<8x784xbf16, #tpu.memory_space<vmem>>, %arg2: memref<784x32xbf16, #tpu.memory_space<vmem>>, %arg3: memref<1x32xf32, #tpu.memory_space<vmem>>, %arg4: memref<8x32xf32, #tpu.memory_space<vmem>>) attributes {dimension_semantics = [#tpu.dimension_semantics<parallel>], iteration_bounds = array<i64: 1>, scalar_prefetch = 0 : i64, scratch_operands = 0 : i64, tpu.core_type = #tpu.core_type<tc>, window_params = [{transform_indices = @transform_0, window_bounds = array<i64: 8, 784>}, {pipeline_mode = #tpu.pipeline_mode<synchronous>, transform_indices = @transform_1, window_bounds = array<i64: 784, 32>}, {pipeline_mode = #tpu.pipeline_mode<synchronous>, transform_indices = @transform_2, window_bounds = array<i64: 1, 32>}, {transform_indices = @transform_3, window_bounds = array<i64: 8, 32>}]} {
    %c0 = arith.constant 0 : index
    %c0_0 = arith.constant 0 : index
    %0 = vector.load %arg1[%c0, %c0_0] : memref<8x784xbf16, #tpu.memory_space<vmem>>, vector<8x784xbf16>
    %c0_1 = arith.constant 0 : index
    %c0_2 = arith.constant 0 : index
    %1 = vector.load %arg2[%c0_1, %c0_2] : memref<784x32xbf16, #tpu.memory_space<vmem>>, vector<784x32xbf16>
    %cst = arith.constant dense<0.000000e+00> : vector<8x32xf32>
    %2 = tpu.matmul %0, %1, %cst {dimension_numbers = #tpu.dot_dimension_numbers<[1], [0], [0], [1], [0, 0, 1, 1], [], []>} : vector<8x784xbf16>, vector<784x32xbf16>, vector<8x32xf32> -> vector<8x32xf32>
    %c0_3 = arith.constant 0 : index
    %c0_4 = arith.constant 0 : index
    %3 = vector.load %arg3[%c0_3, %c0_4] : memref<1x32xf32, #tpu.memory_space<vmem>>, vector<1x32xf32>
    %4 = vector.broadcast %3 : vector<1x32xf32> to vector<8x32xf32>
    %5 = arith.addf %2, %4 : vector<8x32xf32>
    %c0_5 = arith.constant 0 : index
    %c0_6 = arith.constant 0 : index
    %6 = vector.load %arg4[%c0_5, %c0_6] : memref<8x32xf32, #tpu.memory_space<vmem>>, vector<8x32xf32>
    tpu.vector_store %arg4[%c0_5, %c0_6], %5 {strides = array<i32>} : memref<8x32xf32, #tpu.memory_space<vmem>>, vector<8x32xf32>,
    return
  }
  func.func @transform_0(%arg0: i32) -> (i32, i32) {
    %c0_i32 = arith.constant 0 : i32
    %c0_i32_0 = arith.constant 0 : i32
    return %arg0, %c0_i32 : i32, i32
  }
  func.func @transform_1(%arg0: i32) -> (i32, i32) {
    %c0_i32 = arith.constant 0 : i32
    %c0_i32_0 = arith.constant 0 : i32
    %c0_i32_1 = arith.constant 0 : i32
    return %c0_i32, %c0_i32_0 : i32, i32
  }
  func.func @transform_2(%arg0: i32) -> (i32, i32) {
    %c0_i32 = arith.constant 0 : i32
    %c0_i32_0 = arith.constant 0 : i32
    %c0_i32_1 = arith.constant 0 : i32
    return %c0_i32, %c0_i32_0 : i32, i32
  }
  func.func @transform_3(%arg0: i32) -> (i32, i32) {
    %c0_i32 = arith.constant 0 : i32
    %c0_i32_0 = arith.constant 0 : i32
    return %arg0, %c0_i32 : i32, i32
  }
}

module attributes {stable_mosaic.version = 11 : i64} {
  func.func @_mm_bias_kernel(%arg0: i32, %arg1: memref<392x72xbf16, #tpu.memory_space<vmem>>, %arg2: memref<72x16xbf16, #tpu.memory_space<vmem>>, %arg3: memref<1x16xf32, #tpu.memory_space<vmem>>, %arg4: memref<392x16xf32, #tpu.memory_space<vmem>>) attributes {dimension_semantics = [#tpu.dimension_semantics<parallel>], iteration_bounds = array<i64: 1>, scalar_prefetch = 0 : i64, scratch_operands = 0 : i64, tpu.core_type = #tpu.core_type<tc>, window_params = [{transform_indices = @transform_0, window_bounds = array<i64: 392, 72>}, {pipeline_mode = #tpu.pipeline_mode<synchronous>, transform_indices = @transform_1, window_bounds = array<i64: 72, 16>}, {pipeline_mode = #tpu.pipeline_mode<synchronous>, transform_indices = @transform_2, window_bounds = array<i64: 1, 16>}, {transform_indices = @transform_3, window_bounds = array<i64: 392, 16>}]} {
    %c0 = arith.constant 0 : index
    %c0_0 = arith.constant 0 : index
    %0 = vector.load %arg1[%c0, %c0_0] : memref<392x72xbf16, #tpu.memory_space<vmem>>, vector<392x72xbf16>
    %c0_1 = arith.constant 0 : index
    %c0_2 = arith.constant 0 : index
    %1 = vector.load %arg2[%c0_1, %c0_2] : memref<72x16xbf16, #tpu.memory_space<vmem>>, vector<72x16xbf16>
    %cst = arith.constant dense<0.000000e+00> : vector<392x16xf32>
    %2 = tpu.matmul %0, %1, %cst {dimension_numbers = #tpu.dot_dimension_numbers<[1], [0], [0], [1], [0, 0, 1, 1], [], []>} : vector<392x72xbf16>, vector<72x16xbf16>, vector<392x16xf32> -> vector<392x16xf32>
    %c0_3 = arith.constant 0 : index
    %c0_4 = arith.constant 0 : index
    %3 = vector.load %arg3[%c0_3, %c0_4] : memref<1x16xf32, #tpu.memory_space<vmem>>, vector<1x16xf32>
    %4 = vector.broadcast %3 : vector<1x16xf32> to vector<392x16xf32>
    %5 = arith.addf %2, %4 : vector<392x16xf32>
    %cst_5 = arith.constant 0.000000e+00 : f32
    %6 = vector.broadcast %cst_5 : f32 to vector<392x16xf32>
    %7 = arith.maximumf %5, %6 : vector<392x16xf32>
    %c0_6 = arith.constant 0 : index
    %c0_7 = arith.constant 0 : index
    %8 = vector.load %arg4[%c0_6, %c0_7] : memref<392x16xf32, #tpu.memory_space<vmem>>, vector<392x16xf32>
    tpu.vector_store %arg4[%c0_6, %c0_7], %7 {strides = array<i32>} : memref<392x16xf32, #tpu.memory_space<vmem>>, vector<392x16xf32>,
    return
  }
  func.func @transform_0(%arg0: i32) -> (i32, i32) {
    %c0_i32 = arith.constant 0 : i32
    %c0_i32_0 = arith.constant 0 : i32
    return %arg0, %c0_i32 : i32, i32
  }
  func.func @transform_1(%arg0: i32) -> (i32, i32) {
    %c0_i32 = arith.constant 0 : i32
    %c0_i32_0 = arith.constant 0 : i32
    %c0_i32_1 = arith.constant 0 : i32
    return %c0_i32, %c0_i32_0 : i32, i32
  }
  func.func @transform_2(%arg0: i32) -> (i32, i32) {
    %c0_i32 = arith.constant 0 : i32
    %c0_i32_0 = arith.constant 0 : i32
    %c0_i32_1 = arith.constant 0 : i32
    return %c0_i32, %c0_i32_0 : i32, i32
  }
  func.func @transform_3(%arg0: i32) -> (i32, i32) {
    %c0_i32 = arith.constant 0 : i32
    %c0_i32_0 = arith.constant 0 : i32
    return %arg0, %c0_i32 : i32, i32
  }
}

module attributes {stable_mosaic.version = 11 : i64} {
  func.func @_mm_bias_kernel(%arg0: i32, %arg1: memref<512x144xbf16, #tpu.memory_space<vmem>>, %arg2: memref<144x8xbf16, #tpu.memory_space<vmem>>, %arg3: memref<1x8xf32, #tpu.memory_space<vmem>>, %arg4: memref<512x8xf32, #tpu.memory_space<vmem>>) attributes {dimension_semantics = [#tpu.dimension_semantics<parallel>], iteration_bounds = array<i64: 4>, scalar_prefetch = 0 : i64, scratch_operands = 0 : i64, tpu.core_type = #tpu.core_type<tc>, window_params = [{transform_indices = @transform_0, window_bounds = array<i64: 512, 144>}, {pipeline_mode = #tpu.pipeline_mode<synchronous>, transform_indices = @transform_1, window_bounds = array<i64: 144, 8>}, {pipeline_mode = #tpu.pipeline_mode<synchronous>, transform_indices = @transform_2, window_bounds = array<i64: 1, 8>}, {transform_indices = @transform_3, window_bounds = array<i64: 512, 8>}]} {
    %c0 = arith.constant 0 : index
    %c0_0 = arith.constant 0 : index
    %0 = vector.load %arg1[%c0, %c0_0] : memref<512x144xbf16, #tpu.memory_space<vmem>>, vector<512x144xbf16>
    %c0_1 = arith.constant 0 : index
    %c0_2 = arith.constant 0 : index
    %1 = vector.load %arg2[%c0_1, %c0_2] : memref<144x8xbf16, #tpu.memory_space<vmem>>, vector<144x8xbf16>
    %cst = arith.constant dense<0.000000e+00> : vector<512x8xf32>
    %2 = tpu.matmul %0, %1, %cst {dimension_numbers = #tpu.dot_dimension_numbers<[1], [0], [0], [1], [0, 0, 1, 1], [], []>} : vector<512x144xbf16>, vector<144x8xbf16>, vector<512x8xf32> -> vector<512x8xf32>
    %c0_3 = arith.constant 0 : index
    %c0_4 = arith.constant 0 : index
    %3 = vector.load %arg3[%c0_3, %c0_4] : memref<1x8xf32, #tpu.memory_space<vmem>>, vector<1x8xf32>
    %4 = vector.broadcast %3 : vector<1x8xf32> to vector<512x8xf32>
    %5 = arith.addf %2, %4 : vector<512x8xf32>
    %cst_5 = arith.constant 0.000000e+00 : f32
    %6 = vector.broadcast %cst_5 : f32 to vector<512x8xf32>
    %7 = arith.maximumf %5, %6 : vector<512x8xf32>
    %c0_6 = arith.constant 0 : index
    %c0_7 = arith.constant 0 : index
    %8 = vector.load %arg4[%c0_6, %c0_7] : memref<512x8xf32, #tpu.memory_space<vmem>>, vector<512x8xf32>
    tpu.vector_store %arg4[%c0_6, %c0_7], %7 {strides = array<i32>} : memref<512x8xf32, #tpu.memory_space<vmem>>, vector<512x8xf32>,
    return
  }
  func.func @transform_0(%arg0: i32) -> (i32, i32) {
    %c0_i32 = arith.constant 0 : i32
    %c0_i32_0 = arith.constant 0 : i32
    return %arg0, %c0_i32 : i32, i32
  }
  func.func @transform_1(%arg0: i32) -> (i32, i32) {
    %c0_i32 = arith.constant 0 : i32
    %c0_i32_0 = arith.constant 0 : i32
    %c0_i32_1 = arith.constant 0 : i32
    return %c0_i32, %c0_i32_0 : i32, i32
  }
  func.func @transform_2(%arg0: i32) -> (i32, i32) {
    %c0_i32 = arith.constant 0 : i32
    %c0_i32_0 = arith.constant 0 : i32
    %c0_i32_1 = arith.constant 0 : i32
    return %c0_i32, %c0_i32_0 : i32, i32
  }
  func.func @transform_3(%arg0: i32) -> (i32, i32) {
    %c0_i32 = arith.constant 0 : i32
    %c0_i32_0 = arith.constant 0 : i32
    return %arg0, %c0_i32 : i32, i32
  }
}

module attributes {stable_mosaic.version = 11 : i64} {
  func.func @_mm_bias_kernel(%arg0: i32, %arg1: memref<512x72xbf16, #tpu.memory_space<vmem>>, %arg2: memref<72x1xbf16, #tpu.memory_space<vmem>>, %arg3: memref<1x1xf32, #tpu.memory_space<vmem>>, %arg4: memref<512x1xf32, #tpu.memory_space<vmem>>) attributes {dimension_semantics = [#tpu.dimension_semantics<parallel>], iteration_bounds = array<i64: 4>, scalar_prefetch = 0 : i64, scratch_operands = 0 : i64, tpu.core_type = #tpu.core_type<tc>, window_params = [{transform_indices = @transform_0, window_bounds = array<i64: 512, 72>}, {pipeline_mode = #tpu.pipeline_mode<synchronous>, transform_indices = @transform_1, window_bounds = array<i64: 72, 1>}, {pipeline_mode = #tpu.pipeline_mode<synchronous>, transform_indices = @transform_2, window_bounds = array<i64: 1, 1>}, {transform_indices = @transform_3, window_bounds = array<i64: 512, 1>}]} {
    %c0 = arith.constant 0 : index
    %c0_0 = arith.constant 0 : index
    %0 = vector.load %arg1[%c0, %c0_0] : memref<512x72xbf16, #tpu.memory_space<vmem>>, vector<512x72xbf16>
    %c0_1 = arith.constant 0 : index
    %c0_2 = arith.constant 0 : index
    %1 = vector.load %arg2[%c0_1, %c0_2] : memref<72x1xbf16, #tpu.memory_space<vmem>>, vector<72x1xbf16>
    %cst = arith.constant dense<0.000000e+00> : vector<512x1xf32>
    %2 = tpu.matmul %0, %1, %cst {dimension_numbers = #tpu.dot_dimension_numbers<[1], [0], [0], [1], [0, 0, 1, 1], [], []>} : vector<512x72xbf16>, vector<72x1xbf16>, vector<512x1xf32> -> vector<512x1xf32>
    %c0_3 = arith.constant 0 : index
    %c0_4 = arith.constant 0 : index
    %3 = vector.load %arg3[%c0_3, %c0_4] : memref<1x1xf32, #tpu.memory_space<vmem>>, vector<1x1xf32>
    %4 = vector.broadcast %3 : vector<1x1xf32> to vector<512x1xf32>
    %5 = arith.addf %2, %4 : vector<512x1xf32>
    %c0_5 = arith.constant 0 : index
    %c0_6 = arith.constant 0 : index
    %6 = vector.load %arg4[%c0_5, %c0_6] : memref<512x1xf32, #tpu.memory_space<vmem>>, vector<512x1xf32>
    tpu.vector_store %arg4[%c0_5, %c0_6], %5 {strides = array<i32>} : memref<512x1xf32, #tpu.memory_space<vmem>>, vector<512x1xf32>,
    return
  }
  func.func @transform_0(%arg0: i32) -> (i32, i32) {
    %c0_i32 = arith.constant 0 : i32
    %c0_i32_0 = arith.constant 0 : i32
    return %arg0, %c0_i32 : i32, i32
  }
  func.func @transform_1(%arg0: i32) -> (i32, i32) {
    %c0_i32 = arith.constant 0 : i32
    %c0_i32_0 = arith.constant 0 : i32
    %c0_i32_1 = arith.constant 0 : i32
    return %c0_i32, %c0_i32_0 : i32, i32
  }
  func.func @transform_2(%arg0: i32) -> (i32, i32) {
    %c0_i32 = arith.constant 0 : i32
    %c0_i32_0 = arith.constant 0 : i32
    %c0_i32_1 = arith.constant 0 : i32
    return %c0_i32, %c0_i32_0 : i32, i32
  }
  func.func @transform_3(%arg0: i32) -> (i32, i32) {
    %c0_i32 = arith.constant 0 : i32
    %c0_i32_0 = arith.constant 0 : i32
    return %arg0, %c0_i32 : i32, i32
  }
}

</mosaic_0001>

<llo_original>
// kernel: _lambda_.7
$region0: #{_lambda_.7}
  #allocation0 [shape = 'u32[]', space=smem, size = 0x4, offset = 0x4, fixed_abs, tag = 'smem constant byte address 0x4 - core index']
  #allocation1 [shape = 'u32[144,128]{1,0:T(1,128)}', space=vmem, size = 0x12000, scoped, tag = 'internal scratch']
  %s0 = inlined_call_operand.vmem [shape: bf16[392,9], index: 0, kind: input, shape index: {}]
  %s1 = inlined_call_operand.vmem [shape: bf16[9,8], index: 1, kind: input, shape index: {}]
  %s2 = inlined_call_operand.hbm [shape: f32[1,8], index: 2, kind: input, shape index: {}]
  %s3 = inlined_call_operand.vmem [shape: f32[392,8], index: 3, kind: output, shape index: {}]
  %s4 = sld [smem:[#allocation0]]
  $region26: #{_lambda_.7} parent=0
    _
  %s6 = ssub.s32 1, %s4
  %s7 = scalar_select 0, %s6, %s4
  $region1: #{_lambda_.7} parent=0
    #allocation2 [shape = 'u8[512]{0}', space=vmem, size = 0x400, scoped, tag = 'input window, operand 2, single buffered']
    #allocation3 [shape = 's32[1]{0}', space=sflag, size = 0x4, scoped, tag = 'scoped memory for _lambda_.7']
    %8 = vsyncpa [#allocation3], 0
    // Predicated region
    $region2: #{_lambda_.7} parent=1 // pred_check
      _
    $region3: #{_lambda_.7} parent=1 // pred_check_branch
      %10 = sbr.rel (0) target = $region5
    $region4: #{_lambda_.7} parent=1 // pred_region
      _
    $region5: #{_lambda_.7} parent=1 // pred_fallthru
      _
    // Predicated region
    $region6: #{_lambda_.7} parent=1 // pred_check
      _
    $region7: #{_lambda_.7} parent=1 // pred_check_branch
      %12 = sbr.rel (0) target = $region9
    $region8: #{_lambda_.7} parent=1 // pred_region
      _
    $region9: #{_lambda_.7} parent=1 // pred_fallthru
      _
    // Predicated region
    $region10: #{_lambda_.7} parent=1 // pred_check
      _
    $region11: #{_lambda_.7} parent=1 // pred_check_branch
      %14 = sbr.rel (0) target = $region13
    $region12: #{_lambda_.7} parent=1 // pred_region
      %s16 = ssub.s32 16, 16
      %17 = vsyncadd [#allocation3], %s16
      %s19 = sshll.u32 [#allocation2], 4
      %s20 = int_to_ptr.vmem [resolvable:$true] %s19
      %22 = dma.hbm_to_vmem [thread:$0]  %s2, 16, %s20, [#allocation3]
    $region13: #{_lambda_.7} parent=1 // pred_fallthru
      _
    // Predicated region
    $region14: #{_lambda_.7} parent=1 // pred_check
      _
    $region15: #{_lambda_.7} parent=1 // pred_check_branch
      %24 = sbr.rel (0) target = $region17
    $region16: #{_lambda_.7} parent=1 // pred_region
      %25 = dma.done [#allocation3], 16
    $region17: #{_lambda_.7} parent=1 // pred_fallthru
      _
    %v27 = vld [vmem:[%s0] sm:$0xf]
    %v28 = vld [vmem:[%s0 + $0x4] sm:$0xf]
    %v29 = vld [vmem:[%s0 + $0x8] sm:$0xf]
    %v30 = vld [vmem:[%s0 + $0xc] sm:$0xf]
    %v31 = vld [vmem:[%s0 + $0x10] sm:$0xf]
    %v32 = vld [vmem:[%s0 + $0x14] sm:$0xf]
    %v33 = vld [vmem:[%s0 + $0x18] sm:$0xf]
    %v34 = vld [vmem:[%s0 + $0x1c] sm:$0xf]
    %v35 = vld [vmem:[%s0 + $0x20] sm:$0xf]
    %v36 = vld [vmem:[%s0 + $0x24] sm:$0xf]
    %v37 = vld [vmem:[%s0 + $0x28] sm:$0xf]
    %v38 = vld [vmem:[%s0 + $0x2c] sm:$0xf]
    %v39 = vld [vmem:[%s0 + $0x30] sm:$0xf]
    %v40 = vld [vmem:[%s0 + $0x34] sm:$0xf]
    %v41 = vld [vmem:[%s0 + $0x38] sm:$0xf]
    %v42 = vld [vmem:[%s0 + $0x3c] sm:$0xf]
    %v43 = vld [vmem:[%s0 + $0x40] sm:$0xf]
    %v44 = vld [vmem:[%s0 + $0x44] sm:$0xf]
    %v45 = vld [vmem:[%s0 + $0x48] sm:$0xf]
    %v46 = vld [vmem:[%s0 + $0x4c] sm:$0xf]
    %v47 = vld [vmem:[%s0 + $0x50] sm:$0xf]
    %v48 = vld [vmem:[%s0 + $0x54] sm:$0xf]
    %v49 = vld [vmem:[%s0 + $0x58] sm:$0xf]
    %v50 = vld [vmem:[%s0 + $0x5c] sm:$0xf]
    %v51 = vld [vmem:[%s0 + $0x60] sm:$0xf]
    %v52 = vld [vmem:[%s0 + $0x64] sm:$0xf]
    %v53 = vld [vmem:[%s0 + $0x68] sm:$0xf]
    %v54 = vld [vmem:[%s0 + $0x6c] sm:$0xf]
    %v55 = vld [vmem:[%s0 + $0x70] sm:$0xf]
    %v56 = vld [vmem:[%s0 + $0x74] sm:$0xf]
    %v57 = vld [vmem:[%s0 + $0x78] sm:$0xf]
    %v58 = vld [vmem:[%s0 + $0x7c] sm:$0xf]
    %v59 = vld [vmem:[%s0 + $0x80] sm:$0xf]
    %v60 = vld [vmem:[%s0 + $0x84] sm:$0xf]
    %v61 = vld [vmem:[%s0 + $0x88] sm:$0xf]
    %v62 = vld [vmem:[%s0 + $0x8c] sm:$0xf]
    %v63 = vld [vmem:[%s0 + $0x90] sm:$0xf]
    %v64 = vld [vmem:[%s0 + $0x94] sm:$0xf]
    %v65 = vld [vmem:[%s0 + $0x98] sm:$0xf]
    %v66 = vld [vmem:[%s0 + $0x9c] sm:$0xf]
    %v67 = vld [vmem:[%s0 + $0xa0] sm:$0xf]
    %v68 = vld [vmem:[%s0 + $0xa4] sm:$0xf]
    %v69 = vld [vmem:[%s0 + $0xa8] sm:$0xf]
    %v70 = vld [vmem:[%s0 + $0xac] sm:$0xf]
    %v71 = vld [vmem:[%s0 + $0xb0] sm:$0xf]
    %v72 = vld [vmem:[%s0 + $0xb4] sm:$0xf]
    %v73 = vld [vmem:[%s0 + $0xb8] sm:$0xf]
    %v74 = vld [vmem:[%s0 + $0xbc] sm:$0xf]
    %v75 = vld [vmem:[%s0 + $0xc0] sm:$0xf]
    %v76 = vld [vmem:[%s1] sm:$0xf]
    %v77 = vld [vmem:[%s1 + $0x4] sm:$0x1]
    %v78 = vld [vmem:[#allocation2] sm:$0x1]
    %v80 = vlaneseq
    %v81 = vshrl.u32 %v80, 7
    %v82 = vsub.s32 0, %v81
    %v83 = vrot.slane %v78, %v82
    %v134 = vunpack.c.l.b16 %v27
    %v135 = vunpack.c.l.b16 %v28
    %v136 = vunpack.c.l.b16 %v29
    %v137 = vunpack.c.l.b16 %v30
    %v138 = vunpack.c.l.b16 %v31
    %v139 = vunpack.c.l.b16 %v32
    %v140 = vunpack.c.l.b16 %v33
    %v141 = vunpack.c.l.b16 %v34
    %v142 = vunpack.c.l.b16 %v35
    %v143 = vunpack.c.l.b16 %v36
    %v144 = vunpack.c.l.b16 %v37
    %v145 = vunpack.c.l.b16 %v38
    %v146 = vunpack.c.l.b16 %v39
    %v147 = vunpack.c.l.b16 %v40
    %v148 = vunpack.c.l.b16 %v41
    %v149 = vunpack.c.l.b16 %v42
    %v150 = vunpack.c.l.b16 %v43
    %v151 = vunpack.c.l.b16 %v44
    %v152 = vunpack.c.l.b16 %v45
    %v153 = vunpack.c.l.b16 %v46
    %v154 = vunpack.c.l.b16 %v47
    %v155 = vunpack.c.l.b16 %v48
    %v156 = vunpack.c.l.b16 %v49
    %v157 = vunpack.c.l.b16 %v50
    %v158 = vunpack.c.l.b16 %v51
    %v159 = vunpack.c.l.b16 %v52
    %v160 = vunpack.c.l.b16 %v53
    %v161 = vunpack.c.l.b16 %v54
    %v162 = vunpack.c.l.b16 %v55
    %v163 = vunpack.c.l.b16 %v56
    %v164 = vunpack.c.l.b16 %v57
    %v165 = vunpack.c.l.b16 %v58
    %v166 = vunpack.c.l.b16 %v59
    %v167 = vunpack.c.l.b16 %v60
    %v168 = vunpack.c.l.b16 %v61
    %v169 = vunpack.c.l.b16 %v62
    %v170 = vunpack.c.l.b16 %v63
    %v171 = vunpack.c.l.b16 %v64
    %v172 = vunpack.c.l.b16 %v65
    %v173 = vunpack.c.l.b16 %v66
    %v174 = vunpack.c.l.b16 %v67
    %v175 = vunpack.c.l.b16 %v68
    %v176 = vunpack.c.l.b16 %v69
    %v177 = vunpack.c.l.b16 %v70
    %v178 = vunpack.c.l.b16 %v71
    %v179 = vunpack.c.l.b16 %v72
    %v180 = vunpack.c.l.b16 %v73
    %v181 = vunpack.c.l.b16 %v74
    %v182 = vunpack.c.l.b16 %v75
    %v183 = vpack.c.b16 %v135, %v134
    %v184 = vpack.c.b16 %v137, %v136
    %v185 = vpack.c.b16 %v139, %v138
    %v186 = vpack.c.b16 %v141, %v140
    %v187 = vpack.c.b16 %v143, %v142
    %v188 = vpack.c.b16 %v145, %v144
    %v189 = vpack.c.b16 %v147, %v146
    %v190 = vpack.c.b16 %v149, %v148
    %v191 = vpack.c.b16 %v151, %v150
    %v192 = vpack.c.b16 %v153, %v152
    %v193 = vpack.c.b16 %v155, %v154
    %v194 = vpack.c.b16 %v157, %v156
    %v195 = vpack.c.b16 %v159, %v158
    %v196 = vpack.c.b16 %v161, %v160
    %v197 = vpack.c.b16 %v163, %v162
    %v198 = vpack.c.b16 %v165, %v164
    %v199 = vpack.c.b16 %v167, %v166
    %v200 = vpack.c.b16 %v169, %v168
    %v201 = vpack.c.b16 %v171, %v170
    %v202 = vpack.c.b16 %v173, %v172
    %v203 = vpack.c.b16 %v175, %v174
    %v204 = vpack.c.b16 %v177, %v176
    %v205 = vpack.c.b16 %v179, %v178
    %v206 = vpack.c.b16 %v181, %v180
    %v207 = vpack.c.b16 %v182, %v182
    %v210 = vunpack.c.l.b16 %v76
    %v211 = vunpack.c.l.b16 %v77
    %v212 = vpack.c.b16 %v211, %v210
    %vm213 = vcmask 72704
    %v215 = vsel %vm213, %v183, 0
    %v218 = vsel %vm213, %v184, 0
    %v221 = vsel %vm213, %v185, 0
    %v224 = vsel %vm213, %v186, 0
    %v227 = vsel %vm213, %v187, 0
    %v230 = vsel %vm213, %v188, 0
    %v233 = vsel %vm213, %v189, 0
    %v236 = vsel %vm213, %v190, 0
    %v239 = vsel %vm213, %v191, 0
    %v242 = vsel %vm213, %v192, 0
    %v245 = vsel %vm213, %v193, 0
    %v248 = vsel %vm213, %v194, 0
    %v251 = vsel %vm213, %v195, 0
    %v254 = vsel %vm213, %v196, 0
    %v257 = vsel %vm213, %v197, 0
    %v260 = vsel %vm213, %v198, 0
    %v263 = vsel %vm213, %v199, 0
    %v266 = vsel %vm213, %v200, 0
    %v269 = vsel %vm213, %v201, 0
    %v272 = vsel %vm213, %v202, 0
    %v275 = vsel %vm213, %v203, 0
    %v278 = vsel %vm213, %v204, 0
    %v281 = vsel %vm213, %v205, 0
    %v284 = vsel %vm213, %v206, 0
    %v287 = vsel %vm213, %v207, 0
    %vm289 = vcmask 1043456
    %vm290 = vcmask 1044480
    %v291 = vsel %vm289, 4294967295, 65535
    %v292 = vsel %vm290, %v291, 0
    %v294 = vand.u32 %v212, %v292
    %296 = vmatprep.subr.bf16.mxu0 0
    %297 = vmatpush1.bf16.msra.mxu0 0
    %298 = vmatprep.subr.bf16.mxu0 0
    %299 = vmatpush1.bf16.msra.mxu0 0
    %300 = vmatprep.subr.bf16.mxu0 0
    %301 = vmatpush1.bf16.msra.mxu0 0
    %302 = vmatprep.subr.bf16.mxu0 0
    %303 = vmatpush1.bf16.msra.mxu0 0
    %304 = vmatprep.subr.bf16.mxu0 0
    %305 = vmatpush1.bf16.msra.mxu0 0
    %306 = vmatprep.subr.bf16.mxu0 0
    %307 = vmatpush1.bf16.msra.mxu0 0
    %308 = vmatprep.subr.bf16.mxu0 0
    %309 = vmatpush1.bf16.msra.mxu0 0
    %310 = vmatprep.subr.bf16.mxu0 0
    %311 = vmatpush1.bf16.msra.mxu0 %v294
    %312 = vmatprep.subr.bf16.mxu0 0
    %313 = vmatpush2.bf16.msra.mxu0 0
    %314 = vmatprep.subr.bf16.mxu0 0
    %315 = vmatpush2.bf16.msra.mxu0 0
    %316 = vmatprep.subr.bf16.mxu0 0
    %317 = vmatpush2.bf16.msra.mxu0 0
    %318 = vmatprep.subr.bf16.mxu0 0
    %319 = vmatpush2.bf16.msra.mxu0 0
    %320 = vmatprep.subr.bf16.mxu0 0
    %321 = vmatpush2.bf16.msra.mxu0 0
    %322 = vmatprep.subr.bf16.mxu0 0
    %323 = vmatpush2.bf16.msra.mxu0 0
    %324 = vmatprep.subr.bf16.mxu0 0
    %325 = vmatpush2.bf16.msra.mxu0 0
    %326 = vmatprep.subr.bf16.mxu0 0
    %327 = vmatpush2.bf16.msra.mxu0 0
    %328 = vmatprep.mubr.bf16.mxu0 0
    %329 = vmatmul.mubr.bf16.gmra.mxu0 %v215
    %v330 = vpop.f32.mrf.mxu0
    %v331 = vadd.f32 %v83, %v330
    %v332 = vpop.f32.mrf.mxu0
    %v333 = vpop.f32.mrf.mxu0
    %v334 = vadd.f32 %v83, %v333
    %v335 = vpop.f32.mrf.mxu0
    %336 = vmatprep.mubr.bf16.mxu0 0
    %337 = vmatmul.mubr.bf16.gmra.mxu0 %v218
    %v338 = vpop.f32.mrf.mxu0
    %v339 = vadd.f32 %v83, %v338
    %v340 = vpop.f32.mrf.mxu0
    %v341 = vpop.f32.mrf.mxu0
    %v342 = vadd.f32 %v83, %v341
    %v343 = vpop.f32.mrf.mxu0
    %344 = vmatprep.mubr.bf16.mxu0 0
    %345 = vmatmul.mubr.bf16.gmra.mxu0 %v221
    %v346 = vpop.f32.mrf.mxu0
    %v347 = vadd.f32 %v83, %v346
    %v348 = vpop.f32.mrf.mxu0
    %v349 = vpop.f32.mrf.mxu0
    %v350 = vadd.f32 %v83, %v349
    %v351 = vpop.f32.mrf.mxu0
    %352 = vmatprep.mubr.bf16.mxu0 0
    %353 = vmatmul.mubr.bf16.gmra.mxu0 %v224
    %v354 = vpop.f32.mrf.mxu0
    %v355 = vadd.f32 %v83, %v354
    %v356 = vpop.f32.mrf.mxu0
    %v357 = vpop.f32.mrf.mxu0
    %v358 = vadd.f32 %v83, %v357
    %v359 = vpop.f32.mrf.mxu0
    %360 = vmatprep.mubr.bf16.mxu0 0
    %361 = vmatmul.mubr.bf16.gmra.mxu0 %v227
    %v362 = vpop.f32.mrf.mxu0
    %v363 = vadd.f32 %v83, %v362
    %v364 = vpop.f32.mrf.mxu0
    %v365 = vpop.f32.mrf.mxu0
    %v366 = vadd.f32 %v83, %v365
    %v367 = vpop.f32.mrf.mxu0
    %368 = vmatprep.mubr.bf16.mxu0 0
    %369 = vmatmul.mubr.bf16.gmra.mxu0 %v230
    %v370 = vpop.f32.mrf.mxu0
    %v371 = vadd.f32 %v83, %v370
    %v372 = vpop.f32.mrf.mxu0
    %v373 = vpop.f32.mrf.mxu0
    %v374 = vadd.f32 %v83, %v373
    %v375 = vpop.f32.mrf.mxu0
    %376 = vmatprep.mubr.bf16.mxu0 0
    %377 = vmatmul.mubr.bf16.gmra.mxu0 %v233
    %v378 = vpop.f32.mrf.mxu0
    %v379 = vadd.f32 %v83, %v378
    %v380 = vpop.f32.mrf.mxu0
    %v381 = vpop.f32.mrf.mxu0
    %v382 = vadd.f32 %v83, %v381
    %v383 = vpop.f32.mrf.mxu0
    %384 = vmatprep.mubr.bf16.mxu0 0
    %385 = vmatmul.mubr.bf16.gmra.mxu0 %v236
    %v386 = vpop.f32.mrf.mxu0
    %v387 = vadd.f32 %v83, %v386
    %v388 = vpop.f32.mrf.mxu0
    %v389 = vpop.f32.mrf.mxu0
    %v390 = vadd.f32 %v83, %v389
    %v391 = vpop.f32.mrf.mxu0
    %392 = vmatprep.mubr.bf16.mxu0 0
    %393 = vmatmul.mubr.bf16.gmra.mxu0 %v239
    %v394 = vpop.f32.mrf.mxu0
    %v395 = vadd.f32 %v83, %v394
    %v396 = vpop.f32.mrf.mxu0
    %v397 = vpop.f32.mrf.mxu0
    %v398 = vadd.f32 %v83, %v397
    %v399 = vpop.f32.mrf.mxu0
    %400 = vmatprep.mubr.bf16.mxu0 0
    %401 = vmatmul.mubr.bf16.gmra.mxu0 %v242
    %v402 = vpop.f32.mrf.mxu0
    %v403 = vadd.f32 %v83, %v402
    %v404 = vpop.f32.mrf.mxu0
    %v405 = vpop.f32.mrf.mxu0
    %v406 = vadd.f32 %v83, %v405
    %v407 = vpop.f32.mrf.mxu0
    %408 = vmatprep.mubr.bf16.mxu0 0
    %409 = vmatmul.mubr.bf16.gmra.mxu0 %v245
    %v410 = vpop.f32.mrf.mxu0
    %v411 = vadd.f32 %v83, %v410
    %v412 = vpop.f32.mrf.mxu0
    %v413 = vpop.f32.mrf.mxu0
    %v414 = vadd.f32 %v83, %v413
    %v415 = vpop.f32.mrf.mxu0
    %416 = vmatprep.mubr.bf16.mxu0 0
    %417 = vmatmul.mubr.bf16.gmra.mxu0 %v248
    %v418 = vpop.f32.mrf.mxu0
    %v419 = vadd.f32 %v83, %v418
    %v420 = vpop.f32.mrf.mxu0
    %v421 = vpop.f32.mrf.mxu0
    %v422 = vadd.f32 %v83, %v421
    %v423 = vpop.f32.mrf.mxu0
    %424 = vmatprep.mubr.bf16.mxu0 0
    %425 = vmatmul.mubr.bf16.gmra.mxu0 %v251
    %v426 = vpop.f32.mrf.mxu0
    %v427 = vadd.f32 %v83, %v426
    %v428 = vpop.f32.mrf.mxu0
    %v429 = vpop.f32.mrf.mxu0
    %v430 = vadd.f32 %v83, %v429
    %v431 = vpop.f32.mrf.mxu0
    %432 = vmatprep.mubr.bf16.mxu0 0
    %433 = vmatmul.mubr.bf16.gmra.mxu0 %v254
    %v434 = vpop.f32.mrf.mxu0
    %v435 = vadd.f32 %v83, %v434
    %v436 = vpop.f32.mrf.mxu0
    %v437 = vpop.f32.mrf.mxu0
    %v438 = vadd.f32 %v83, %v437
    %v439 = vpop.f32.mrf.mxu0
    %440 = vmatprep.mubr.bf16.mxu0 0
    %441 = vmatmul.mubr.bf16.gmra.mxu0 %v257
    %v442 = vpop.f32.mrf.mxu0
    %v443 = vadd.f32 %v83, %v442
    %v444 = vpop.f32.mrf.mxu0
    %v445 = vpop.f32.mrf.mxu0
    %v446 = vadd.f32 %v83, %v445
    %v447 = vpop.f32.mrf.mxu0
    %448 = vmatprep.mubr.bf16.mxu0 0
    %449 = vmatmul.mubr.bf16.gmra.mxu0 %v260
    %v450 = vpop.f32.mrf.mxu0
    %v451 = vadd.f32 %v83, %v450
    %v452 = vpop.f32.mrf.mxu0
    %v453 = vpop.f32.mrf.mxu0
    %v454 = vadd.f32 %v83, %v453
    %v455 = vpop.f32.mrf.mxu0
    %456 = vmatprep.mubr.bf16.mxu0 0
    %457 = vmatmul.mubr.bf16.gmra.mxu0 %v263
    %v458 = vpop.f32.mrf.mxu0
    %v459 = vadd.f32 %v83, %v458
    %v460 = vpop.f32.mrf.mxu0
    %v461 = vpop.f32.mrf.mxu0
    %v462 = vadd.f32 %v83, %v461
    %v463 = vpop.f32.mrf.mxu0
    %464 = vmatprep.mubr.bf16.mxu0 0
    %465 = vmatmul.mubr.bf16.gmra.mxu0 %v266
    %v466 = vpop.f32.mrf.mxu0
    %v467 = vadd.f32 %v83, %v466
    %v468 = vpop.f32.mrf.mxu0
    %v469 = vpop.f32.mrf.mxu0
    %v470 = vadd.f32 %v83, %v469
    %v471 = vpop.f32.mrf.mxu0
    %472 = vmatprep.mubr.bf16.mxu0 0
    %473 = vmatmul.mubr.bf16.gmra.mxu0 %v269
    %v474 = vpop.f32.mrf.mxu0
    %v475 = vadd.f32 %v83, %v474
    %v476 = vpop.f32.mrf.mxu0
    %v477 = vpop.f32.mrf.mxu0
    %v478 = vadd.f32 %v83, %v477
    %v479 = vpop.f32.mrf.mxu0
    %480 = vmatprep.mubr.bf16.mxu0 0
    %481 = vmatmul.mubr.bf16.gmra.mxu0 %v272
    %v482 = vpop.f32.mrf.mxu0
    %v483 = vadd.f32 %v83, %v482
    %v484 = vpop.f32.mrf.mxu0
    %v485 = vpop.f32.mrf.mxu0
    %v486 = vadd.f32 %v83, %v485
    %v487 = vpop.f32.mrf.mxu0
    %488 = vmatprep.mubr.bf16.mxu0 0
    %489 = vmatmul.mubr.bf16.gmra.mxu0 %v275
    %v490 = vpop.f32.mrf.mxu0
    %v491 = vadd.f32 %v83, %v490
    %v492 = vpop.f32.mrf.mxu0
    %v493 = vpop.f32.mrf.mxu0
    %v494 = vadd.f32 %v83, %v493
    %v495 = vpop.f32.mrf.mxu0
    %496 = vmatprep.mubr.bf16.mxu0 0
    %497 = vmatmul.mubr.bf16.gmra.mxu0 %v278
    %v498 = vpop.f32.mrf.mxu0
    %v499 = vadd.f32 %v83, %v498
    %v500 = vpop.f32.mrf.mxu0
    %v501 = vpop.f32.mrf.mxu0
    %v502 = vadd.f32 %v83, %v501
    %v503 = vpop.f32.mrf.mxu0
    %504 = vmatprep.mubr.bf16.mxu0 0
    %505 = vmatmul.mubr.bf16.gmra.mxu0 %v281
    %v506 = vpop.f32.mrf.mxu0
    %v507 = vadd.f32 %v83, %v506
    %v508 = vpop.f32.mrf.mxu0
    %v509 = vpop.f32.mrf.mxu0
    %v510 = vadd.f32 %v83, %v509
    %v511 = vpop.f32.mrf.mxu0
    %512 = vmatprep.mubr.bf16.mxu0 0
    %513 = vmatmul.mubr.bf16.gmra.mxu0 %v284
    %v514 = vpop.f32.mrf.mxu0
    %v515 = vadd.f32 %v83, %v514
    %v516 = vpop.f32.mrf.mxu0
    %v517 = vpop.f32.mrf.mxu0
    %v518 = vadd.f32 %v83, %v517
    %v519 = vpop.f32.mrf.mxu0
    %520 = vmatprep.mubr.bf16.mxu0 0
    %521 = vmatmul.mubr.bf16.gmra.mxu0 %v287
    %v522 = vpop.f32.mrf.mxu0
    %v523 = vadd.f32 %v83, %v522
    %v524 = vpop.f32.mrf.mxu0
    %v525 = vpop.f32.mrf.mxu0
    %v526 = vpop.f32.mrf.mxu0
    %527 = vdwg.mxu0
    %v528 = vmax.f32 %v331, 0.0
    %v529 = vmax.f32 %v334, 0.0
    %v530 = vmax.f32 %v339, 0.0
    %v531 = vmax.f32 %v342, 0.0
    %v532 = vmax.f32 %v347, 0.0
    %v533 = vmax.f32 %v350, 0.0
    %v534 = vmax.f32 %v355, 0.0
    %v535 = vmax.f32 %v358, 0.0
    %v536 = vmax.f32 %v363, 0.0
    %v537 = vmax.f32 %v366, 0.0
    %v538 = vmax.f32 %v371, 0.0
    %v539 = vmax.f32 %v374, 0.0
    %v540 = vmax.f32 %v379, 0.0
    %v541 = vmax.f32 %v382, 0.0
    %v542 = vmax.f32 %v387, 0.0
    %v543 = vmax.f32 %v390, 0.0
    %v544 = vmax.f32 %v395, 0.0
    %v545 = vmax.f32 %v398, 0.0
    %v546 = vmax.f32 %v403, 0.0
    %v547 = vmax.f32 %v406, 0.0
    %v548 = vmax.f32 %v411, 0.0
    %v549 = vmax.f32 %v414, 0.0
    %v550 = vmax.f32 %v419, 0.0
    %v551 = vmax.f32 %v422, 0.0
    %v552 = vmax.f32 %v427, 0.0
    %v553 = vmax.f32 %v430, 0.0
    %v554 = vmax.f32 %v435, 0.0
    %v555 = vmax.f32 %v438, 0.0
    %v556 = vmax.f32 %v443, 0.0
    %v557 = vmax.f32 %v446, 0.0
    %v558 = vmax.f32 %v451, 0.0
    %v559 = vmax.f32 %v454, 0.0
    %v560 = vmax.f32 %v459, 0.0
    %v561 = vmax.f32 %v462, 0.0
    %v562 = vmax.f32 %v467, 0.0
    %v563 = vmax.f32 %v470, 0.0
    %v564 = vmax.f32 %v475, 0.0
    %v565 = vmax.f32 %v478, 0.0
    %v566 = vmax.f32 %v483, 0.0
    %v567 = vmax.f32 %v486, 0.0
    %v568 = vmax.f32 %v491, 0.0
    %v569 = vmax.f32 %v494, 0.0
    %v570 = vmax.f32 %v499, 0.0
    %v571 = vmax.f32 %v502, 0.0
    %v572 = vmax.f32 %v507, 0.0
    %v573 = vmax.f32 %v510, 0.0
    %v574 = vmax.f32 %v515, 0.0
    %v575 = vmax.f32 %v518, 0.0
    %v576 = vmax.f32 %v523, 0.0
    %vm577 = vcmask 64512
    %578 = vst.msk [vmem:[%s3] sm:$0xff] %vm577, %v528
    %579 = vst.msk [vmem:[%s3 + $0x8] sm:$0xff] %vm577, %v529
    %580 = vst.msk [vmem:[%s3 + $0x10] sm:$0xff] %vm577, %v530
    %581 = vst.msk [vmem:[%s3 + $0x18] sm:$0xff] %vm577, %v531
    %582 = vst.msk [vmem:[%s3 + $0x20] sm:$0xff] %vm577, %v532
    %583 = vst.msk [vmem:[%s3 + $0x28] sm:$0xff] %vm577, %v533
    %584 = vst.msk [vmem:[%s3 + $0x30] sm:$0xff] %vm577, %v534
    %585 = vst.msk [vmem:[%s3 + $0x38] sm:$0xff] %vm577, %v535
    %586 = vst.msk [vmem:[%s3 + $0x40] sm:$0xff] %vm577, %v536
    %587 = vst.msk [vmem:[%s3 + $0x48] sm:$0xff] %vm577, %v537
    %588 = vst.msk [vmem:[%s3 + $0x50] sm:$0xff] %vm577, %v538
    %589 = vst.msk [vmem:[%s3 + $0x58] sm:$0xff] %vm577, %v539
    %590 = vst.msk [vmem:[%s3 + $0x60] sm:$0xff] %vm577, %v540
    %591 = vst.msk [vmem:[%s3 + $0x68] sm:$0xff] %vm577, %v541
    %592 = vst.msk [vmem:[%s3 + $0x70] sm:$0xff] %vm577, %v542
    %593 = vst.msk [vmem:[%s3 + $0x78] sm:$0xff] %vm577, %v543
    %594 = vst.msk [vmem:[%s3 + $0x80] sm:$0xff] %vm577, %v544
    %595 = vst.msk [vmem:[%s3 + $0x88] sm:$0xff] %vm577, %v545
    %596 = vst.msk [vmem:[%s3 + $0x90] sm:$0xff] %vm577, %v546
    %597 = vst.msk [vmem:[%s3 + $0x98] sm:$0xff] %vm577, %v547
    %598 = vst.msk [vmem:[%s3 + $0xa0] sm:$0xff] %vm577, %v548
    %599 = vst.msk [vmem:[%s3 + $0xa8] sm:$0xff] %vm577, %v549
    %600 = vst.msk [vmem:[%s3 + $0xb0] sm:$0xff] %vm577, %v550
    %601 = vst.msk [vmem:[%s3 + $0xb8] sm:$0xff] %vm577, %v551
    %602 = vst.msk [vmem:[%s3 + $0xc0] sm:$0xff] %vm577, %v552
    %603 = vst.msk [vmem:[%s3 + $0xc8] sm:$0xff] %vm577, %v553
    %604 = vst.msk [vmem:[%s3 + $0xd0] sm:$0xff] %vm577, %v554
    %605 = vst.msk [vmem:[%s3 + $0xd8] sm:$0xff] %vm577, %v555
    %606 = vst.msk [vmem:[%s3 + $0xe0] sm:$0xff] %vm577, %v556
    %607 = vst.msk [vmem:[%s3 + $0xe8] sm:$0xff] %vm577, %v557
    %608 = vst.msk [vmem:[%s3 + $0xf0] sm:$0xff] %vm577, %v558
    %609 = vst.msk [vmem:[%s3 + $0xf8] sm:$0xff] %vm577, %v559
    %610 = vst.msk [vmem:[%s3 + $0x100] sm:$0xff] %vm577, %v560
    %611 = vst.msk [vmem:[%s3 + $0x108] sm:$0xff] %vm577, %v561
    %612 = vst.msk [vmem:[%s3 + $0x110] sm:$0xff] %vm577, %v562
    %613 = vst.msk [vmem:[%s3 + $0x118] sm:$0xff] %vm577, %v563
    %614 = vst.msk [vmem:[%s3 + $0x120] sm:$0xff] %vm577, %v564
    %615 = vst.msk [vmem:[%s3 + $0x128] sm:$0xff] %vm577, %v565
    %616 = vst.msk [vmem:[%s3 + $0x130] sm:$0xff] %vm577, %v566
    %617 = vst.msk [vmem:[%s3 + $0x138] sm:$0xff] %vm577, %v567
    %618 = vst.msk [vmem:[%s3 + $0x140] sm:$0xff] %vm577, %v568
    %619 = vst.msk [vmem:[%s3 + $0x148] sm:$0xff] %vm577, %v569
    %620 = vst.msk [vmem:[%s3 + $0x150] sm:$0xff] %vm577, %v570
    %621 = vst.msk [vmem:[%s3 + $0x158] sm:$0xff] %vm577, %v571
    %622 = vst.msk [vmem:[%s3 + $0x160] sm:$0xff] %vm577, %v572
    %623 = vst.msk [vmem:[%s3 + $0x168] sm:$0xff] %vm577, %v573
    %624 = vst.msk [vmem:[%s3 + $0x170] sm:$0xff] %vm577, %v574
    %625 = vst.msk [vmem:[%s3 + $0x178] sm:$0xff] %vm577, %v575
    %626 = vst.msk [vmem:[%s3 + $0x180] sm:$0xff] %vm577, %v576
    // Predicated region
    $region18: #{_lambda_.7} parent=1 // pred_check
      _
    $region19: #{_lambda_.7} parent=1 // pred_check_branch
      %628 = sbr.rel (0) target = $region21
    $region20: #{_lambda_.7} parent=1 // pred_region
      _
    $region21: #{_lambda_.7} parent=1 // pred_fallthru
      _
    // Predicated region
    $region22: #{_lambda_.7} parent=1 // pred_check
      _
    $region23: #{_lambda_.7} parent=1 // pred_check_branch
      %630 = sbr.rel (0) target = $region25
    $region24: #{_lambda_.7} parent=1 // pred_region
      _
    $region25: #{_lambda_.7} parent=1 // pred_fallthru
      _
    %631 = vsyncpa [#allocation3], 1

// kernel: _lambda_.8
$region0: #{_lambda_.8}
  #allocation0 [shape = 'u32[]', space=smem, size = 0x4, offset = 0x4, fixed_abs, tag = 'smem constant byte address 0x4 - core index']
  #allocation1 [shape = 'u32[144,128]{1,0:T(1,128)}', space=vmem, size = 0x12000, scoped, tag = 'internal scratch']
  %s0 = inlined_call_operand.vmem [shape: bf16[104,72], index: 0, kind: input, shape index: {}]
  %s1 = inlined_call_operand.vmem [shape: bf16[72,16], index: 1, kind: input, shape index: {}]
  %s2 = inlined_call_operand.vmem [shape: f32[1,16], index: 2, kind: input, shape index: {}]
  %s3 = inlined_call_operand.vmem [shape: f32[104,16], index: 3, kind: output, shape index: {}]
  %s4 = sld [smem:[#allocation0]]
  $region22: #{_lambda_.8} parent=0
    _
  %s6 = ssub.s32 1, %s4
  %s7 = scalar_select 0, %s6, %s4
  // Predicated region
  $region2: #{_lambda_.8} parent=0 // pred_check
    _
  $region3: #{_lambda_.8} parent=0 // pred_check_branch
    %9 = sbr.rel (0) target = $region5
  $region4: #{_lambda_.8} parent=0 // pred_region
    _
  $region5: #{_lambda_.8} parent=0 // pred_fallthru
    _
  // Predicated region
  $region6: #{_lambda_.8} parent=0 // pred_check
    _
  $region7: #{_lambda_.8} parent=0 // pred_check_branch
    %11 = sbr.rel (0) target = $region9
  $region8: #{_lambda_.8} parent=0 // pred_region
    _
  $region9: #{_lambda_.8} parent=0 // pred_fallthru
    _
  // Predicated region
  $region10: #{_lambda_.8} parent=0 // pred_check
    _
  $region11: #{_lambda_.8} parent=0 // pred_check_branch
    %13 = sbr.rel (0) target = $region13
  $region12: #{_lambda_.8} parent=0 // pred_region
    _
  $region13: #{_lambda_.8} parent=0 // pred_fallthru
    _
  %v15 = vld [vmem:[%s0] sm:$0xf]
  %v16 = vld [vmem:[%s0 + $0x4] sm:$0xf]
  %v17 = vld [vmem:[%s0 + $0x8] sm:$0xf]
  %v18 = vld [vmem:[%s0 + $0xc] sm:$0xf]
  %v19 = vld [vmem:[%s0 + $0x10] sm:$0xf]
  %v20 = vld [vmem:[%s0 + $0x14] sm:$0xf]
  %v21 = vld [vmem:[%s0 + $0x18] sm:$0xf]
  %v22 = vld [vmem:[%s0 + $0x1c] sm:$0xf]
  %v23 = vld [vmem:[%s0 + $0x20] sm:$0xf]
  %v24 = vld [vmem:[%s0 + $0x24] sm:$0xf]
  %v25 = vld [vmem:[%s0 + $0x28] sm:$0xf]
  %v26 = vld [vmem:[%s0 + $0x2c] sm:$0xf]
  %v27 = vld [vmem:[%s0 + $0x30] sm:$0xf]
  %v28 = vld [vmem:[%s1] sm:$0xf]
  %v29 = vld [vmem:[%s1 + $0x4] sm:$0xf]
  %v30 = vld [vmem:[%s1 + $0x8] sm:$0xf]
  %v31 = vld [vmem:[%s1 + $0xc] sm:$0xf]
  %v32 = vld [vmem:[%s1 + $0x10] sm:$0xf]
  %v33 = vld [vmem:[%s1 + $0x14] sm:$0xf]
  %v34 = vld [vmem:[%s1 + $0x18] sm:$0xf]
  %v35 = vld [vmem:[%s1 + $0x1c] sm:$0xf]
  %v36 = vld [vmem:[%s1 + $0x20] sm:$0xf]
  %v37 = vld [vmem:[%s2] sm:$0x1]
  %v39 = vlaneseq
  %v40 = vshrl.u32 %v39, 7
  %v41 = vsub.s32 0, %v40
  %v42 = vrot.slane %v37, %v41
  %v57 = vunpack.c.l.b16 %v15
  %v58 = vunpack.c.l.b16 %v16
  %v59 = vunpack.c.l.b16 %v17
  %v60 = vunpack.c.l.b16 %v18
  %v61 = vunpack.c.l.b16 %v19
  %v62 = vunpack.c.l.b16 %v20
  %v63 = vunpack.c.l.b16 %v21
  %v64 = vunpack.c.l.b16 %v22
  %v65 = vunpack.c.l.b16 %v23
  %v66 = vunpack.c.l.b16 %v24
  %v67 = vunpack.c.l.b16 %v25
  %v68 = vunpack.c.l.b16 %v26
  %v69 = vunpack.c.l.b16 %v27
  %v70 = vpack.c.b16 %v58, %v57
  %v71 = vpack.c.b16 %v60, %v59
  %v72 = vpack.c.b16 %v62, %v61
  %v73 = vpack.c.b16 %v64, %v63
  %v74 = vpack.c.b16 %v66, %v65
  %v75 = vpack.c.b16 %v68, %v67
  %v76 = vpack.c.b16 %v69, %v69
  %v86 = vunpack.c.l.b16 %v28
  %v87 = vunpack.c.l.b16 %v29
  %v88 = vunpack.c.l.b16 %v30
  %v89 = vunpack.c.l.b16 %v31
  %v90 = vunpack.c.l.b16 %v32
  %v91 = vunpack.c.l.b16 %v33
  %v92 = vunpack.c.l.b16 %v34
  %v93 = vunpack.c.l.b16 %v35
  %v94 = vunpack.c.l.b16 %v36
  %v95 = vpack.c.b16 %v87, %v86
  %v96 = vpack.c.b16 %v89, %v88
  %v97 = vpack.c.b16 %v91, %v90
  %v98 = vpack.c.b16 %v93, %v92
  %v99 = vpack.c.b16 %v94, %v94
  %vm104 = vcmask 588800
  %v106 = vsel %vm104, %v70, 0
  %v109 = vsel %vm104, %v71, 0
  %v112 = vsel %vm104, %v72, 0
  %v115 = vsel %vm104, %v73, 0
  %v118 = vsel %vm104, %v74, 0
  %v121 = vsel %vm104, %v75, 0
  %v124 = vsel %vm104, %v76, 0
  %vm126 = vcmask 1043456
  %v128 = vsel %vm126, %v99, 0
  %130 = vmatprep.subr.bf16.mxu0 0
  %131 = vmatpush1.bf16.msra.mxu0 0
  %132 = vmatprep.subr.bf16.mxu0 0
  %133 = vmatpush1.bf16.msra.mxu0 0
  %134 = vmatprep.subr.bf16.mxu0 0
  %135 = vmatpush1.bf16.msra.mxu0 0
  %136 = vmatprep.subr.bf16.mxu0 0
  %137 = vmatpush1.bf16.msra.mxu0 %v128
  %138 = vmatprep.subr.bf16.mxu0 0
  %139 = vmatpush1.bf16.msra.mxu0 %v98
  %140 = vmatprep.subr.bf16.mxu0 0
  %141 = vmatpush1.bf16.msra.mxu0 %v97
  %142 = vmatprep.subr.bf16.mxu0 0
  %143 = vmatpush1.bf16.msra.mxu0 %v96
  %144 = vmatprep.subr.bf16.mxu0 0
  %145 = vmatpush1.bf16.msra.mxu0 %v95
  %146 = vmatprep.subr.bf16.mxu0 0
  %147 = vmatpush2.bf16.msra.mxu0 0
  %148 = vmatprep.subr.bf16.mxu0 0
  %149 = vmatpush2.bf16.msra.mxu0 0
  %150 = vmatprep.subr.bf16.mxu0 0
  %151 = vmatpush2.bf16.msra.mxu0 0
  %152 = vmatprep.subr.bf16.mxu0 0
  %153 = vmatpush2.bf16.msra.mxu0 0
  %154 = vmatprep.subr.bf16.mxu0 0
  %155 = vmatpush2.bf16.msra.mxu0 0
  %156 = vmatprep.subr.bf16.mxu0 0
  %157 = vmatpush2.bf16.msra.mxu0 0
  %158 = vmatprep.subr.bf16.mxu0 0
  %159 = vmatpush2.bf16.msra.mxu0 0
  %160 = vmatprep.subr.bf16.mxu0 0
  %161 = vmatpush2.bf16.msra.mxu0 0
  %162 = vmatprep.mubr.bf16.mxu0 0
  %163 = vmatmul.mubr.bf16.gmra.mxu0 %v106
  %v164 = vpop.f32.mrf.mxu0
  %v165 = vadd.f32 %v42, %v164
  %v166 = vpop.f32.mrf.mxu0
  %v167 = vpop.f32.mrf.mxu0
  %v168 = vadd.f32 %v42, %v167
  %v169 = vpop.f32.mrf.mxu0
  %170 = vmatprep.mubr.bf16.mxu0 0
  %171 = vmatmul.mubr.bf16.gmra.mxu0 %v109
  %v172 = vpop.f32.mrf.mxu0
  %v173 = vadd.f32 %v42, %v172
  %v174 = vpop.f32.mrf.mxu0
  %v175 = vpop.f32.mrf.mxu0
  %v176 = vadd.f32 %v42, %v175
  %v177 = vpop.f32.mrf.mxu0
  %178 = vmatprep.mubr.bf16.mxu0 0
  %179 = vmatmul.mubr.bf16.gmra.mxu0 %v112
  %v180 = vpop.f32.mrf.mxu0
  %v181 = vadd.f32 %v42, %v180
  %v182 = vpop.f32.mrf.mxu0
  %v183 = vpop.f32.mrf.mxu0
  %v184 = vadd.f32 %v42, %v183
  %v185 = vpop.f32.mrf.mxu0
  %186 = vmatprep.mubr.bf16.mxu0 0
  %187 = vmatmul.mubr.bf16.gmra.mxu0 %v115
  %v188 = vpop.f32.mrf.mxu0
  %v189 = vadd.f32 %v42, %v188
  %v190 = vpop.f32.mrf.mxu0
  %v191 = vpop.f32.mrf.mxu0
  %v192 = vadd.f32 %v42, %v191
  %v193 = vpop.f32.mrf.mxu0
  %194 = vmatprep.mubr.bf16.mxu0 0
  %195 = vmatmul.mubr.bf16.gmra.mxu0 %v118
  %v196 = vpop.f32.mrf.mxu0
  %v197 = vadd.f32 %v42, %v196
  %v198 = vpop.f32.mrf.mxu0
  %v199 = vpop.f32.mrf.mxu0
  %v200 = vadd.f32 %v42, %v199
  %v201 = vpop.f32.mrf.mxu0
  %202 = vmatprep.mubr.bf16.mxu0 0
  %203 = vmatmul.mubr.bf16.gmra.mxu0 %v121
  %v204 = vpop.f32.mrf.mxu0
  %v205 = vadd.f32 %v42, %v204
  %v206 = vpop.f32.mrf.mxu0
  %v207 = vpop.f32.mrf.mxu0
  %v208 = vadd.f32 %v42, %v207
  %v209 = vpop.f32.mrf.mxu0
  %210 = vmatprep.mubr.bf16.mxu0 0
  %211 = vmatmul.mubr.bf16.gmra.mxu0 %v124
  %v212 = vpop.f32.mrf.mxu0
  %v213 = vadd.f32 %v42, %v212
  %v214 = vpop.f32.mrf.mxu0
  %v215 = vpop.f32.mrf.mxu0
  %v216 = vpop.f32.mrf.mxu0
  %217 = vdwg.mxu0
  %v218 = vmax.f32 %v165, 0.0
  %v219 = vmax.f32 %v168, 0.0
  %v220 = vmax.f32 %v173, 0.0
  %v221 = vmax.f32 %v176, 0.0
  %v222 = vmax.f32 %v181, 0.0
  %v223 = vmax.f32 %v184, 0.0
  %v224 = vmax.f32 %v189, 0.0
  %v225 = vmax.f32 %v192, 0.0
  %v226 = vmax.f32 %v197, 0.0
  %v227 = vmax.f32 %v200, 0.0
  %v228 = vmax.f32 %v205, 0.0
  %v229 = vmax.f32 %v208, 0.0
  %v230 = vmax.f32 %v213, 0.0
  %vm231 = vcmask 130048
  %232 = vst.msk [vmem:[%s3] sm:$0xff] %vm231, %v218
  %233 = vst.msk [vmem:[%s3 + $0x8] sm:$0xff] %vm231, %v219
  %234 = vst.msk [vmem:[%s3 + $0x10] sm:$0xff] %vm231, %v220
  %235 = vst.msk [vmem:[%s3 + $0x18] sm:$0xff] %vm231, %v221
  %236 = vst.msk [vmem:[%s3 + $0x20] sm:$0xff] %vm231, %v222
  %237 = vst.msk [vmem:[%s3 + $0x28] sm:$0xff] %vm231, %v223
  %238 = vst.msk [vmem:[%s3 + $0x30] sm:$0xff] %vm231, %v224
  %239 = vst.msk [vmem:[%s3 + $0x38] sm:$0xff] %vm231, %v225
  %240 = vst.msk [vmem:[%s3 + $0x40] sm:$0xff] %vm231, %v226
  %241 = vst.msk [vmem:[%s3 + $0x48] sm:$0xff] %vm231, %v227
  %242 = vst.msk [vmem:[%s3 + $0x50] sm:$0xff] %vm231, %v228
  %243 = vst.msk [vmem:[%s3 + $0x58] sm:$0xff] %vm231, %v229
  %244 = vst.msk [vmem:[%s3 + $0x60] sm:$0xff] %vm231, %v230
  // Predicated region
  $region14: #{_lambda_.8} parent=0 // pred_check
    _
  $region15: #{_lambda_.8} parent=0 // pred_check_branch
    %246 = sbr.rel (0) target = $region17
  $region16: #{_lambda_.8} parent=0 // pred_region
    _
  $region17: #{_lambda_.8} parent=0 // pred_fallthru
    _
  // Predicated region
  $region18: #{_lambda_.8} parent=0 // pred_check
    _
  $region19: #{_lambda_.8} parent=0 // pred_check_branch
    %248 = sbr.rel (0) target = $region21
  $region20: #{_lambda_.8} parent=0 // pred_region
    _
  $region21: #{_lambda_.8} parent=0 // pred_fallthru
    _

// kernel: _lambda_.10
$region0: #{_lambda_.10}
  #allocation0 [shape = 'u32[]', space=smem, size = 0x4, offset = 0x4, fixed_abs, tag = 'smem constant byte address 0x4 - core index']
  #allocation1 [shape = 'u32[144,128]{1,0:T(1,128)}', space=vmem, size = 0x12000, scoped, tag = 'internal scratch']
  %s0 = inlined_call_operand.vmem [shape: bf16[8,32], index: 0, kind: input, shape index: {}]
  %s1 = inlined_call_operand.vmem [shape: bf16[32,392], index: 1, kind: input, shape index: {}]
  %s2 = inlined_call_operand.vmem [shape: f32[1,392], index: 2, kind: input, shape index: {}]
  %s3 = inlined_call_operand.vmem [shape: f32[8,392], index: 3, kind: output, shape index: {}]
  %s4 = sld [smem:[#allocation0]]
  $region22: #{_lambda_.10} parent=0
    _
  %s6 = ssub.s32 1, %s4
  %s7 = scalar_select 0, %s6, %s4
  // Predicated region
  $region2: #{_lambda_.10} parent=0 // pred_check
    _
  $region3: #{_lambda_.10} parent=0 // pred_check_branch
    %9 = sbr.rel (0) target = $region5
  $region4: #{_lambda_.10} parent=0 // pred_region
    _
  $region5: #{_lambda_.10} parent=0 // pred_fallthru
    _
  // Predicated region
  $region6: #{_lambda_.10} parent=0 // pred_check
    _
  $region7: #{_lambda_.10} parent=0 // pred_check_branch
    %11 = sbr.rel (0) target = $region9
  $region8: #{_lambda_.10} parent=0 // pred_region
    _
  $region9: #{_lambda_.10} parent=0 // pred_fallthru
    _
  // Predicated region
  $region10: #{_lambda_.10} parent=0 // pred_check
    _
  $region11: #{_lambda_.10} parent=0 // pred_check_branch
    %13 = sbr.rel (0) target = $region13
  $region12: #{_lambda_.10} parent=0 // pred_region
    _
  $region13: #{_lambda_.10} parent=0 // pred_fallthru
    _
  %v15 = vld [vmem:[%s0] sm:$0xf]
  %v16 = vld [vmem:[%s1] sm:$0xff]
  %v17 = vld [vmem:[%s1 + $0x8] sm:$0xff]
  %v18 = vld [vmem:[%s1 + $0x10] sm:$0xff]
  %v19 = vld [vmem:[%s1 + $0x18] sm:$0xff]
  %v20 = vld [vmem:[%s1 + $0x20] sm:$0xff]
  %v21 = vld [vmem:[%s1 + $0x28] sm:$0xff]
  %v22 = vld [vmem:[%s1 + $0x30] sm:$0xff]
  %v23 = vld [vmem:[%s1 + $0x38] sm:$0xff]
  %v24 = vld [vmem:[%s2] sm:$0xf]
  %v26 = vlaneseq
  %v27 = vshrl.u32 %v26, 7
  %v28 = vsub.s32 0, %v27
  %v29 = vrot.slane %v24, %v28
  %v30 = vlaneseq
  %v31 = vshrl.u32 %v30, 7
  %v32 = vsub.s32 1, %v31
  %v33 = vrot.slane %v24, %v32
  %v34 = vlaneseq
  %v35 = vshrl.u32 %v34, 7
  %v36 = vsub.s32 2, %v35
  %v37 = vrot.slane %v24, %v36
  %v38 = vlaneseq
  %v39 = vshrl.u32 %v38, 7
  %v40 = vsub.s32 3, %v39
  %v41 = vrot.slane %v24, %v40
  %v54 = vunpack.c.l.b16 %v16
  %v55 = vunpack.c.h.b16 %v16
  %v56 = vunpack.c.l.b16 %v17
  %v57 = vunpack.c.h.b16 %v17
  %v58 = vunpack.c.l.b16 %v18
  %v59 = vunpack.c.h.b16 %v18
  %v60 = vunpack.c.l.b16 %v19
  %v61 = vunpack.c.h.b16 %v19
  %v62 = vunpack.c.l.b16 %v20
  %v63 = vunpack.c.h.b16 %v20
  %v64 = vunpack.c.l.b16 %v21
  %v65 = vunpack.c.h.b16 %v21
  %v66 = vunpack.c.l.b16 %v22
  %v67 = vunpack.c.h.b16 %v22
  %v68 = vunpack.c.l.b16 %v23
  %v69 = vunpack.c.h.b16 %v23
  %v70 = vpack.c.b16 %v58, %v54
  %v71 = vpack.c.b16 %v59, %v55
  %v72 = vpack.c.b16 %v60, %v56
  %v73 = vpack.c.b16 %v61, %v57
  %v74 = vpack.c.b16 %v66, %v62
  %v75 = vpack.c.b16 %v67, %v63
  %v76 = vpack.c.b16 %v68, %v64
  %v77 = vpack.c.b16 %v69, %v65
  %vm86 = vcmask 261120
  %v88 = vsel %vm86, %v15, 0
  %90 = vmatprep.subr.bf16.mxu0 0
  %91 = vmatpush1.bf16.msra.mxu0 0
  %92 = vmatprep.subr.bf16.mxu0 0
  %93 = vmatpush1.bf16.msra.mxu0 0
  %94 = vmatprep.subr.bf16.mxu0 0
  %95 = vmatpush1.bf16.msra.mxu0 0
  %96 = vmatprep.subr.bf16.mxu0 0
  %97 = vmatpush1.bf16.msra.mxu0 0
  %98 = vmatprep.subr.bf16.mxu0 0
  %99 = vmatpush1.bf16.msra.mxu0 0
  %100 = vmatprep.subr.bf16.mxu0 0
  %101 = vmatpush1.bf16.msra.mxu0 0
  %102 = vmatprep.subr.bf16.mxu0 %v75
  %103 = vmatpush1.bf16.msra.mxu0 %v74
  %104 = vmatprep.subr.bf16.mxu0 %v71
  %105 = vmatpush1.bf16.msra.mxu0 %v70
  %106 = vmatprep.subr.bf16.mxu0 0
  %107 = vmatpush2.bf16.msra.mxu0 0
  %108 = vmatprep.subr.bf16.mxu0 0
  %109 = vmatpush2.bf16.msra.mxu0 0
  %110 = vmatprep.subr.bf16.mxu0 0
  %111 = vmatpush2.bf16.msra.mxu0 0
  %112 = vmatprep.subr.bf16.mxu0 0
  %113 = vmatpush2.bf16.msra.mxu0 0
  %114 = vmatprep.subr.bf16.mxu0 0
  %115 = vmatpush2.bf16.msra.mxu0 0
  %116 = vmatprep.subr.bf16.mxu0 0
  %117 = vmatpush2.bf16.msra.mxu0 0
  %118 = vmatprep.subr.bf16.mxu0 0
  %119 = vmatpush2.bf16.msra.mxu0 0
  %120 = vmatprep.subr.bf16.mxu0 0
  %121 = vmatpush2.bf16.msra.mxu0 0
  %122 = vmatprep.mubr.bf16.mxu0 0
  %123 = vmatmul.mubr.bf16.gmra.mxu0 %v88
  %v124 = vpop.f32.mrf.mxu0
  %v125 = vadd.f32 %v29, %v124
  %v126 = vpop.f32.mrf.mxu0
  %v127 = vadd.f32 %v33, %v126
  %v128 = vpop.f32.mrf.mxu0
  %v129 = vpop.f32.mrf.mxu0
  %130 = vdwg.mxu0
  %131 = vmatprep.subr.bf16.mxu0 0
  %132 = vmatpush1.bf16.msra.mxu0 0
  %133 = vmatprep.subr.bf16.mxu0 0
  %134 = vmatpush1.bf16.msra.mxu0 0
  %135 = vmatprep.subr.bf16.mxu0 0
  %136 = vmatpush1.bf16.msra.mxu0 0
  %137 = vmatprep.subr.bf16.mxu0 0
  %138 = vmatpush1.bf16.msra.mxu0 0
  %139 = vmatprep.subr.bf16.mxu0 0
  %140 = vmatpush1.bf16.msra.mxu0 0
  %141 = vmatprep.subr.bf16.mxu0 0
  %142 = vmatpush1.bf16.msra.mxu0 0
  %143 = vmatprep.subr.bf16.mxu0 %v77
  %144 = vmatpush1.bf16.msra.mxu0 %v76
  %145 = vmatprep.subr.bf16.mxu0 %v73
  %146 = vmatpush1.bf16.msra.mxu0 %v72
  %147 = vmatprep.subr.bf16.mxu0 0
  %148 = vmatpush2.bf16.msra.mxu0 0
  %149 = vmatprep.subr.bf16.mxu0 0
  %150 = vmatpush2.bf16.msra.mxu0 0
  %151 = vmatprep.subr.bf16.mxu0 0
  %152 = vmatpush2.bf16.msra.mxu0 0
  %153 = vmatprep.subr.bf16.mxu0 0
  %154 = vmatpush2.bf16.msra.mxu0 0
  %155 = vmatprep.subr.bf16.mxu0 0
  %156 = vmatpush2.bf16.msra.mxu0 0
  %157 = vmatprep.subr.bf16.mxu0 0
  %158 = vmatpush2.bf16.msra.mxu0 0
  %159 = vmatprep.subr.bf16.mxu0 0
  %160 = vmatpush2.bf16.msra.mxu0 0
  %161 = vmatprep.subr.bf16.mxu0 0
  %162 = vmatpush2.bf16.msra.mxu0 0
  %163 = vmatprep.mubr.bf16.mxu0 0
  %164 = vmatmul.mubr.bf16.gmra.mxu0 %v88
  %v165 = vpop.f32.mrf.mxu0
  %v166 = vadd.f32 %v37, %v165
  %v167 = vpop.f32.mrf.mxu0
  %v168 = vadd.f32 %v41, %v167
  %v169 = vpop.f32.mrf.mxu0
  %v170 = vpop.f32.mrf.mxu0
  %171 = vdwg.mxu0
  %v172 = vmax.f32 %v125, 0.0
  %v173 = vmax.f32 %v127, 0.0
  %v174 = vmax.f32 %v166, 0.0
  %v175 = vmax.f32 %v168, 0.0
  %176 = vst [vmem:[%s3] sm:$0xff] %v172
  %177 = vst [vmem:[%s3 + $0x8] sm:$0xff] %v173
  %178 = vst [vmem:[%s3 + $0x10] sm:$0xff] %v174
  %vm179 = vcmask 64512
  %180 = vst.msk [vmem:[%s3 + $0x18] sm:$0xff] %vm179, %v175
  // Predicated region
  $region14: #{_lambda_.10} parent=0 // pred_check
    _
  $region15: #{_lambda_.10} parent=0 // pred_check_branch
    %182 = sbr.rel (0) target = $region17
  $region16: #{_lambda_.10} parent=0 // pred_region
    _
  $region17: #{_lambda_.10} parent=0 // pred_fallthru
    _
  // Predicated region
  $region18: #{_lambda_.10} parent=0 // pred_check
    _
  $region19: #{_lambda_.10} parent=0 // pred_check_branch
    %184 = sbr.rel (0) target = $region21
  $region20: #{_lambda_.10} parent=0 // pred_region
    _
  $region21: #{_lambda_.10} parent=0 // pred_fallthru
    _

// kernel: _lambda_.9
$region0: #{_lambda_.9}
  #allocation0 [shape = 'u32[]', space=smem, size = 0x4, offset = 0x4, fixed_abs, tag = 'smem constant byte address 0x4 - core index']
  #allocation1 [shape = 'u32[144,128]{1,0:T(1,128)}', space=vmem, size = 0x12000, scoped, tag = 'internal scratch']
  %s0 = inlined_call_operand.vmem [shape: bf16[8,784], index: 0, kind: input, shape index: {}]
  %s1 = inlined_call_operand.vmem [shape: bf16[784,32], index: 1, kind: input, shape index: {}]
  %s2 = inlined_call_operand.vmem [shape: f32[1,32], index: 2, kind: input, shape index: {}]
  %s3 = inlined_call_operand.vmem [shape: f32[8,32], index: 3, kind: output, shape index: {}]
  %s4 = sld [smem:[#allocation0]]
  $region22: #{_lambda_.9} parent=0
    _
  %s6 = ssub.s32 1, %s4
  %s7 = scalar_select 0, %s6, %s4
  // Predicated region
  $region2: #{_lambda_.9} parent=0 // pred_check
    _
  $region3: #{_lambda_.9} parent=0 // pred_check_branch
    %9 = sbr.rel (0) target = $region5
  $region4: #{_lambda_.9} parent=0 // pred_region
    _
  $region5: #{_lambda_.9} parent=0 // pred_fallthru
    _
  // Predicated region
  $region6: #{_lambda_.9} parent=0 // pred_check
    _
  $region7: #{_lambda_.9} parent=0 // pred_check_branch
    %11 = sbr.rel (0) target = $region9
  $region8: #{_lambda_.9} parent=0 // pred_region
    _
  $region9: #{_lambda_.9} parent=0 // pred_fallthru
    _
  // Predicated region
  $region10: #{_lambda_.9} parent=0 // pred_check
    _
  $region11: #{_lambda_.9} parent=0 // pred_check_branch
    %13 = sbr.rel (0) target = $region13
  $region12: #{_lambda_.9} parent=0 // pred_region
    _
  $region13: #{_lambda_.9} parent=0 // pred_fallthru
    _
  %v15 = vld [vmem:[%s0] sm:$0xff]
  %v16 = vld [vmem:[%s0 + $0x8] sm:$0xff]
  %v17 = vld [vmem:[%s0 + $0x10] sm:$0xff]
  %v18 = vld [vmem:[%s0 + $0x18] sm:$0xf]
  %v19 = vld [vmem:[%s1] sm:$0xf]
  %v20 = vld [vmem:[%s1 + $0x4] sm:$0xf]
  %v21 = vld [vmem:[%s1 + $0x8] sm:$0xf]
  %v22 = vld [vmem:[%s1 + $0xc] sm:$0xf]
  %v23 = vld [vmem:[%s1 + $0x10] sm:$0xf]
  %v24 = vld [vmem:[%s1 + $0x14] sm:$0xf]
  %v25 = vld [vmem:[%s1 + $0x18] sm:$0xf]
  %v26 = vld [vmem:[%s1 + $0x1c] sm:$0xf]
  %v27 = vld [vmem:[%s1 + $0x20] sm:$0xf]
  %v28 = vld [vmem:[%s1 + $0x24] sm:$0xf]
  %v29 = vld [vmem:[%s1 + $0x28] sm:$0xf]
  %v30 = vld [vmem:[%s1 + $0x2c] sm:$0xf]
  %v31 = vld [vmem:[%s1 + $0x30] sm:$0xf]
  %v32 = vld [vmem:[%s1 + $0x34] sm:$0xf]
  %v33 = vld [vmem:[%s1 + $0x38] sm:$0xf]
  %v34 = vld [vmem:[%s1 + $0x3c] sm:$0xf]
  %v35 = vld [vmem:[%s1 + $0x40] sm:$0xf]
  %v36 = vld [vmem:[%s1 + $0x44] sm:$0xf]
  %v37 = vld [vmem:[%s1 + $0x48] sm:$0xf]
  %v38 = vld [vmem:[%s1 + $0x4c] sm:$0xf]
  %v39 = vld [vmem:[%s1 + $0x50] sm:$0xf]
  %v40 = vld [vmem:[%s1 + $0x54] sm:$0xf]
  %v41 = vld [vmem:[%s1 + $0x58] sm:$0xf]
  %v42 = vld [vmem:[%s1 + $0x5c] sm:$0xf]
  %v43 = vld [vmem:[%s1 + $0x60] sm:$0xf]
  %v44 = vld [vmem:[%s1 + $0x64] sm:$0xf]
  %v45 = vld [vmem:[%s1 + $0x68] sm:$0xf]
  %v46 = vld [vmem:[%s1 + $0x6c] sm:$0xf]
  %v47 = vld [vmem:[%s1 + $0x70] sm:$0xf]
  %v48 = vld [vmem:[%s1 + $0x74] sm:$0xf]
  %v49 = vld [vmem:[%s1 + $0x78] sm:$0xf]
  %v50 = vld [vmem:[%s1 + $0x7c] sm:$0xf]
  %v51 = vld [vmem:[%s1 + $0x80] sm:$0xf]
  %v52 = vld [vmem:[%s1 + $0x84] sm:$0xf]
  %v53 = vld [vmem:[%s1 + $0x88] sm:$0xf]
  %v54 = vld [vmem:[%s1 + $0x8c] sm:$0xf]
  %v55 = vld [vmem:[%s1 + $0x90] sm:$0xf]
  %v56 = vld [vmem:[%s1 + $0x94] sm:$0xf]
  %v57 = vld [vmem:[%s1 + $0x98] sm:$0xf]
  %v58 = vld [vmem:[%s1 + $0x9c] sm:$0xf]
  %v59 = vld [vmem:[%s1 + $0xa0] sm:$0xf]
  %v60 = vld [vmem:[%s1 + $0xa4] sm:$0xf]
  %v61 = vld [vmem:[%s1 + $0xa8] sm:$0xf]
  %v62 = vld [vmem:[%s1 + $0xac] sm:$0xf]
  %v63 = vld [vmem:[%s1 + $0xb0] sm:$0xf]
  %v64 = vld [vmem:[%s1 + $0xb4] sm:$0xf]
  %v65 = vld [vmem:[%s1 + $0xb8] sm:$0xf]
  %v66 = vld [vmem:[%s1 + $0xbc] sm:$0xf]
  %v67 = vld [vmem:[%s1 + $0xc0] sm:$0xf]
  %v68 = vld [vmem:[%s1 + $0xc4] sm:$0xf]
  %v69 = vld [vmem:[%s1 + $0xc8] sm:$0xf]
  %v70 = vld [vmem:[%s1 + $0xcc] sm:$0xf]
  %v71 = vld [vmem:[%s1 + $0xd0] sm:$0xf]
  %v72 = vld [vmem:[%s1 + $0xd4] sm:$0xf]
  %v73 = vld [vmem:[%s1 + $0xd8] sm:$0xf]
  %v74 = vld [vmem:[%s1 + $0xdc] sm:$0xf]
  %v75 = vld [vmem:[%s1 + $0xe0] sm:$0xf]
  %v76 = vld [vmem:[%s1 + $0xe4] sm:$0xf]
  %v77 = vld [vmem:[%s1 + $0xe8] sm:$0xf]
  %v78 = vld [vmem:[%s1 + $0xec] sm:$0xf]
  %v79 = vld [vmem:[%s1 + $0xf0] sm:$0xf]
  %v80 = vld [vmem:[%s1 + $0xf4] sm:$0xf]
  %v81 = vld [vmem:[%s1 + $0xf8] sm:$0xf]
  %v82 = vld [vmem:[%s1 + $0xfc] sm:$0xf]
  %v83 = vld [vmem:[%s1 + $0x100] sm:$0xf]
  %v84 = vld [vmem:[%s1 + $0x104] sm:$0xf]
  %v85 = vld [vmem:[%s1 + $0x108] sm:$0xf]
  %v86 = vld [vmem:[%s1 + $0x10c] sm:$0xf]
  %v87 = vld [vmem:[%s1 + $0x110] sm:$0xf]
  %v88 = vld [vmem:[%s1 + $0x114] sm:$0xf]
  %v89 = vld [vmem:[%s1 + $0x118] sm:$0xf]
  %v90 = vld [vmem:[%s1 + $0x11c] sm:$0xf]
  %v91 = vld [vmem:[%s1 + $0x120] sm:$0xf]
  %v92 = vld [vmem:[%s1 + $0x124] sm:$0xf]
  %v93 = vld [vmem:[%s1 + $0x128] sm:$0xf]
  %v94 = vld [vmem:[%s1 + $0x12c] sm:$0xf]
  %v95 = vld [vmem:[%s1 + $0x130] sm:$0xf]
  %v96 = vld [vmem:[%s1 + $0x134] sm:$0xf]
  %v97 = vld [vmem:[%s1 + $0x138] sm:$0xf]
  %v98 = vld [vmem:[%s1 + $0x13c] sm:$0xf]
  %v99 = vld [vmem:[%s1 + $0x140] sm:$0xf]
  %v100 = vld [vmem:[%s1 + $0x144] sm:$0xf]
  %v101 = vld [vmem:[%s1 + $0x148] sm:$0xf]
  %v102 = vld [vmem:[%s1 + $0x14c] sm:$0xf]
  %v103 = vld [vmem:[%s1 + $0x150] sm:$0xf]
  %v104 = vld [vmem:[%s1 + $0x154] sm:$0xf]
  %v105 = vld [vmem:[%s1 + $0x158] sm:$0xf]
  %v106 = vld [vmem:[%s1 + $0x15c] sm:$0xf]
  %v107 = vld [vmem:[%s1 + $0x160] sm:$0xf]
  %v108 = vld [vmem:[%s1 + $0x164] sm:$0xf]
  %v109 = vld [vmem:[%s1 + $0x168] sm:$0xf]
  %v110 = vld [vmem:[%s1 + $0x16c] sm:$0xf]
  %v111 = vld [vmem:[%s1 + $0x170] sm:$0xf]
  %v112 = vld [vmem:[%s1 + $0x174] sm:$0xf]
  %v113 = vld [vmem:[%s1 + $0x178] sm:$0xf]
  %v114 = vld [vmem:[%s1 + $0x17c] sm:$0xf]
  %v115 = vld [vmem:[%s1 + $0x180] sm:$0xf]
  %v116 = vld [vmem:[%s1 + $0x184] sm:$0xf]
  %v117 = vld [vmem:[%s2] sm:$0x1]
  %v119 = vlaneseq
  %v120 = vshrl.u32 %v119, 7
  %v121 = vsub.s32 0, %v120
  %v122 = vrot.slane %v117, %v121
  %v128 = vunpack.c.l.b16 %v15
  %v129 = vunpack.c.h.b16 %v15
  %v130 = vunpack.c.l.b16 %v16
  %v131 = vunpack.c.h.b16 %v16
  %v132 = vunpack.c.l.b16 %v17
  %v133 = vunpack.c.h.b16 %v17
  %v134 = vunpack.c.l.b16 %v18
  %v135 = vpack.c.b16 %v128, %v128
  %v136 = vpack.c.b16 %v129, %v129
  %v137 = vpack.c.b16 %v130, %v130
  %v138 = vpack.c.b16 %v131, %v131
  %v139 = vpack.c.b16 %v132, %v132
  %v140 = vpack.c.b16 %v133, %v133
  %v141 = vpack.c.b16 %v134, %v134
  %v246 = vunpack.c.l.b16 %v19
  %v247 = vunpack.c.l.b16 %v20
  %v248 = vunpack.c.l.b16 %v21
  %v249 = vunpack.c.l.b16 %v22
  %v250 = vunpack.c.l.b16 %v23
  %v251 = vunpack.c.l.b16 %v24
  %v252 = vunpack.c.l.b16 %v25
  %v253 = vunpack.c.l.b16 %v26
  %v254 = vunpack.c.l.b16 %v27
  %v255 = vunpack.c.l.b16 %v28
  %v256 = vunpack.c.l.b16 %v29
  %v257 = vunpack.c.l.b16 %v30
  %v258 = vunpack.c.l.b16 %v31
  %v259 = vunpack.c.l.b16 %v32
  %v260 = vunpack.c.l.b16 %v33
  %v261 = vunpack.c.l.b16 %v34
  %v262 = vunpack.c.l.b16 %v35
  %v263 = vunpack.c.l.b16 %v36
  %v264 = vunpack.c.l.b16 %v37
  %v265 = vunpack.c.l.b16 %v38
  %v266 = vunpack.c.l.b16 %v39
  %v267 = vunpack.c.l.b16 %v40
  %v268 = vunpack.c.l.b16 %v41
  %v269 = vunpack.c.l.b16 %v42
  %v270 = vunpack.c.l.b16 %v43
  %v271 = vunpack.c.l.b16 %v44
  %v272 = vunpack.c.l.b16 %v45
  %v273 = vunpack.c.l.b16 %v46
  %v274 = vunpack.c.l.b16 %v47
  %v275 = vunpack.c.l.b16 %v48
  %v276 = vunpack.c.l.b16 %v49
  %v277 = vunpack.c.l.b16 %v50
  %v278 = vunpack.c.l.b16 %v51
  %v279 = vunpack.c.l.b16 %v52
  %v280 = vunpack.c.l.b16 %v53
  %v281 = vunpack.c.l.b16 %v54
  %v282 = vunpack.c.l.b16 %v55
  %v283 = vunpack.c.l.b16 %v56
  %v284 = vunpack.c.l.b16 %v57
  %v285 = vunpack.c.l.b16 %v58
  %v286 = vunpack.c.l.b16 %v59
  %v287 = vunpack.c.l.b16 %v60
  %v288 = vunpack.c.l.b16 %v61
  %v289 = vunpack.c.l.b16 %v62
  %v290 = vunpack.c.l.b16 %v63
  %v291 = vunpack.c.l.b16 %v64
  %v292 = vunpack.c.l.b16 %v65
  %v293 = vunpack.c.l.b16 %v66
  %v294 = vunpack.c.l.b16 %v67
  %v295 = vunpack.c.l.b16 %v68
  %v296 = vunpack.c.l.b16 %v69
  %v297 = vunpack.c.l.b16 %v70
  %v298 = vunpack.c.l.b16 %v71
  %v299 = vunpack.c.l.b16 %v72
  %v300 = vunpack.c.l.b16 %v73
  %v301 = vunpack.c.l.b16 %v74
  %v302 = vunpack.c.l.b16 %v75
  %v303 = vunpack.c.l.b16 %v76
  %v304 = vunpack.c.l.b16 %v77
  %v305 = vunpack.c.l.b16 %v78
  %v306 = vunpack.c.l.b16 %v79
  %v307 = vunpack.c.l.b16 %v80
  %v308 = vunpack.c.l.b16 %v81
  %v309 = vunpack.c.l.b16 %v82
  %v310 = vunpack.c.l.b16 %v83
  %v311 = vunpack.c.l.b16 %v84
  %v312 = vunpack.c.l.b16 %v85
  %v313 = vunpack.c.l.b16 %v86
  %v314 = vunpack.c.l.b16 %v87
  %v315 = vunpack.c.l.b16 %v88
  %v316 = vunpack.c.l.b16 %v89
  %v317 = vunpack.c.l.b16 %v90
  %v318 = vunpack.c.l.b16 %v91
  %v319 = vunpack.c.l.b16 %v92
  %v320 = vunpack.c.l.b16 %v93
  %v321 = vunpack.c.l.b16 %v94
  %v322 = vunpack.c.l.b16 %v95
  %v323 = vunpack.c.l.b16 %v96
  %v324 = vunpack.c.l.b16 %v97
  %v325 = vunpack.c.l.b16 %v98
  %v326 = vunpack.c.l.b16 %v99
  %v327 = vunpack.c.l.b16 %v100
  %v328 = vunpack.c.l.b16 %v101
  %v329 = vunpack.c.l.b16 %v102
  %v330 = vunpack.c.l.b16 %v103
  %v331 = vunpack.c.l.b16 %v104
  %v332 = vunpack.c.l.b16 %v105
  %v333 = vunpack.c.l.b16 %v106
  %v334 = vunpack.c.l.b16 %v107
  %v335 = vunpack.c.l.b16 %v108
  %v336 = vunpack.c.l.b16 %v109
  %v337 = vunpack.c.l.b16 %v110
  %v338 = vunpack.c.l.b16 %v111
  %v339 = vunpack.c.l.b16 %v112
  %v340 = vunpack.c.l.b16 %v113
  %v341 = vunpack.c.l.b16 %v114
  %v342 = vunpack.c.l.b16 %v115
  %v343 = vunpack.c.l.b16 %v116
  %v344 = vpack.c.b16 %v247, %v246
  %v345 = vpack.c.b16 %v249, %v248
  %v346 = vpack.c.b16 %v251, %v250
  %v347 = vpack.c.b16 %v253, %v252
  %v348 = vpack.c.b16 %v255, %v254
  %v349 = vpack.c.b16 %v257, %v256
  %v350 = vpack.c.b16 %v259, %v258
  %v351 = vpack.c.b16 %v261, %v260
  %v352 = vpack.c.b16 %v263, %v262
  %v353 = vpack.c.b16 %v265, %v264
  %v354 = vpack.c.b16 %v267, %v266
  %v355 = vpack.c.b16 %v269, %v268
  %v356 = vpack.c.b16 %v271, %v270
  %v357 = vpack.c.b16 %v273, %v272
  %v358 = vpack.c.b16 %v275, %v274
  %v359 = vpack.c.b16 %v277, %v276
  %v360 = vpack.c.b16 %v279, %v278
  %v361 = vpack.c.b16 %v281, %v280
  %v362 = vpack.c.b16 %v283, %v282
  %v363 = vpack.c.b16 %v285, %v284
  %v364 = vpack.c.b16 %v287, %v286
  %v365 = vpack.c.b16 %v289, %v288
  %v366 = vpack.c.b16 %v291, %v290
  %v367 = vpack.c.b16 %v293, %v292
  %v368 = vpack.c.b16 %v295, %v294
  %v369 = vpack.c.b16 %v297, %v296
  %v370 = vpack.c.b16 %v299, %v298
  %v371 = vpack.c.b16 %v301, %v300
  %v372 = vpack.c.b16 %v303, %v302
  %v373 = vpack.c.b16 %v305, %v304
  %v374 = vpack.c.b16 %v307, %v306
  %v375 = vpack.c.b16 %v309, %v308
  %v376 = vpack.c.b16 %v311, %v310
  %v377 = vpack.c.b16 %v313, %v312
  %v378 = vpack.c.b16 %v315, %v314
  %v379 = vpack.c.b16 %v317, %v316
  %v380 = vpack.c.b16 %v319, %v318
  %v381 = vpack.c.b16 %v321, %v320
  %v382 = vpack.c.b16 %v323, %v322
  %v383 = vpack.c.b16 %v325, %v324
  %v384 = vpack.c.b16 %v327, %v326
  %v385 = vpack.c.b16 %v329, %v328
  %v386 = vpack.c.b16 %v331, %v330
  %v387 = vpack.c.b16 %v333, %v332
  %v388 = vpack.c.b16 %v335, %v334
  %v389 = vpack.c.b16 %v337, %v336
  %v390 = vpack.c.b16 %v339, %v338
  %v391 = vpack.c.b16 %v341, %v340
  %v392 = vpack.c.b16 %v343, %v342
  %vm442 = vcmask 130048
  %v444 = vsel %vm442, %v141, 0
  %446 = vmatprep.subr.bf16.mxu0 0
  %447 = vmatpush1.bf16.msra.mxu0 %v351
  %448 = vmatprep.subr.bf16.mxu0 0
  %449 = vmatpush1.bf16.msra.mxu0 %v350
  %450 = vmatprep.subr.bf16.mxu0 0
  %451 = vmatpush1.bf16.msra.mxu0 %v349
  %452 = vmatprep.subr.bf16.mxu0 0
  %453 = vmatpush1.bf16.msra.mxu0 %v348
  %454 = vmatprep.subr.bf16.mxu0 0
  %455 = vmatpush1.bf16.msra.mxu0 %v347
  %456 = vmatprep.subr.bf16.mxu0 0
  %457 = vmatpush1.bf16.msra.mxu0 %v346
  %458 = vmatprep.subr.bf16.mxu0 0
  %459 = vmatpush1.bf16.msra.mxu0 %v345
  %460 = vmatprep.subr.bf16.mxu0 0
  %461 = vmatpush1.bf16.msra.mxu0 %v344
  %462 = vmatprep.subr.bf16.mxu0 0
  %463 = vmatpush2.bf16.msra.mxu0 %v359
  %464 = vmatprep.subr.bf16.mxu0 0
  %465 = vmatpush2.bf16.msra.mxu0 %v358
  %466 = vmatprep.subr.bf16.mxu0 0
  %467 = vmatpush2.bf16.msra.mxu0 %v357
  %468 = vmatprep.subr.bf16.mxu0 0
  %469 = vmatpush2.bf16.msra.mxu0 %v356
  %470 = vmatprep.subr.bf16.mxu0 0
  %471 = vmatpush2.bf16.msra.mxu0 %v355
  %472 = vmatprep.subr.bf16.mxu0 0
  %473 = vmatpush2.bf16.msra.mxu0 %v354
  %474 = vmatprep.subr.bf16.mxu0 0
  %475 = vmatpush2.bf16.msra.mxu0 %v353
  %476 = vmatprep.subr.bf16.mxu0 0
  %477 = vmatpush2.bf16.msra.mxu0 %v352
  %478 = vmatprep.mubr.bf16.mxu0 %v136
  %479 = vmatmul.mubr.bf16.gmra.mxu0 %v135
  %v480 = vpop.f32.mrf.mxu0
  %v481 = vadd.f32 %v122, %v480
  %v482 = vpop.f32.mrf.mxu0
  %v483 = vpop.f32.mrf.mxu0
  %v484 = vpop.f32.mrf.mxu0
  %485 = vdwg.mxu0
  %486 = vmatprep.subr.bf16.mxu0 0
  %487 = vmatpush1.bf16.msra.mxu0 %v367
  %488 = vmatprep.subr.bf16.mxu0 0
  %489 = vmatpush1.bf16.msra.mxu0 %v366
  %490 = vmatprep.subr.bf16.mxu0 0
  %491 = vmatpush1.bf16.msra.mxu0 %v365
  %492 = vmatprep.subr.bf16.mxu0 0
  %493 = vmatpush1.bf16.msra.mxu0 %v364
  %494 = vmatprep.subr.bf16.mxu0 0
  %495 = vmatpush1.bf16.msra.mxu0 %v363
  %496 = vmatprep.subr.bf16.mxu0 0
  %497 = vmatpush1.bf16.msra.mxu0 %v362
  %498 = vmatprep.subr.bf16.mxu0 0
  %499 = vmatpush1.bf16.msra.mxu0 %v361
  %500 = vmatprep.subr.bf16.mxu0 0
  %501 = vmatpush1.bf16.msra.mxu0 %v360
  %502 = vmatprep.subr.bf16.mxu0 0
  %503 = vmatpush2.bf16.msra.mxu0 %v375
  %504 = vmatprep.subr.bf16.mxu0 0
  %505 = vmatpush2.bf16.msra.mxu0 %v374
  %506 = vmatprep.subr.bf16.mxu0 0
  %507 = vmatpush2.bf16.msra.mxu0 %v373
  %508 = vmatprep.subr.bf16.mxu0 0
  %509 = vmatpush2.bf16.msra.mxu0 %v372
  %510 = vmatprep.subr.bf16.mxu0 0
  %511 = vmatpush2.bf16.msra.mxu0 %v371
  %512 = vmatprep.subr.bf16.mxu0 0
  %513 = vmatpush2.bf16.msra.mxu0 %v370
  %514 = vmatprep.subr.bf16.mxu0 0
  %515 = vmatpush2.bf16.msra.mxu0 %v369
  %516 = vmatprep.subr.bf16.mxu0 0
  %517 = vmatpush2.bf16.msra.mxu0 %v368
  %518 = vmatprep.mubr.bf16.mxu0 %v138
  %519 = vmatmul.mubr.bf16.gmra.mxu0 %v137
  %v520 = vpop.f32.mrf.mxu0
  %v521 = vadd.f32 %v481, %v520
  %v522 = vpop.f32.mrf.mxu0
  %v523 = vpop.f32.mrf.mxu0
  %v524 = vpop.f32.mrf.mxu0
  %525 = vdwg.mxu0
  %526 = vmatprep.subr.bf16.mxu0 0
  %527 = vmatpush1.bf16.msra.mxu0 %v383
  %528 = vmatprep.subr.bf16.mxu0 0
  %529 = vmatpush1.bf16.msra.mxu0 %v382
  %530 = vmatprep.subr.bf16.mxu0 0
  %531 = vmatpush1.bf16.msra.mxu0 %v381
  %532 = vmatprep.subr.bf16.mxu0 0
  %533 = vmatpush1.bf16.msra.mxu0 %v380
  %534 = vmatprep.subr.bf16.mxu0 0
  %535 = vmatpush1.bf16.msra.mxu0 %v379
  %536 = vmatprep.subr.bf16.mxu0 0
  %537 = vmatpush1.bf16.msra.mxu0 %v378
  %538 = vmatprep.subr.bf16.mxu0 0
  %539 = vmatpush1.bf16.msra.mxu0 %v377
  %540 = vmatprep.subr.bf16.mxu0 0
  %541 = vmatpush1.bf16.msra.mxu0 %v376
  %542 = vmatprep.subr.bf16.mxu0 0
  %543 = vmatpush2.bf16.msra.mxu0 %v391
  %544 = vmatprep.subr.bf16.mxu0 0
  %545 = vmatpush2.bf16.msra.mxu0 %v390
  %546 = vmatprep.subr.bf16.mxu0 0
  %547 = vmatpush2.bf16.msra.mxu0 %v389
  %548 = vmatprep.subr.bf16.mxu0 0
  %549 = vmatpush2.bf16.msra.mxu0 %v388
  %550 = vmatprep.subr.bf16.mxu0 0
  %551 = vmatpush2.bf16.msra.mxu0 %v387
  %552 = vmatprep.subr.bf16.mxu0 0
  %553 = vmatpush2.bf16.msra.mxu0 %v386
  %554 = vmatprep.subr.bf16.mxu0 0
  %555 = vmatpush2.bf16.msra.mxu0 %v385
  %556 = vmatprep.subr.bf16.mxu0 0
  %557 = vmatpush2.bf16.msra.mxu0 %v384
  %558 = vmatprep.mubr.bf16.mxu0 %v140
  %559 = vmatmul.mubr.bf16.gmra.mxu0 %v139
  %v560 = vpop.f32.mrf.mxu0
  %v561 = vadd.f32 %v521, %v560
  %v562 = vpop.f32.mrf.mxu0
  %v563 = vpop.f32.mrf.mxu0
  %v564 = vpop.f32.mrf.mxu0
  %565 = vdwg.mxu0
  %566 = vmatprep.subr.bf16.mxu0 0
  %567 = vmatpush1.bf16.msra.mxu0 0
  %568 = vmatprep.subr.bf16.mxu0 0
  %569 = vmatpush1.bf16.msra.mxu0 0
  %570 = vmatprep.subr.bf16.mxu0 0
  %571 = vmatpush1.bf16.msra.mxu0 0
  %572 = vmatprep.subr.bf16.mxu0 0
  %573 = vmatpush1.bf16.msra.mxu0 0
  %574 = vmatprep.subr.bf16.mxu0 0
  %575 = vmatpush1.bf16.msra.mxu0 0
  %576 = vmatprep.subr.bf16.mxu0 0
  %577 = vmatpush1.bf16.msra.mxu0 0
  %578 = vmatprep.subr.bf16.mxu0 0
  %579 = vmatpush1.bf16.msra.mxu0 0
  %580 = vmatprep.subr.bf16.mxu0 0
  %581 = vmatpush1.bf16.msra.mxu0 %v392
  %582 = vmatprep.subr.bf16.mxu0 0
  %583 = vmatpush2.bf16.msra.mxu0 0
  %584 = vmatprep.subr.bf16.mxu0 0
  %585 = vmatpush2.bf16.msra.mxu0 0
  %586 = vmatprep.subr.bf16.mxu0 0
  %587 = vmatpush2.bf16.msra.mxu0 0
  %588 = vmatprep.subr.bf16.mxu0 0
  %589 = vmatpush2.bf16.msra.mxu0 0
  %590 = vmatprep.subr.bf16.mxu0 0
  %591 = vmatpush2.bf16.msra.mxu0 0
  %592 = vmatprep.subr.bf16.mxu0 0
  %593 = vmatpush2.bf16.msra.mxu0 0
  %594 = vmatprep.subr.bf16.mxu0 0
  %595 = vmatpush2.bf16.msra.mxu0 0
  %596 = vmatprep.subr.bf16.mxu0 0
  %597 = vmatpush2.bf16.msra.mxu0 0
  %598 = vmatprep.mubr.bf16.mxu0 0
  %599 = vmatmul.mubr.bf16.gmra.mxu0 %v444
  %v600 = vpop.f32.mrf.mxu0
  %v601 = vadd.f32 %v561, %v600
  %v602 = vpop.f32.mrf.mxu0
  %v603 = vpop.f32.mrf.mxu0
  %v604 = vpop.f32.mrf.mxu0
  %605 = vdwg.mxu0
  %vm606 = vcmask 261120
  %607 = vst.msk [vmem:[%s3] sm:$0xff] %vm606, %v601
  // Predicated region
  $region14: #{_lambda_.9} parent=0 // pred_check
    _
  $region15: #{_lambda_.9} parent=0 // pred_check_branch
    %609 = sbr.rel (0) target = $region17
  $region16: #{_lambda_.9} parent=0 // pred_region
    _
  $region17: #{_lambda_.9} parent=0 // pred_fallthru
    _
  // Predicated region
  $region18: #{_lambda_.9} parent=0 // pred_check
    _
  $region19: #{_lambda_.9} parent=0 // pred_check_branch
    %611 = sbr.rel (0) target = $region21
  $region20: #{_lambda_.9} parent=0 // pred_region
    _
  $region21: #{_lambda_.9} parent=0 // pred_fallthru
    _

// kernel: _lambda_.11
$region0: #{_lambda_.11}
  #allocation0 [shape = 'u32[]', space=smem, size = 0x4, offset = 0x4, fixed_abs, tag = 'smem constant byte address 0x4 - core index']
  #allocation1 [shape = 'u32[144,128]{1,0:T(1,128)}', space=vmem, size = 0x12000, scoped, tag = 'internal scratch']
  %s0 = inlined_call_operand.vmem [shape: bf16[392,72], index: 0, kind: input, shape index: {}]
  %s1 = inlined_call_operand.vmem [shape: bf16[72,16], index: 1, kind: input, shape index: {}]
  %s2 = inlined_call_operand.vmem [shape: f32[1,16], index: 2, kind: input, shape index: {}]
  %s3 = inlined_call_operand.vmem [shape: f32[392,16], index: 3, kind: output, shape index: {}]
  %s4 = sld [smem:[#allocation0]]
  $region22: #{_lambda_.11} parent=0
    _
  %s6 = ssub.s32 1, %s4
  %s7 = scalar_select 0, %s6, %s4
  // Predicated region
  $region2: #{_lambda_.11} parent=0 // pred_check
    _
  $region3: #{_lambda_.11} parent=0 // pred_check_branch
    %9 = sbr.rel (0) target = $region5
  $region4: #{_lambda_.11} parent=0 // pred_region
    _
  $region5: #{_lambda_.11} parent=0 // pred_fallthru
    _
  // Predicated region
  $region6: #{_lambda_.11} parent=0 // pred_check
    _
  $region7: #{_lambda_.11} parent=0 // pred_check_branch
    %11 = sbr.rel (0) target = $region9
  $region8: #{_lambda_.11} parent=0 // pred_region
    _
  $region9: #{_lambda_.11} parent=0 // pred_fallthru
    _
  // Predicated region
  $region10: #{_lambda_.11} parent=0 // pred_check
    _
  $region11: #{_lambda_.11} parent=0 // pred_check_branch
    %13 = sbr.rel (0) target = $region13
  $region12: #{_lambda_.11} parent=0 // pred_region
    _
  $region13: #{_lambda_.11} parent=0 // pred_fallthru
    _
  %v15 = vld [vmem:[%s0] sm:$0xf]
  %v16 = vld [vmem:[%s0 + $0x4] sm:$0xf]
  %v17 = vld [vmem:[%s0 + $0x8] sm:$0xf]
  %v18 = vld [vmem:[%s0 + $0xc] sm:$0xf]
  %v19 = vld [vmem:[%s0 + $0x10] sm:$0xf]
  %v20 = vld [vmem:[%s0 + $0x14] sm:$0xf]
  %v21 = vld [vmem:[%s0 + $0x18] sm:$0xf]
  %v22 = vld [vmem:[%s0 + $0x1c] sm:$0xf]
  %v23 = vld [vmem:[%s0 + $0x20] sm:$0xf]
  %v24 = vld [vmem:[%s0 + $0x24] sm:$0xf]
  %v25 = vld [vmem:[%s0 + $0x28] sm:$0xf]
  %v26 = vld [vmem:[%s0 + $0x2c] sm:$0xf]
  %v27 = vld [vmem:[%s0 + $0x30] sm:$0xf]
  %v28 = vld [vmem:[%s0 + $0x34] sm:$0xf]
  %v29 = vld [vmem:[%s0 + $0x38] sm:$0xf]
  %v30 = vld [vmem:[%s0 + $0x3c] sm:$0xf]
  %v31 = vld [vmem:[%s0 + $0x40] sm:$0xf]
  %v32 = vld [vmem:[%s0 + $0x44] sm:$0xf]
  %v33 = vld [vmem:[%s0 + $0x48] sm:$0xf]
  %v34 = vld [vmem:[%s0 + $0x4c] sm:$0xf]
  %v35 = vld [vmem:[%s0 + $0x50] sm:$0xf]
  %v36 = vld [vmem:[%s0 + $0x54] sm:$0xf]
  %v37 = vld [vmem:[%s0 + $0x58] sm:$0xf]
  %v38 = vld [vmem:[%s0 + $0x5c] sm:$0xf]
  %v39 = vld [vmem:[%s0 + $0x60] sm:$0xf]
  %v40 = vld [vmem:[%s0 + $0x64] sm:$0xf]
  %v41 = vld [vmem:[%s0 + $0x68] sm:$0xf]
  %v42 = vld [vmem:[%s0 + $0x6c] sm:$0xf]
  %v43 = vld [vmem:[%s0 + $0x70] sm:$0xf]
  %v44 = vld [vmem:[%s0 + $0x74] sm:$0xf]
  %v45 = vld [vmem:[%s0 + $0x78] sm:$0xf]
  %v46 = vld [vmem:[%s0 + $0x7c] sm:$0xf]
  %v47 = vld [vmem:[%s0 + $0x80] sm:$0xf]
  %v48 = vld [vmem:[%s0 + $0x84] sm:$0xf]
  %v49 = vld [vmem:[%s0 + $0x88] sm:$0xf]
  %v50 = vld [vmem:[%s0 + $0x8c] sm:$0xf]
  %v51 = vld [vmem:[%s0 + $0x90] sm:$0xf]
  %v52 = vld [vmem:[%s0 + $0x94] sm:$0xf]
  %v53 = vld [vmem:[%s0 + $0x98] sm:$0xf]
  %v54 = vld [vmem:[%s0 + $0x9c] sm:$0xf]
  %v55 = vld [vmem:[%s0 + $0xa0] sm:$0xf]
  %v56 = vld [vmem:[%s0 + $0xa4] sm:$0xf]
  %v57 = vld [vmem:[%s0 + $0xa8] sm:$0xf]
  %v58 = vld [vmem:[%s0 + $0xac] sm:$0xf]
  %v59 = vld [vmem:[%s0 + $0xb0] sm:$0xf]
  %v60 = vld [vmem:[%s0 + $0xb4] sm:$0xf]
  %v61 = vld [vmem:[%s0 + $0xb8] sm:$0xf]
  %v62 = vld [vmem:[%s0 + $0xbc] sm:$0xf]
  %v63 = vld [vmem:[%s0 + $0xc0] sm:$0xf]
  %v64 = vld [vmem:[%s1] sm:$0xf]
  %v65 = vld [vmem:[%s1 + $0x4] sm:$0xf]
  %v66 = vld [vmem:[%s1 + $0x8] sm:$0xf]
  %v67 = vld [vmem:[%s1 + $0xc] sm:$0xf]
  %v68 = vld [vmem:[%s1 + $0x10] sm:$0xf]
  %v69 = vld [vmem:[%s1 + $0x14] sm:$0xf]
  %v70 = vld [vmem:[%s1 + $0x18] sm:$0xf]
  %v71 = vld [vmem:[%s1 + $0x1c] sm:$0xf]
  %v72 = vld [vmem:[%s1 + $0x20] sm:$0xf]
  %v73 = vld [vmem:[%s2] sm:$0x1]
  %v75 = vlaneseq
  %v76 = vshrl.u32 %v75, 7
  %v77 = vsub.s32 0, %v76
  %v78 = vrot.slane %v73, %v77
  %v129 = vunpack.c.l.b16 %v15
  %v130 = vunpack.c.l.b16 %v16
  %v131 = vunpack.c.l.b16 %v17
  %v132 = vunpack.c.l.b16 %v18
  %v133 = vunpack.c.l.b16 %v19
  %v134 = vunpack.c.l.b16 %v20
  %v135 = vunpack.c.l.b16 %v21
  %v136 = vunpack.c.l.b16 %v22
  %v137 = vunpack.c.l.b16 %v23
  %v138 = vunpack.c.l.b16 %v24
  %v139 = vunpack.c.l.b16 %v25
  %v140 = vunpack.c.l.b16 %v26
  %v141 = vunpack.c.l.b16 %v27
  %v142 = vunpack.c.l.b16 %v28
  %v143 = vunpack.c.l.b16 %v29
  %v144 = vunpack.c.l.b16 %v30
  %v145 = vunpack.c.l.b16 %v31
  %v146 = vunpack.c.l.b16 %v32
  %v147 = vunpack.c.l.b16 %v33
  %v148 = vunpack.c.l.b16 %v34
  %v149 = vunpack.c.l.b16 %v35
  %v150 = vunpack.c.l.b16 %v36
  %v151 = vunpack.c.l.b16 %v37
  %v152 = vunpack.c.l.b16 %v38
  %v153 = vunpack.c.l.b16 %v39
  %v154 = vunpack.c.l.b16 %v40
  %v155 = vunpack.c.l.b16 %v41
  %v156 = vunpack.c.l.b16 %v42
  %v157 = vunpack.c.l.b16 %v43
  %v158 = vunpack.c.l.b16 %v44
  %v159 = vunpack.c.l.b16 %v45
  %v160 = vunpack.c.l.b16 %v46
  %v161 = vunpack.c.l.b16 %v47
  %v162 = vunpack.c.l.b16 %v48
  %v163 = vunpack.c.l.b16 %v49
  %v164 = vunpack.c.l.b16 %v50
  %v165 = vunpack.c.l.b16 %v51
  %v166 = vunpack.c.l.b16 %v52
  %v167 = vunpack.c.l.b16 %v53
  %v168 = vunpack.c.l.b16 %v54
  %v169 = vunpack.c.l.b16 %v55
  %v170 = vunpack.c.l.b16 %v56
  %v171 = vunpack.c.l.b16 %v57
  %v172 = vunpack.c.l.b16 %v58
  %v173 = vunpack.c.l.b16 %v59
  %v174 = vunpack.c.l.b16 %v60
  %v175 = vunpack.c.l.b16 %v61
  %v176 = vunpack.c.l.b16 %v62
  %v177 = vunpack.c.l.b16 %v63
  %v178 = vpack.c.b16 %v130, %v129
  %v179 = vpack.c.b16 %v132, %v131
  %v180 = vpack.c.b16 %v134, %v133
  %v181 = vpack.c.b16 %v136, %v135
  %v182 = vpack.c.b16 %v138, %v137
  %v183 = vpack.c.b16 %v140, %v139
  %v184 = vpack.c.b16 %v142, %v141
  %v185 = vpack.c.b16 %v144, %v143
  %v186 = vpack.c.b16 %v146, %v145
  %v187 = vpack.c.b16 %v148, %v147
  %v188 = vpack.c.b16 %v150, %v149
  %v189 = vpack.c.b16 %v152, %v151
  %v190 = vpack.c.b16 %v154, %v153
  %v191 = vpack.c.b16 %v156, %v155
  %v192 = vpack.c.b16 %v158, %v157
  %v193 = vpack.c.b16 %v160, %v159
  %v194 = vpack.c.b16 %v162, %v161
  %v195 = vpack.c.b16 %v164, %v163
  %v196 = vpack.c.b16 %v166, %v165
  %v197 = vpack.c.b16 %v168, %v167
  %v198 = vpack.c.b16 %v170, %v169
  %v199 = vpack.c.b16 %v172, %v171
  %v200 = vpack.c.b16 %v174, %v173
  %v201 = vpack.c.b16 %v176, %v175
  %v202 = vpack.c.b16 %v177, %v177
  %v212 = vunpack.c.l.b16 %v64
  %v213 = vunpack.c.l.b16 %v65
  %v214 = vunpack.c.l.b16 %v66
  %v215 = vunpack.c.l.b16 %v67
  %v216 = vunpack.c.l.b16 %v68
  %v217 = vunpack.c.l.b16 %v69
  %v218 = vunpack.c.l.b16 %v70
  %v219 = vunpack.c.l.b16 %v71
  %v220 = vunpack.c.l.b16 %v72
  %v221 = vpack.c.b16 %v213, %v212
  %v222 = vpack.c.b16 %v215, %v214
  %v223 = vpack.c.b16 %v217, %v216
  %v224 = vpack.c.b16 %v219, %v218
  %v225 = vpack.c.b16 %v220, %v220
  %vm230 = vcmask 588800
  %v232 = vsel %vm230, %v178, 0
  %v235 = vsel %vm230, %v179, 0
  %v238 = vsel %vm230, %v180, 0
  %v241 = vsel %vm230, %v181, 0
  %v244 = vsel %vm230, %v182, 0
  %v247 = vsel %vm230, %v183, 0
  %v250 = vsel %vm230, %v184, 0
  %v253 = vsel %vm230, %v185, 0
  %v256 = vsel %vm230, %v186, 0
  %v259 = vsel %vm230, %v187, 0
  %v262 = vsel %vm230, %v188, 0
  %v265 = vsel %vm230, %v189, 0
  %v268 = vsel %vm230, %v190, 0
  %v271 = vsel %vm230, %v191, 0
  %v274 = vsel %vm230, %v192, 0
  %v277 = vsel %vm230, %v193, 0
  %v280 = vsel %vm230, %v194, 0
  %v283 = vsel %vm230, %v195, 0
  %v286 = vsel %vm230, %v196, 0
  %v289 = vsel %vm230, %v197, 0
  %v292 = vsel %vm230, %v198, 0
  %v295 = vsel %vm230, %v199, 0
  %v298 = vsel %vm230, %v200, 0
  %v301 = vsel %vm230, %v201, 0
  %v304 = vsel %vm230, %v202, 0
  %vm306 = vcmask 1043456
  %v308 = vsel %vm306, %v225, 0
  %310 = vmatprep.subr.bf16.mxu0 0
  %311 = vmatpush1.bf16.msra.mxu0 0
  %312 = vmatprep.subr.bf16.mxu0 0
  %313 = vmatpush1.bf16.msra.mxu0 0
  %314 = vmatprep.subr.bf16.mxu0 0
  %315 = vmatpush1.bf16.msra.mxu0 0
  %316 = vmatprep.subr.bf16.mxu0 0
  %317 = vmatpush1.bf16.msra.mxu0 %v308
  %318 = vmatprep.subr.bf16.mxu0 0
  %319 = vmatpush1.bf16.msra.mxu0 %v224
  %320 = vmatprep.subr.bf16.mxu0 0
  %321 = vmatpush1.bf16.msra.mxu0 %v223
  %322 = vmatprep.subr.bf16.mxu0 0
  %323 = vmatpush1.bf16.msra.mxu0 %v222
  %324 = vmatprep.subr.bf16.mxu0 0
  %325 = vmatpush1.bf16.msra.mxu0 %v221
  %326 = vmatprep.subr.bf16.mxu0 0
  %327 = vmatpush2.bf16.msra.mxu0 0
  %328 = vmatprep.subr.bf16.mxu0 0
  %329 = vmatpush2.bf16.msra.mxu0 0
  %330 = vmatprep.subr.bf16.mxu0 0
  %331 = vmatpush2.bf16.msra.mxu0 0
  %332 = vmatprep.subr.bf16.mxu0 0
  %333 = vmatpush2.bf16.msra.mxu0 0
  %334 = vmatprep.subr.bf16.mxu0 0
  %335 = vmatpush2.bf16.msra.mxu0 0
  %336 = vmatprep.subr.bf16.mxu0 0
  %337 = vmatpush2.bf16.msra.mxu0 0
  %338 = vmatprep.subr.bf16.mxu0 0
  %339 = vmatpush2.bf16.msra.mxu0 0
  %340 = vmatprep.subr.bf16.mxu0 0
  %341 = vmatpush2.bf16.msra.mxu0 0
  %342 = vmatprep.mubr.bf16.mxu0 0
  %343 = vmatmul.mubr.bf16.gmra.mxu0 %v232
  %v344 = vpop.f32.mrf.mxu0
  %v345 = vadd.f32 %v78, %v344
  %v346 = vpop.f32.mrf.mxu0
  %v347 = vpop.f32.mrf.mxu0
  %v348 = vadd.f32 %v78, %v347
  %v349 = vpop.f32.mrf.mxu0
  %350 = vmatprep.mubr.bf16.mxu0 0
  %351 = vmatmul.mubr.bf16.gmra.mxu0 %v235
  %v352 = vpop.f32.mrf.mxu0
  %v353 = vadd.f32 %v78, %v352
  %v354 = vpop.f32.mrf.mxu0
  %v355 = vpop.f32.mrf.mxu0
  %v356 = vadd.f32 %v78, %v355
  %v357 = vpop.f32.mrf.mxu0
  %358 = vmatprep.mubr.bf16.mxu0 0
  %359 = vmatmul.mubr.bf16.gmra.mxu0 %v238
  %v360 = vpop.f32.mrf.mxu0
  %v361 = vadd.f32 %v78, %v360
  %v362 = vpop.f32.mrf.mxu0
  %v363 = vpop.f32.mrf.mxu0
  %v364 = vadd.f32 %v78, %v363
  %v365 = vpop.f32.mrf.mxu0
  %366 = vmatprep.mubr.bf16.mxu0 0
  %367 = vmatmul.mubr.bf16.gmra.mxu0 %v241
  %v368 = vpop.f32.mrf.mxu0
  %v369 = vadd.f32 %v78, %v368
  %v370 = vpop.f32.mrf.mxu0
  %v371 = vpop.f32.mrf.mxu0
  %v372 = vadd.f32 %v78, %v371
  %v373 = vpop.f32.mrf.mxu0
  %374 = vmatprep.mubr.bf16.mxu0 0
  %375 = vmatmul.mubr.bf16.gmra.mxu0 %v244
  %v376 = vpop.f32.mrf.mxu0
  %v377 = vadd.f32 %v78, %v376
  %v378 = vpop.f32.mrf.mxu0
  %v379 = vpop.f32.mrf.mxu0
  %v380 = vadd.f32 %v78, %v379
  %v381 = vpop.f32.mrf.mxu0
  %382 = vmatprep.mubr.bf16.mxu0 0
  %383 = vmatmul.mubr.bf16.gmra.mxu0 %v247
  %v384 = vpop.f32.mrf.mxu0
  %v385 = vadd.f32 %v78, %v384
  %v386 = vpop.f32.mrf.mxu0
  %v387 = vpop.f32.mrf.mxu0
  %v388 = vadd.f32 %v78, %v387
  %v389 = vpop.f32.mrf.mxu0
  %390 = vmatprep.mubr.bf16.mxu0 0
  %391 = vmatmul.mubr.bf16.gmra.mxu0 %v250
  %v392 = vpop.f32.mrf.mxu0
  %v393 = vadd.f32 %v78, %v392
  %v394 = vpop.f32.mrf.mxu0
  %v395 = vpop.f32.mrf.mxu0
  %v396 = vadd.f32 %v78, %v395
  %v397 = vpop.f32.mrf.mxu0
  %398 = vmatprep.mubr.bf16.mxu0 0
  %399 = vmatmul.mubr.bf16.gmra.mxu0 %v253
  %v400 = vpop.f32.mrf.mxu0
  %v401 = vadd.f32 %v78, %v400
  %v402 = vpop.f32.mrf.mxu0
  %v403 = vpop.f32.mrf.mxu0
  %v404 = vadd.f32 %v78, %v403
  %v405 = vpop.f32.mrf.mxu0
  %406 = vmatprep.mubr.bf16.mxu0 0
  %407 = vmatmul.mubr.bf16.gmra.mxu0 %v256
  %v408 = vpop.f32.mrf.mxu0
  %v409 = vadd.f32 %v78, %v408
  %v410 = vpop.f32.mrf.mxu0
  %v411 = vpop.f32.mrf.mxu0
  %v412 = vadd.f32 %v78, %v411
  %v413 = vpop.f32.mrf.mxu0
  %414 = vmatprep.mubr.bf16.mxu0 0
  %415 = vmatmul.mubr.bf16.gmra.mxu0 %v259
  %v416 = vpop.f32.mrf.mxu0
  %v417 = vadd.f32 %v78, %v416
  %v418 = vpop.f32.mrf.mxu0
  %v419 = vpop.f32.mrf.mxu0
  %v420 = vadd.f32 %v78, %v419
  %v421 = vpop.f32.mrf.mxu0
  %422 = vmatprep.mubr.bf16.mxu0 0
  %423 = vmatmul.mubr.bf16.gmra.mxu0 %v262
  %v424 = vpop.f32.mrf.mxu0
  %v425 = vadd.f32 %v78, %v424
  %v426 = vpop.f32.mrf.mxu0
  %v427 = vpop.f32.mrf.mxu0
  %v428 = vadd.f32 %v78, %v427
  %v429 = vpop.f32.mrf.mxu0
  %430 = vmatprep.mubr.bf16.mxu0 0
  %431 = vmatmul.mubr.bf16.gmra.mxu0 %v265
  %v432 = vpop.f32.mrf.mxu0
  %v433 = vadd.f32 %v78, %v432
  %v434 = vpop.f32.mrf.mxu0
  %v435 = vpop.f32.mrf.mxu0
  %v436 = vadd.f32 %v78, %v435
  %v437 = vpop.f32.mrf.mxu0
  %438 = vmatprep.mubr.bf16.mxu0 0
  %439 = vmatmul.mubr.bf16.gmra.mxu0 %v268
  %v440 = vpop.f32.mrf.mxu0
  %v441 = vadd.f32 %v78, %v440
  %v442 = vpop.f32.mrf.mxu0
  %v443 = vpop.f32.mrf.mxu0
  %v444 = vadd.f32 %v78, %v443
  %v445 = vpop.f32.mrf.mxu0
  %446 = vmatprep.mubr.bf16.mxu0 0
  %447 = vmatmul.mubr.bf16.gmra.mxu0 %v271
  %v448 = vpop.f32.mrf.mxu0
  %v449 = vadd.f32 %v78, %v448
  %v450 = vpop.f32.mrf.mxu0
  %v451 = vpop.f32.mrf.mxu0
  %v452 = vadd.f32 %v78, %v451
  %v453 = vpop.f32.mrf.mxu0
  %454 = vmatprep.mubr.bf16.mxu0 0
  %455 = vmatmul.mubr.bf16.gmra.mxu0 %v274
  %v456 = vpop.f32.mrf.mxu0
  %v457 = vadd.f32 %v78, %v456
  %v458 = vpop.f32.mrf.mxu0
  %v459 = vpop.f32.mrf.mxu0
  %v460 = vadd.f32 %v78, %v459
  %v461 = vpop.f32.mrf.mxu0
  %462 = vmatprep.mubr.bf16.mxu0 0
  %463 = vmatmul.mubr.bf16.gmra.mxu0 %v277
  %v464 = vpop.f32.mrf.mxu0
  %v465 = vadd.f32 %v78, %v464
  %v466 = vpop.f32.mrf.mxu0
  %v467 = vpop.f32.mrf.mxu0
  %v468 = vadd.f32 %v78, %v467
  %v469 = vpop.f32.mrf.mxu0
  %470 = vmatprep.mubr.bf16.mxu0 0
  %471 = vmatmul.mubr.bf16.gmra.mxu0 %v280
  %v472 = vpop.f32.mrf.mxu0
  %v473 = vadd.f32 %v78, %v472
  %v474 = vpop.f32.mrf.mxu0
  %v475 = vpop.f32.mrf.mxu0
  %v476 = vadd.f32 %v78, %v475
  %v477 = vpop.f32.mrf.mxu0
  %478 = vmatprep.mubr.bf16.mxu0 0
  %479 = vmatmul.mubr.bf16.gmra.mxu0 %v283
  %v480 = vpop.f32.mrf.mxu0
  %v481 = vadd.f32 %v78, %v480
  %v482 = vpop.f32.mrf.mxu0
  %v483 = vpop.f32.mrf.mxu0
  %v484 = vadd.f32 %v78, %v483
  %v485 = vpop.f32.mrf.mxu0
  %486 = vmatprep.mubr.bf16.mxu0 0
  %487 = vmatmul.mubr.bf16.gmra.mxu0 %v286
  %v488 = vpop.f32.mrf.mxu0
  %v489 = vadd.f32 %v78, %v488
  %v490 = vpop.f32.mrf.mxu0
  %v491 = vpop.f32.mrf.mxu0
  %v492 = vadd.f32 %v78, %v491
  %v493 = vpop.f32.mrf.mxu0
  %494 = vmatprep.mubr.bf16.mxu0 0
  %495 = vmatmul.mubr.bf16.gmra.mxu0 %v289
  %v496 = vpop.f32.mrf.mxu0
  %v497 = vadd.f32 %v78, %v496
  %v498 = vpop.f32.mrf.mxu0
  %v499 = vpop.f32.mrf.mxu0
  %v500 = vadd.f32 %v78, %v499
  %v501 = vpop.f32.mrf.mxu0
  %502 = vmatprep.mubr.bf16.mxu0 0
  %503 = vmatmul.mubr.bf16.gmra.mxu0 %v292
  %v504 = vpop.f32.mrf.mxu0
  %v505 = vadd.f32 %v78, %v504
  %v506 = vpop.f32.mrf.mxu0
  %v507 = vpop.f32.mrf.mxu0
  %v508 = vadd.f32 %v78, %v507
  %v509 = vpop.f32.mrf.mxu0
  %510 = vmatprep.mubr.bf16.mxu0 0
  %511 = vmatmul.mubr.bf16.gmra.mxu0 %v295
  %v512 = vpop.f32.mrf.mxu0
  %v513 = vadd.f32 %v78, %v512
  %v514 = vpop.f32.mrf.mxu0
  %v515 = vpop.f32.mrf.mxu0
  %v516 = vadd.f32 %v78, %v515
  %v517 = vpop.f32.mrf.mxu0
  %518 = vmatprep.mubr.bf16.mxu0 0
  %519 = vmatmul.mubr.bf16.gmra.mxu0 %v298
  %v520 = vpop.f32.mrf.mxu0
  %v521 = vadd.f32 %v78, %v520
  %v522 = vpop.f32.mrf.mxu0
  %v523 = vpop.f32.mrf.mxu0
  %v524 = vadd.f32 %v78, %v523
  %v525 = vpop.f32.mrf.mxu0
  %526 = vmatprep.mubr.bf16.mxu0 0
  %527 = vmatmul.mubr.bf16.gmra.mxu0 %v301
  %v528 = vpop.f32.mrf.mxu0
  %v529 = vadd.f32 %v78, %v528
  %v530 = vpop.f32.mrf.mxu0
  %v531 = vpop.f32.mrf.mxu0
  %v532 = vadd.f32 %v78, %v531
  %v533 = vpop.f32.mrf.mxu0
  %534 = vmatprep.mubr.bf16.mxu0 0
  %535 = vmatmul.mubr.bf16.gmra.mxu0 %v304
  %v536 = vpop.f32.mrf.mxu0
  %v537 = vadd.f32 %v78, %v536
  %v538 = vpop.f32.mrf.mxu0
  %v539 = vpop.f32.mrf.mxu0
  %v540 = vpop.f32.mrf.mxu0
  %541 = vdwg.mxu0
  %v542 = vmax.f32 %v345, 0.0
  %v543 = vmax.f32 %v348, 0.0
  %v544 = vmax.f32 %v353, 0.0
  %v545 = vmax.f32 %v356, 0.0
  %v546 = vmax.f32 %v361, 0.0
  %v547 = vmax.f32 %v364, 0.0
  %v548 = vmax.f32 %v369, 0.0
  %v549 = vmax.f32 %v372, 0.0
  %v550 = vmax.f32 %v377, 0.0
  %v551 = vmax.f32 %v380, 0.0
  %v552 = vmax.f32 %v385, 0.0
  %v553 = vmax.f32 %v388, 0.0
  %v554 = vmax.f32 %v393, 0.0
  %v555 = vmax.f32 %v396, 0.0
  %v556 = vmax.f32 %v401, 0.0
  %v557 = vmax.f32 %v404, 0.0
  %v558 = vmax.f32 %v409, 0.0
  %v559 = vmax.f32 %v412, 0.0
  %v560 = vmax.f32 %v417, 0.0
  %v561 = vmax.f32 %v420, 0.0
  %v562 = vmax.f32 %v425, 0.0
  %v563 = vmax.f32 %v428, 0.0
  %v564 = vmax.f32 %v433, 0.0
  %v565 = vmax.f32 %v436, 0.0
  %v566 = vmax.f32 %v441, 0.0
  %v567 = vmax.f32 %v444, 0.0
  %v568 = vmax.f32 %v449, 0.0
  %v569 = vmax.f32 %v452, 0.0
  %v570 = vmax.f32 %v457, 0.0
  %v571 = vmax.f32 %v460, 0.0
  %v572 = vmax.f32 %v465, 0.0
  %v573 = vmax.f32 %v468, 0.0
  %v574 = vmax.f32 %v473, 0.0
  %v575 = vmax.f32 %v476, 0.0
  %v576 = vmax.f32 %v481, 0.0
  %v577 = vmax.f32 %v484, 0.0
  %v578 = vmax.f32 %v489, 0.0
  %v579 = vmax.f32 %v492, 0.0
  %v580 = vmax.f32 %v497, 0.0
  %v581 = vmax.f32 %v500, 0.0
  %v582 = vmax.f32 %v505, 0.0
  %v583 = vmax.f32 %v508, 0.0
  %v584 = vmax.f32 %v513, 0.0
  %v585 = vmax.f32 %v516, 0.0
  %v586 = vmax.f32 %v521, 0.0
  %v587 = vmax.f32 %v524, 0.0
  %v588 = vmax.f32 %v529, 0.0
  %v589 = vmax.f32 %v532, 0.0
  %v590 = vmax.f32 %v537, 0.0
  %vm591 = vcmask 130048
  %592 = vst.msk [vmem:[%s3] sm:$0xff] %vm591, %v542
  %593 = vst.msk [vmem:[%s3 + $0x8] sm:$0xff] %vm591, %v543
  %594 = vst.msk [vmem:[%s3 + $0x10] sm:$0xff] %vm591, %v544
  %595 = vst.msk [vmem:[%s3 + $0x18] sm:$0xff] %vm591, %v545
  %596 = vst.msk [vmem:[%s3 + $0x20] sm:$0xff] %vm591, %v546
  %597 = vst.msk [vmem:[%s3 + $0x28] sm:$0xff] %vm591, %v547
  %598 = vst.msk [vmem:[%s3 + $0x30] sm:$0xff] %vm591, %v548
  %599 = vst.msk [vmem:[%s3 + $0x38] sm:$0xff] %vm591, %v549
  %600 = vst.msk [vmem:[%s3 + $0x40] sm:$0xff] %vm591, %v550
  %601 = vst.msk [vmem:[%s3 + $0x48] sm:$0xff] %vm591, %v551
  %602 = vst.msk [vmem:[%s3 + $0x50] sm:$0xff] %vm591, %v552
  %603 = vst.msk [vmem:[%s3 + $0x58] sm:$0xff] %vm591, %v553
  %604 = vst.msk [vmem:[%s3 + $0x60] sm:$0xff] %vm591, %v554
  %605 = vst.msk [vmem:[%s3 + $0x68] sm:$0xff] %vm591, %v555
  %606 = vst.msk [vmem:[%s3 + $0x70] sm:$0xff] %vm591, %v556
  %607 = vst.msk [vmem:[%s3 + $0x78] sm:$0xff] %vm591, %v557
  %608 = vst.msk [vmem:[%s3 + $0x80] sm:$0xff] %vm591, %v558
  %609 = vst.msk [vmem:[%s3 + $0x88] sm:$0xff] %vm591, %v559
  %610 = vst.msk [vmem:[%s3 + $0x90] sm:$0xff] %vm591, %v560
  %611 = vst.msk [vmem:[%s3 + $0x98] sm:$0xff] %vm591, %v561
  %612 = vst.msk [vmem:[%s3 + $0xa0] sm:$0xff] %vm591, %v562
  %613 = vst.msk [vmem:[%s3 + $0xa8] sm:$0xff] %vm591, %v563
  %614 = vst.msk [vmem:[%s3 + $0xb0] sm:$0xff] %vm591, %v564
  %615 = vst.msk [vmem:[%s3 + $0xb8] sm:$0xff] %vm591, %v565
  %616 = vst.msk [vmem:[%s3 + $0xc0] sm:$0xff] %vm591, %v566
  %617 = vst.msk [vmem:[%s3 + $0xc8] sm:$0xff] %vm591, %v567
  %618 = vst.msk [vmem:[%s3 + $0xd0] sm:$0xff] %vm591, %v568
  %619 = vst.msk [vmem:[%s3 + $0xd8] sm:$0xff] %vm591, %v569
  %620 = vst.msk [vmem:[%s3 + $0xe0] sm:$0xff] %vm591, %v570
  %621 = vst.msk [vmem:[%s3 + $0xe8] sm:$0xff] %vm591, %v571
  %622 = vst.msk [vmem:[%s3 + $0xf0] sm:$0xff] %vm591, %v572
  %623 = vst.msk [vmem:[%s3 + $0xf8] sm:$0xff] %vm591, %v573
  %624 = vst.msk [vmem:[%s3 + $0x100] sm:$0xff] %vm591, %v574
  %625 = vst.msk [vmem:[%s3 + $0x108] sm:$0xff] %vm591, %v575
  %626 = vst.msk [vmem:[%s3 + $0x110] sm:$0xff] %vm591, %v576
  %627 = vst.msk [vmem:[%s3 + $0x118] sm:$0xff] %vm591, %v577
  %628 = vst.msk [vmem:[%s3 + $0x120] sm:$0xff] %vm591, %v578
  %629 = vst.msk [vmem:[%s3 + $0x128] sm:$0xff] %vm591, %v579
  %630 = vst.msk [vmem:[%s3 + $0x130] sm:$0xff] %vm591, %v580
  %631 = vst.msk [vmem:[%s3 + $0x138] sm:$0xff] %vm591, %v581
  %632 = vst.msk [vmem:[%s3 + $0x140] sm:$0xff] %vm591, %v582
  %633 = vst.msk [vmem:[%s3 + $0x148] sm:$0xff] %vm591, %v583
  %634 = vst.msk [vmem:[%s3 + $0x150] sm:$0xff] %vm591, %v584
  %635 = vst.msk [vmem:[%s3 + $0x158] sm:$0xff] %vm591, %v585
  %636 = vst.msk [vmem:[%s3 + $0x160] sm:$0xff] %vm591, %v586
  %637 = vst.msk [vmem:[%s3 + $0x168] sm:$0xff] %vm591, %v587
  %638 = vst.msk [vmem:[%s3 + $0x170] sm:$0xff] %vm591, %v588
  %639 = vst.msk [vmem:[%s3 + $0x178] sm:$0xff] %vm591, %v589
  %640 = vst.msk [vmem:[%s3 + $0x180] sm:$0xff] %vm591, %v590
  // Predicated region
  $region14: #{_lambda_.11} parent=0 // pred_check
    _
  $region15: #{_lambda_.11} parent=0 // pred_check_branch
    %642 = sbr.rel (0) target = $region17
  $region16: #{_lambda_.11} parent=0 // pred_region
    _
  $region17: #{_lambda_.11} parent=0 // pred_fallthru
    _
  // Predicated region
  $region18: #{_lambda_.11} parent=0 // pred_check
    _
  $region19: #{_lambda_.11} parent=0 // pred_check_branch
    %644 = sbr.rel (0) target = $region21
  $region20: #{_lambda_.11} parent=0 // pred_region
    _
  $region21: #{_lambda_.11} parent=0 // pred_fallthru
    _

// kernel: _lambda_.12
$region0: #{_lambda_.12}
  #allocation0 [shape = 'u32[]', space=smem, size = 0x4, offset = 0x4, fixed_abs, tag = 'smem constant byte address 0x4 - core index']
  #allocation1 [shape = 'u32[144,128]{1,0:T(1,128)}', space=vmem, size = 0x12000, scoped, tag = 'internal scratch']
  %s0 = inlined_call_operand.vmem [shape: bf16[2048,144], index: 0, kind: input, shape index: {}]
  %s1 = inlined_call_operand.vmem [shape: bf16[144,8], index: 1, kind: input, shape index: {}]
  %s2 = inlined_call_operand.vmem [shape: f32[1,8], index: 2, kind: input, shape index: {}]
  %s3 = inlined_call_operand.vmem [shape: f32[2048,8], index: 3, kind: output, shape index: {}]
  %s4 = sld [smem:[#allocation0]]
  $region45: #{_lambda_.12} parent=0
    _
  %s6 = ssub.s32 1, %s4
  %s7 = scalar_select 0, %s6, %s4
  loop: start=0, step=1, limit=6
  $region2: #{_lambda_.12} parent=0 // loop_pre_header
    _
  $region3: #{_lambda_.12} parent=0 // loop_header
    %s9 = sphi 0, %s13
    %p10 = scmp.ge.s32.totalorder %s9, 6
    %s19 = sphi 0, %s21
    %s22 = sphi 0, %s19
    %s23 = sphi 0, %s22
    %s39 = sphi 0, %s23
    %s43 = sphi 0, %s43
    %s45 = sphi 0, %s43
    %s46 = sphi 0, %s45
    %s60 = sphi 0, %s46
    %s64 = sphi 0, %s64
    %s66 = sphi 0, %s64
    %s67 = sphi 0, %s66
    %s81 = sphi 0, %s67
    %s87 = sphi 0, %s89
    %s90 = sphi 0, %s87
    %s91 = sphi 0, %s90
    %s107 = sphi 0, %s91
  $region4: #{_lambda_.12} parent=0 // loop_header_branch
    %12 = sbr.rel (%p10) target = $region8
  $region5: #{_lambda_.12} parent=0 // loop_body
    %s14 = ssub.s32 %s9, 1
    %s15 = ssub.s32 %s9, 2
    %s16 = sadd.s32 %s9, 1
    %s17 = ssub.s32 %s9, %s16
    %p18 = scmp.eq.s32.totalorder %s17, 0
    %s20 = sadd.s32 %s19, 1
    %s21 = scalar_select %p18, %s19, %s20
    %p24 = pneg %p18
    %p25 = scmp.eq.s32.totalorder %s9, 3
    %p26 = por %p24, %p25
    %p27 = scmp.ne.s32.totalorder %s19, %s22
    %p28 = scmp.eq.s32.totalorder %s9, 0
    %p29 = por %p27, %p28
    %p30 = scmp.ne.s32.totalorder %s19, %s22
    %p31 = scmp.eq.s32.totalorder %s14, 3
    %p32 = por %p30, %p31
    %p33 = scmp.ne.s32.totalorder %s22, %s23
    %p34 = scmp.eq.s32.totalorder %s14, 0
    %p35 = por %p33, %p34
    %p36 = scmp.ne.s32.totalorder %s22, %s23
    %p37 = scmp.eq.s32.totalorder %s15, 3
    %p38 = por %p36, %p37
    %p40 = scmp.ne.s32.totalorder %s23, %s39
    %p41 = scmp.eq.s32.totalorder %s15, 0
    %p42 = por %p40, %p41
    %s44 = sadd.s32 %s43, 1
    %p47 = scmp.eq.s32.totalorder %s9, 3
    %p48 = scmp.ne.s32.totalorder %s43, %s45
    %p49 = scmp.eq.s32.totalorder %s9, 0
    %p50 = por %p48, %p49
    %p51 = scmp.ne.s32.totalorder %s43, %s45
    %p52 = scmp.eq.s32.totalorder %s14, 3
    %p53 = por %p51, %p52
    %p54 = scmp.ne.s32.totalorder %s45, %s46
    %p55 = scmp.eq.s32.totalorder %s14, 0
    %p56 = por %p54, %p55
    %p57 = scmp.ne.s32.totalorder %s45, %s46
    %p58 = scmp.eq.s32.totalorder %s15, 3
    %p59 = por %p57, %p58
    %p61 = scmp.ne.s32.totalorder %s46, %s60
    %p62 = scmp.eq.s32.totalorder %s15, 0
    %p63 = por %p61, %p62
    %s65 = sadd.s32 %s64, 1
    %p68 = scmp.eq.s32.totalorder %s9, 3
    %p69 = scmp.ne.s32.totalorder %s64, %s66
    %p70 = scmp.eq.s32.totalorder %s9, 0
    %p71 = por %p69, %p70
    %p72 = scmp.ne.s32.totalorder %s64, %s66
    %p73 = scmp.eq.s32.totalorder %s14, 3
    %p74 = por %p72, %p73
    %p75 = scmp.ne.s32.totalorder %s66, %s67
    %p76 = scmp.eq.s32.totalorder %s14, 0
    %p77 = por %p75, %p76
    %p78 = scmp.ne.s32.totalorder %s66, %s67
    %p79 = scmp.eq.s32.totalorder %s15, 3
    %p80 = por %p78, %p79
    %p82 = scmp.ne.s32.totalorder %s67, %s81
    %p83 = scmp.eq.s32.totalorder %s15, 0
    %p84 = por %p82, %p83
    %s85 = ssub.s32 %s9, %s16
    %p86 = scmp.eq.s32.totalorder %s85, 0
    %s88 = sadd.s32 %s87, 1
    %s89 = scalar_select %p86, %s87, %s88
    %p92 = pneg %p86
    %p93 = scmp.eq.s32.totalorder %s9, 3
    %p94 = por %p92, %p93
    %p95 = scmp.ne.s32.totalorder %s87, %s90
    %p96 = scmp.eq.s32.totalorder %s9, 0
    %p97 = por %p95, %p96
    %p98 = scmp.ne.s32.totalorder %s87, %s90
    %p99 = scmp.eq.s32.totalorder %s14, 3
    %p100 = por %p98, %p99
    %p101 = scmp.ne.s32.totalorder %s90, %s91
    %p102 = scmp.eq.s32.totalorder %s14, 0
    %p103 = por %p101, %p102
    %p104 = scmp.ne.s32.totalorder %s90, %s91
    %p105 = scmp.eq.s32.totalorder %s15, 3
    %p106 = por %p104, %p105
    %p108 = scmp.ne.s32.totalorder %s91, %s107
    %p109 = scmp.eq.s32.totalorder %s15, 0
    %p110 = por %p108, %p109
    %p111 = scmp.le.s32.totalorder 1, %s9
    %p112 = scmp.lt.s32.totalorder %s9, 5
    %p113 = pnand %p111, %p112
    %p114 = pneg %p113
    // Predicated region
    $region9: #{_lambda_.12} parent=5 // pred_check
      _
    $region10: #{_lambda_.12} parent=5 // pred_check_branch
      %116 = sbr.rel (%p113) target = $region12
    $region11: #{_lambda_.12} parent=5 // pred_region
      %s117 = ssub.s32 %s9, 1
      // Predicated region
      $region13: #{_lambda_.12} parent=11 // pred_check
        %p118 = pneg %p56
      $region14: #{_lambda_.12} parent=11 // pred_check_branch
        %120 = sbr.rel (%p118) target = $region16
      $region15: #{_lambda_.12} parent=11 // pred_region
        _
      $region16: #{_lambda_.12} parent=11 // pred_fallthru
        _
      // Predicated region
      $region17: #{_lambda_.12} parent=11 // pred_check
        %p121 = pneg %p77
      $region18: #{_lambda_.12} parent=11 // pred_check_branch
        %123 = sbr.rel (%p121) target = $region20
      $region19: #{_lambda_.12} parent=11 // pred_region
        _
      $region20: #{_lambda_.12} parent=11 // pred_fallthru
        _
    $region12: #{_lambda_.12} parent=5 // pred_fallthru
      _
    %p124 = scmp.lt.s32.totalorder %s9, 4
    // Predicated region
    $region21: #{_lambda_.12} parent=5 // pred_check
      %p125 = pneg %p124
    $region22: #{_lambda_.12} parent=5 // pred_check_branch
      %127 = sbr.rel (%p125) target = $region24
    $region23: #{_lambda_.12} parent=5 // pred_region
      // Predicated region
      $region25: #{_lambda_.12} parent=23 // pred_check
        %p128 = pneg %p29
      $region26: #{_lambda_.12} parent=23 // pred_check_branch
        %130 = sbr.rel (%p128) target = $region28
      $region27: #{_lambda_.12} parent=23 // pred_region
        %s131 = smul.u32 64, %s9
        %p132 = scmp.lt.s32.totalorder %s131, 255
        %s133 = scalar_select %p132, %s131, 255
        %s134 = smul.addr %s133, 2
        %s135 = smul.addr %s134, 4
        %s136 = scalar_lea.vmem %s0, %s135
        %s137 = smul.u32 64, %s9
      $region28: #{_lambda_.12} parent=23 // pred_fallthru
        _
    $region24: #{_lambda_.12} parent=5 // pred_fallthru
      _
    %p138 = scmp.le.s32.totalorder 1, %s9
    %p139 = scmp.lt.s32.totalorder %s9, 5
    %p140 = pnand %p138, %p139
    %p141 = pneg %p140
    // Predicated region
    $region29: #{_lambda_.12} parent=5 // pred_check
      _
    $region30: #{_lambda_.12} parent=5 // pred_check_branch
      %143 = sbr.rel (%p140) target = $region32
    $region31: #{_lambda_.12} parent=5 // pred_region
      %s144 = ssub.s32 %s9, 1
      %s145 = smul.u32 64, %s14
      %p146 = scmp.lt.s32.totalorder %s145, 255
      %s147 = scalar_select %p146, %s145, 255
      %s148 = smul.addr %s147, 2
      %s149 = smul.addr %s148, 4
      %s150 = scalar_lea.vmem %s0, %s149
      %p151 = pneg %p35
      %p152 = pneg %p32
      %p153 = pneg %p56
      %p154 = pneg %p53
      %p155 = pneg %p77
      %p156 = pneg %p74
      %p157 = pneg %p103
      %p158 = pneg %p100
      %s159 = smul.u32 64, %s14
      %p160 = scmp.lt.s32.totalorder %s159, 255
      %s161 = scalar_select %p160, %s159, 255
      %s162 = smul.addr %s161, 8
      %s163 = scalar_lea.vmem %s3, %s162
      %s164 = smul.u32 64, %s14
      %p165 = scmp.lt.s32.totalorder %s164, 255
      %s166 = scalar_select %p165, %s164, 255
      %s167 = smul.addr %s166, 2
      %s168 = smul.addr %s167, 4
      %s169 = scalar_lea.vmem %s0, %s168
      %s170 = smul.u32 64, %s14
      %s171 = smul.u32 64, %s14
      %p172 = scmp.lt.s32.totalorder %s171, 255
      %s173 = scalar_select %p172, %s171, 255
      %s174 = smul.addr %s173, 8
      %s175 = scalar_lea.vmem %s3, %s174
      %s176 = smul.u32 64, %s14
      %v178 = vld [vmem:[%s169] sm:$0xff]
      %v179 = vld [vmem:[%s169 + $0x8] sm:$0xff]
      %v180 = vld [vmem:[%s169 + $0x10] sm:$0xff]
      %v181 = vld [vmem:[%s169 + $0x18] sm:$0xff]
      %v182 = vld [vmem:[%s169 + $0x20] sm:$0xff]
      %v183 = vld [vmem:[%s169 + $0x28] sm:$0xff]
      %v184 = vld [vmem:[%s169 + $0x30] sm:$0xff]
      %v185 = vld [vmem:[%s169 + $0x38] sm:$0xff]
      %v186 = vld [vmem:[%s169 + $0x40] sm:$0xff]
      %v187 = vld [vmem:[%s169 + $0x48] sm:$0xff]
      %v188 = vld [vmem:[%s169 + $0x50] sm:$0xff]
      %v189 = vld [vmem:[%s169 + $0x58] sm:$0xff]
      %v190 = vld [vmem:[%s169 + $0x60] sm:$0xff]
      %v191 = vld [vmem:[%s169 + $0x68] sm:$0xff]
      %v192 = vld [vmem:[%s169 + $0x70] sm:$0xff]
      %v193 = vld [vmem:[%s169 + $0x78] sm:$0xff]
      %v194 = vld [vmem:[%s169 + $0x80] sm:$0xff]
      %v195 = vld [vmem:[%s169 + $0x88] sm:$0xff]
      %v196 = vld [vmem:[%s169 + $0x90] sm:$0xff]
      %v197 = vld [vmem:[%s169 + $0x98] sm:$0xff]
      %v198 = vld [vmem:[%s169 + $0xa0] sm:$0xff]
      %v199 = vld [vmem:[%s169 + $0xa8] sm:$0xff]
      %v200 = vld [vmem:[%s169 + $0xb0] sm:$0xff]
      %v201 = vld [vmem:[%s169 + $0xb8] sm:$0xff]
      %v202 = vld [vmem:[%s169 + $0xc0] sm:$0xff]
      %v203 = vld [vmem:[%s169 + $0xc8] sm:$0xff]
      %v204 = vld [vmem:[%s169 + $0xd0] sm:$0xff]
      %v205 = vld [vmem:[%s169 + $0xd8] sm:$0xff]
      %v206 = vld [vmem:[%s169 + $0xe0] sm:$0xff]
      %v207 = vld [vmem:[%s169 + $0xe8] sm:$0xff]
      %v208 = vld [vmem:[%s169 + $0xf0] sm:$0xff]
      %v209 = vld [vmem:[%s169 + $0xf8] sm:$0xff]
      %v210 = vld [vmem:[%s169 + $0x100] sm:$0xff]
      %v211 = vld [vmem:[%s169 + $0x108] sm:$0xff]
      %v212 = vld [vmem:[%s169 + $0x110] sm:$0xff]
      %v213 = vld [vmem:[%s169 + $0x118] sm:$0xff]
      %v214 = vld [vmem:[%s169 + $0x120] sm:$0xff]
      %v215 = vld [vmem:[%s169 + $0x128] sm:$0xff]
      %v216 = vld [vmem:[%s169 + $0x130] sm:$0xff]
      %v217 = vld [vmem:[%s169 + $0x138] sm:$0xff]
      %v218 = vld [vmem:[%s169 + $0x140] sm:$0xff]
      %v219 = vld [vmem:[%s169 + $0x148] sm:$0xff]
      %v220 = vld [vmem:[%s169 + $0x150] sm:$0xff]
      %v221 = vld [vmem:[%s169 + $0x158] sm:$0xff]
      %v222 = vld [vmem:[%s169 + $0x160] sm:$0xff]
      %v223 = vld [vmem:[%s169 + $0x168] sm:$0xff]
      %v224 = vld [vmem:[%s169 + $0x170] sm:$0xff]
      %v225 = vld [vmem:[%s169 + $0x178] sm:$0xff]
      %v226 = vld [vmem:[%s169 + $0x180] sm:$0xff]
      %v227 = vld [vmem:[%s169 + $0x188] sm:$0xff]
      %v228 = vld [vmem:[%s169 + $0x190] sm:$0xff]
      %v229 = vld [vmem:[%s169 + $0x198] sm:$0xff]
      %v230 = vld [vmem:[%s169 + $0x1a0] sm:$0xff]
      %v231 = vld [vmem:[%s169 + $0x1a8] sm:$0xff]
      %v232 = vld [vmem:[%s169 + $0x1b0] sm:$0xff]
      %v233 = vld [vmem:[%s169 + $0x1b8] sm:$0xff]
      %v234 = vld [vmem:[%s169 + $0x1c0] sm:$0xff]
      %v235 = vld [vmem:[%s169 + $0x1c8] sm:$0xff]
      %v236 = vld [vmem:[%s169 + $0x1d0] sm:$0xff]
      %v237 = vld [vmem:[%s169 + $0x1d8] sm:$0xff]
      %v238 = vld [vmem:[%s169 + $0x1e0] sm:$0xff]
      %v239 = vld [vmem:[%s169 + $0x1e8] sm:$0xff]
      %v240 = vld [vmem:[%s169 + $0x1f0] sm:$0xff]
      %v241 = vld [vmem:[%s169 + $0x1f8] sm:$0xff]
      %v242 = vld [vmem:[%s1] sm:$0xf]
      %v243 = vld [vmem:[%s1 + $0x4] sm:$0xf]
      %v244 = vld [vmem:[%s1 + $0x8] sm:$0xf]
      %v245 = vld [vmem:[%s1 + $0xc] sm:$0xf]
      %v246 = vld [vmem:[%s1 + $0x10] sm:$0xf]
      %v247 = vld [vmem:[%s1 + $0x14] sm:$0xf]
      %v248 = vld [vmem:[%s1 + $0x18] sm:$0xf]
      %v249 = vld [vmem:[%s1 + $0x1c] sm:$0xf]
      %v250 = vld [vmem:[%s1 + $0x20] sm:$0xf]
      %v251 = vld [vmem:[%s1 + $0x24] sm:$0xf]
      %v252 = vld [vmem:[%s1 + $0x28] sm:$0xf]
      %v253 = vld [vmem:[%s1 + $0x2c] sm:$0xf]
      %v254 = vld [vmem:[%s1 + $0x30] sm:$0xf]
      %v255 = vld [vmem:[%s1 + $0x34] sm:$0xf]
      %v256 = vld [vmem:[%s1 + $0x38] sm:$0xf]
      %v257 = vld [vmem:[%s1 + $0x3c] sm:$0xf]
      %v258 = vld [vmem:[%s1 + $0x40] sm:$0xf]
      %v259 = vld [vmem:[%s1 + $0x44] sm:$0xf]
      %v260 = vld [vmem:[%s2] sm:$0x1]
      %v262 = vlaneseq
      %v263 = vshrl.u32 %v262, 7
      %v264 = vsub.s32 0, %v263
      %v265 = vrot.slane %v260, %v264
      %v331 = vunpack.c.l.b16 %v178
      %v332 = vunpack.c.h.b16 %v178
      %v333 = vunpack.c.l.b16 %v179
      %v334 = vunpack.c.h.b16 %v179
      %v335 = vunpack.c.l.b16 %v180
      %v336 = vunpack.c.h.b16 %v180
      %v337 = vunpack.c.l.b16 %v181
      %v338 = vunpack.c.h.b16 %v181
      %v339 = vunpack.c.l.b16 %v182
      %v340 = vunpack.c.h.b16 %v182
      %v341 = vunpack.c.l.b16 %v183
      %v342 = vunpack.c.h.b16 %v183
      %v343 = vunpack.c.l.b16 %v184
      %v344 = vunpack.c.h.b16 %v184
      %v345 = vunpack.c.l.b16 %v185
      %v346 = vunpack.c.h.b16 %v185
      %v347 = vunpack.c.l.b16 %v186
      %v348 = vunpack.c.h.b16 %v186
      %v349 = vunpack.c.l.b16 %v187
      %v350 = vunpack.c.h.b16 %v187
      %v351 = vunpack.c.l.b16 %v188
      %v352 = vunpack.c.h.b16 %v188
      %v353 = vunpack.c.l.b16 %v189
      %v354 = vunpack.c.h.b16 %v189
      %v355 = vunpack.c.l.b16 %v190
      %v356 = vunpack.c.h.b16 %v190
      %v357 = vunpack.c.l.b16 %v191
      %v358 = vunpack.c.h.b16 %v191
      %v359 = vunpack.c.l.b16 %v192
      %v360 = vunpack.c.h.b16 %v192
      %v361 = vunpack.c.l.b16 %v193
      %v362 = vunpack.c.h.b16 %v193
      %v363 = vunpack.c.l.b16 %v194
      %v364 = vunpack.c.h.b16 %v194
      %v365 = vunpack.c.l.b16 %v195
      %v366 = vunpack.c.h.b16 %v195
      %v367 = vunpack.c.l.b16 %v196
      %v368 = vunpack.c.h.b16 %v196
      %v369 = vunpack.c.l.b16 %v197
      %v370 = vunpack.c.h.b16 %v197
      %v371 = vunpack.c.l.b16 %v198
      %v372 = vunpack.c.h.b16 %v198
      %v373 = vunpack.c.l.b16 %v199
      %v374 = vunpack.c.h.b16 %v199
      %v375 = vunpack.c.l.b16 %v200
      %v376 = vunpack.c.h.b16 %v200
      %v377 = vunpack.c.l.b16 %v201
      %v378 = vunpack.c.h.b16 %v201
      %v379 = vunpack.c.l.b16 %v202
      %v380 = vunpack.c.h.b16 %v202
      %v381 = vunpack.c.l.b16 %v203
      %v382 = vunpack.c.h.b16 %v203
      %v383 = vunpack.c.l.b16 %v204
      %v384 = vunpack.c.h.b16 %v204
      %v385 = vunpack.c.l.b16 %v205
      %v386 = vunpack.c.h.b16 %v205
      %v387 = vunpack.c.l.b16 %v206
      %v388 = vunpack.c.h.b16 %v206
      %v389 = vunpack.c.l.b16 %v207
      %v390 = vunpack.c.h.b16 %v207
      %v391 = vunpack.c.l.b16 %v208
      %v392 = vunpack.c.h.b16 %v208
      %v393 = vunpack.c.l.b16 %v209
      %v394 = vunpack.c.h.b16 %v209
      %v395 = vunpack.c.l.b16 %v210
      %v396 = vunpack.c.h.b16 %v210
      %v397 = vunpack.c.l.b16 %v211
      %v398 = vunpack.c.h.b16 %v211
      %v399 = vunpack.c.l.b16 %v212
      %v400 = vunpack.c.h.b16 %v212
      %v401 = vunpack.c.l.b16 %v213
      %v402 = vunpack.c.h.b16 %v213
      %v403 = vunpack.c.l.b16 %v214
      %v404 = vunpack.c.h.b16 %v214
      %v405 = vunpack.c.l.b16 %v215
      %v406 = vunpack.c.h.b16 %v215
      %v407 = vunpack.c.l.b16 %v216
      %v408 = vunpack.c.h.b16 %v216
      %v409 = vunpack.c.l.b16 %v217
      %v410 = vunpack.c.h.b16 %v217
      %v411 = vunpack.c.l.b16 %v218
      %v412 = vunpack.c.h.b16 %v218
      %v413 = vunpack.c.l.b16 %v219
      %v414 = vunpack.c.h.b16 %v219
      %v415 = vunpack.c.l.b16 %v220
      %v416 = vunpack.c.h.b16 %v220
      %v417 = vunpack.c.l.b16 %v221
      %v418 = vunpack.c.h.b16 %v221
      %v419 = vunpack.c.l.b16 %v222
      %v420 = vunpack.c.h.b16 %v222
      %v421 = vunpack.c.l.b16 %v223
      %v422 = vunpack.c.h.b16 %v223
      %v423 = vunpack.c.l.b16 %v224
      %v424 = vunpack.c.h.b16 %v224
      %v425 = vunpack.c.l.b16 %v225
      %v426 = vunpack.c.h.b16 %v225
      %v427 = vunpack.c.l.b16 %v226
      %v428 = vunpack.c.h.b16 %v226
      %v429 = vunpack.c.l.b16 %v227
      %v430 = vunpack.c.h.b16 %v227
      %v431 = vunpack.c.l.b16 %v228
      %v432 = vunpack.c.h.b16 %v228
      %v433 = vunpack.c.l.b16 %v229
      %v434 = vunpack.c.h.b16 %v229
      %v435 = vunpack.c.l.b16 %v230
      %v436 = vunpack.c.h.b16 %v230
      %v437 = vunpack.c.l.b16 %v231
      %v438 = vunpack.c.h.b16 %v231
      %v439 = vunpack.c.l.b16 %v232
      %v440 = vunpack.c.h.b16 %v232
      %v441 = vunpack.c.l.b16 %v233
      %v442 = vunpack.c.h.b16 %v233
      %v443 = vunpack.c.l.b16 %v234
      %v444 = vunpack.c.h.b16 %v234
      %v445 = vunpack.c.l.b16 %v235
      %v446 = vunpack.c.h.b16 %v235
      %v447 = vunpack.c.l.b16 %v236
      %v448 = vunpack.c.h.b16 %v236
      %v449 = vunpack.c.l.b16 %v237
      %v450 = vunpack.c.h.b16 %v237
      %v451 = vunpack.c.l.b16 %v238
      %v452 = vunpack.c.h.b16 %v238
      %v453 = vunpack.c.l.b16 %v239
      %v454 = vunpack.c.h.b16 %v239
      %v455 = vunpack.c.l.b16 %v240
      %v456 = vunpack.c.h.b16 %v240
      %v457 = vunpack.c.l.b16 %v241
      %v458 = vunpack.c.h.b16 %v241
      %v459 = vpack.c.b16 %v333, %v331
      %v460 = vpack.c.b16 %v334, %v332
      %v461 = vpack.c.b16 %v337, %v335
      %v462 = vpack.c.b16 %v338, %v336
      %v463 = vpack.c.b16 %v341, %v339
      %v464 = vpack.c.b16 %v342, %v340
      %v465 = vpack.c.b16 %v345, %v343
      %v466 = vpack.c.b16 %v346, %v344
      %v467 = vpack.c.b16 %v349, %v347
      %v468 = vpack.c.b16 %v350, %v348
      %v469 = vpack.c.b16 %v353, %v351
      %v470 = vpack.c.b16 %v354, %v352
      %v471 = vpack.c.b16 %v357, %v355
      %v472 = vpack.c.b16 %v358, %v356
      %v473 = vpack.c.b16 %v361, %v359
      %v474 = vpack.c.b16 %v362, %v360
      %v475 = vpack.c.b16 %v365, %v363
      %v476 = vpack.c.b16 %v366, %v364
      %v477 = vpack.c.b16 %v369, %v367
      %v478 = vpack.c.b16 %v370, %v368
      %v479 = vpack.c.b16 %v373, %v371
      %v480 = vpack.c.b16 %v374, %v372
      %v481 = vpack.c.b16 %v377, %v375
      %v482 = vpack.c.b16 %v378, %v376
      %v483 = vpack.c.b16 %v381, %v379
      %v484 = vpack.c.b16 %v382, %v380
      %v485 = vpack.c.b16 %v385, %v383
      %v486 = vpack.c.b16 %v386, %v384
      %v487 = vpack.c.b16 %v389, %v387
      %v488 = vpack.c.b16 %v390, %v388
      %v489 = vpack.c.b16 %v393, %v391
      %v490 = vpack.c.b16 %v394, %v392
      %v491 = vpack.c.b16 %v397, %v395
      %v492 = vpack.c.b16 %v398, %v396
      %v493 = vpack.c.b16 %v401, %v399
      %v494 = vpack.c.b16 %v402, %v400
      %v495 = vpack.c.b16 %v405, %v403
      %v496 = vpack.c.b16 %v406, %v404
      %v497 = vpack.c.b16 %v409, %v407
      %v498 = vpack.c.b16 %v410, %v408
      %v499 = vpack.c.b16 %v413, %v411
      %v500 = vpack.c.b16 %v414, %v412
      %v501 = vpack.c.b16 %v417, %v415
      %v502 = vpack.c.b16 %v418, %v416
      %v503 = vpack.c.b16 %v421, %v419
      %v504 = vpack.c.b16 %v422, %v420
      %v505 = vpack.c.b16 %v425, %v423
      %v506 = vpack.c.b16 %v426, %v424
      %v507 = vpack.c.b16 %v429, %v427
      %v508 = vpack.c.b16 %v430, %v428
      %v509 = vpack.c.b16 %v433, %v431
      %v510 = vpack.c.b16 %v434, %v432
      %v511 = vpack.c.b16 %v437, %v435
      %v512 = vpack.c.b16 %v438, %v436
      %v513 = vpack.c.b16 %v441, %v439
      %v514 = vpack.c.b16 %v442, %v440
      %v515 = vpack.c.b16 %v445, %v443
      %v516 = vpack.c.b16 %v446, %v444
      %v517 = vpack.c.b16 %v449, %v447
      %v518 = vpack.c.b16 %v450, %v448
      %v519 = vpack.c.b16 %v453, %v451
      %v520 = vpack.c.b16 %v454, %v452
      %v521 = vpack.c.b16 %v457, %v455
      %v522 = vpack.c.b16 %v458, %v456
      %v573 = vunpack.c.l.b16 %v242
      %v574 = vunpack.c.l.b16 %v243
      %v575 = vunpack.c.l.b16 %v244
      %v576 = vunpack.c.l.b16 %v245
      %v577 = vunpack.c.l.b16 %v246
      %v578 = vunpack.c.l.b16 %v247
      %v579 = vunpack.c.l.b16 %v248
      %v580 = vunpack.c.l.b16 %v249
      %v581 = vunpack.c.l.b16 %v250
      %v582 = vunpack.c.l.b16 %v251
      %v583 = vunpack.c.l.b16 %v252
      %v584 = vunpack.c.l.b16 %v253
      %v585 = vunpack.c.l.b16 %v254
      %v586 = vunpack.c.l.b16 %v255
      %v587 = vunpack.c.l.b16 %v256
      %v588 = vunpack.c.l.b16 %v257
      %v589 = vunpack.c.l.b16 %v258
      %v590 = vunpack.c.l.b16 %v259
      %v591 = vpack.c.b16 %v574, %v573
      %v592 = vpack.c.b16 %v576, %v575
      %v593 = vpack.c.b16 %v578, %v577
      %v594 = vpack.c.b16 %v580, %v579
      %v595 = vpack.c.b16 %v582, %v581
      %v596 = vpack.c.b16 %v584, %v583
      %v597 = vpack.c.b16 %v586, %v585
      %v598 = vpack.c.b16 %v588, %v587
      %v599 = vpack.c.b16 %v590, %v589
      %vm609 = vcmask 130048
      %v611 = vsel %vm609, %v460, 0
      %v614 = vsel %vm609, %v462, 0
      %v617 = vsel %vm609, %v464, 0
      %v620 = vsel %vm609, %v466, 0
      %v623 = vsel %vm609, %v468, 0
      %v626 = vsel %vm609, %v470, 0
      %v629 = vsel %vm609, %v472, 0
      %v632 = vsel %vm609, %v474, 0
      %v635 = vsel %vm609, %v476, 0
      %v638 = vsel %vm609, %v478, 0
      %v641 = vsel %vm609, %v480, 0
      %v644 = vsel %vm609, %v482, 0
      %v647 = vsel %vm609, %v484, 0
      %v650 = vsel %vm609, %v486, 0
      %v653 = vsel %vm609, %v488, 0
      %v656 = vsel %vm609, %v490, 0
      %v659 = vsel %vm609, %v492, 0
      %v662 = vsel %vm609, %v494, 0
      %v665 = vsel %vm609, %v496, 0
      %v668 = vsel %vm609, %v498, 0
      %v671 = vsel %vm609, %v500, 0
      %v674 = vsel %vm609, %v502, 0
      %v677 = vsel %vm609, %v504, 0
      %v680 = vsel %vm609, %v506, 0
      %v683 = vsel %vm609, %v508, 0
      %v686 = vsel %vm609, %v510, 0
      %v689 = vsel %vm609, %v512, 0
      %v692 = vsel %vm609, %v514, 0
      %v695 = vsel %vm609, %v516, 0
      %v698 = vsel %vm609, %v518, 0
      %v701 = vsel %vm609, %v520, 0
      %v704 = vsel %vm609, %v522, 0
      %706 = vmatprep.subr.bf16.mxu0 0
      %707 = vmatpush1.bf16.msra.mxu0 %v598
      %708 = vmatprep.subr.bf16.mxu0 0
      %709 = vmatpush1.bf16.msra.mxu0 %v597
      %710 = vmatprep.subr.bf16.mxu0 0
      %711 = vmatpush1.bf16.msra.mxu0 %v596
      %712 = vmatprep.subr.bf16.mxu0 0
      %713 = vmatpush1.bf16.msra.mxu0 %v595
      %714 = vmatprep.subr.bf16.mxu0 0
      %715 = vmatpush1.bf16.msra.mxu0 %v594
      %716 = vmatprep.subr.bf16.mxu0 0
      %717 = vmatpush1.bf16.msra.mxu0 %v593
      %718 = vmatprep.subr.bf16.mxu0 0
      %719 = vmatpush1.bf16.msra.mxu0 %v592
      %720 = vmatprep.subr.bf16.mxu0 0
      %721 = vmatpush1.bf16.msra.mxu0 %v591
      %722 = vmatprep.subr.bf16.mxu0 0
      %723 = vmatpush2.bf16.msra.mxu0 0
      %724 = vmatprep.subr.bf16.mxu0 0
      %725 = vmatpush2.bf16.msra.mxu0 0
      %726 = vmatprep.subr.bf16.mxu0 0
      %727 = vmatpush2.bf16.msra.mxu0 0
      %728 = vmatprep.subr.bf16.mxu0 0
      %729 = vmatpush2.bf16.msra.mxu0 0
      %730 = vmatprep.subr.bf16.mxu0 0
      %731 = vmatpush2.bf16.msra.mxu0 0
      %732 = vmatprep.subr.bf16.mxu0 0
      %733 = vmatpush2.bf16.msra.mxu0 0
      %734 = vmatprep.subr.bf16.mxu0 0
      %735 = vmatpush2.bf16.msra.mxu0 0
      %736 = vmatprep.subr.bf16.mxu0 0
      %737 = vmatpush2.bf16.msra.mxu0 %v599
      %738 = vmatprep.mubr.bf16.mxu0 %v611
      %739 = vmatmul.mubr.bf16.gmra.mxu0 %v459
      %v740 = vpop.f32.mrf.mxu0
      %v741 = vadd.f32 %v265, %v740
      %v742 = vpop.f32.mrf.mxu0
      %v743 = vpop.f32.mrf.mxu0
      %v744 = vadd.f32 %v265, %v743
      %v745 = vpop.f32.mrf.mxu0
      %746 = vmatprep.mubr.bf16.mxu0 %v614
      %747 = vmatmul.mubr.bf16.gmra.mxu0 %v461
      %v748 = vpop.f32.mrf.mxu0
      %v749 = vadd.f32 %v265, %v748
      %v750 = vpop.f32.mrf.mxu0
      %v751 = vpop.f32.mrf.mxu0
      %v752 = vadd.f32 %v265, %v751
      %v753 = vpop.f32.mrf.mxu0
      %754 = vmatprep.mubr.bf16.mxu0 %v617
      %755 = vmatmul.mubr.bf16.gmra.mxu0 %v463
      %v756 = vpop.f32.mrf.mxu0
      %v757 = vadd.f32 %v265, %v756
      %v758 = vpop.f32.mrf.mxu0
      %v759 = vpop.f32.mrf.mxu0
      %v760 = vadd.f32 %v265, %v759
      %v761 = vpop.f32.mrf.mxu0
      %762 = vmatprep.mubr.bf16.mxu0 %v620
      %763 = vmatmul.mubr.bf16.gmra.mxu0 %v465
      %v764 = vpop.f32.mrf.mxu0
      %v765 = vadd.f32 %v265, %v764
      %v766 = vpop.f32.mrf.mxu0
      %v767 = vpop.f32.mrf.mxu0
      %v768 = vadd.f32 %v265, %v767
      %v769 = vpop.f32.mrf.mxu0
      %770 = vmatprep.mubr.bf16.mxu0 %v623
      %771 = vmatmul.mubr.bf16.gmra.mxu0 %v467
      %v772 = vpop.f32.mrf.mxu0
      %v773 = vadd.f32 %v265, %v772
      %v774 = vpop.f32.mrf.mxu0
      %v775 = vpop.f32.mrf.mxu0
      %v776 = vadd.f32 %v265, %v775
      %v777 = vpop.f32.mrf.mxu0
      %778 = vmatprep.mubr.bf16.mxu0 %v626
      %779 = vmatmul.mubr.bf16.gmra.mxu0 %v469
      %v780 = vpop.f32.mrf.mxu0
      %v781 = vadd.f32 %v265, %v780
      %v782 = vpop.f32.mrf.mxu0
      %v783 = vpop.f32.mrf.mxu0
      %v784 = vadd.f32 %v265, %v783
      %v785 = vpop.f32.mrf.mxu0
      %786 = vmatprep.mubr.bf16.mxu0 %v629
      %787 = vmatmul.mubr.bf16.gmra.mxu0 %v471
      %v788 = vpop.f32.mrf.mxu0
      %v789 = vadd.f32 %v265, %v788
      %v790 = vpop.f32.mrf.mxu0
      %v791 = vpop.f32.mrf.mxu0
      %v792 = vadd.f32 %v265, %v791
      %v793 = vpop.f32.mrf.mxu0
      %794 = vmatprep.mubr.bf16.mxu0 %v632
      %795 = vmatmul.mubr.bf16.gmra.mxu0 %v473
      %v796 = vpop.f32.mrf.mxu0
      %v797 = vadd.f32 %v265, %v796
      %v798 = vpop.f32.mrf.mxu0
      %v799 = vpop.f32.mrf.mxu0
      %v800 = vadd.f32 %v265, %v799
      %v801 = vpop.f32.mrf.mxu0
      %802 = vmatprep.mubr.bf16.mxu0 %v635
      %803 = vmatmul.mubr.bf16.gmra.mxu0 %v475
      %v804 = vpop.f32.mrf.mxu0
      %v805 = vadd.f32 %v265, %v804
      %v806 = vpop.f32.mrf.mxu0
      %v807 = vpop.f32.mrf.mxu0
      %v808 = vadd.f32 %v265, %v807
      %v809 = vpop.f32.mrf.mxu0
      %810 = vmatprep.mubr.bf16.mxu0 %v638
      %811 = vmatmul.mubr.bf16.gmra.mxu0 %v477
      %v812 = vpop.f32.mrf.mxu0
      %v813 = vadd.f32 %v265, %v812
      %v814 = vpop.f32.mrf.mxu0
      %v815 = vpop.f32.mrf.mxu0
      %v816 = vadd.f32 %v265, %v815
      %v817 = vpop.f32.mrf.mxu0
      %818 = vmatprep.mubr.bf16.mxu0 %v641
      %819 = vmatmul.mubr.bf16.gmra.mxu0 %v479
      %v820 = vpop.f32.mrf.mxu0
      %v821 = vadd.f32 %v265, %v820
      %v822 = vpop.f32.mrf.mxu0
      %v823 = vpop.f32.mrf.mxu0
      %v824 = vadd.f32 %v265, %v823
      %v825 = vpop.f32.mrf.mxu0
      %826 = vmatprep.mubr.bf16.mxu0 %v644
      %827 = vmatmul.mubr.bf16.gmra.mxu0 %v481
      %v828 = vpop.f32.mrf.mxu0
      %v829 = vadd.f32 %v265, %v828
      %v830 = vpop.f32.mrf.mxu0
      %v831 = vpop.f32.mrf.mxu0
      %v832 = vadd.f32 %v265, %v831
      %v833 = vpop.f32.mrf.mxu0
      %834 = vmatprep.mubr.bf16.mxu0 %v647
      %835 = vmatmul.mubr.bf16.gmra.mxu0 %v483
      %v836 = vpop.f32.mrf.mxu0
      %v837 = vadd.f32 %v265, %v836
      %v838 = vpop.f32.mrf.mxu0
      %v839 = vpop.f32.mrf.mxu0
      %v840 = vadd.f32 %v265, %v839
      %v841 = vpop.f32.mrf.mxu0
      %842 = vmatprep.mubr.bf16.mxu0 %v650
      %843 = vmatmul.mubr.bf16.gmra.mxu0 %v485
      %v844 = vpop.f32.mrf.mxu0
      %v845 = vadd.f32 %v265, %v844
      %v846 = vpop.f32.mrf.mxu0
      %v847 = vpop.f32.mrf.mxu0
      %v848 = vadd.f32 %v265, %v847
      %v849 = vpop.f32.mrf.mxu0
      %850 = vmatprep.mubr.bf16.mxu0 %v653
      %851 = vmatmul.mubr.bf16.gmra.mxu0 %v487
      %v852 = vpop.f32.mrf.mxu0
      %v853 = vadd.f32 %v265, %v852
      %v854 = vpop.f32.mrf.mxu0
      %v855 = vpop.f32.mrf.mxu0
      %v856 = vadd.f32 %v265, %v855
      %v857 = vpop.f32.mrf.mxu0
      %858 = vmatprep.mubr.bf16.mxu0 %v656
      %859 = vmatmul.mubr.bf16.gmra.mxu0 %v489
      %v860 = vpop.f32.mrf.mxu0
      %v861 = vadd.f32 %v265, %v860
      %v862 = vpop.f32.mrf.mxu0
      %v863 = vpop.f32.mrf.mxu0
      %v864 = vadd.f32 %v265, %v863
      %v865 = vpop.f32.mrf.mxu0
      %866 = vmatprep.mubr.bf16.mxu0 %v659
      %867 = vmatmul.mubr.bf16.gmra.mxu0 %v491
      %v868 = vpop.f32.mrf.mxu0
      %v869 = vadd.f32 %v265, %v868
      %v870 = vpop.f32.mrf.mxu0
      %v871 = vpop.f32.mrf.mxu0
      %v872 = vadd.f32 %v265, %v871
      %v873 = vpop.f32.mrf.mxu0
      %874 = vmatprep.mubr.bf16.mxu0 %v662
      %875 = vmatmul.mubr.bf16.gmra.mxu0 %v493
      %v876 = vpop.f32.mrf.mxu0
      %v877 = vadd.f32 %v265, %v876
      %v878 = vpop.f32.mrf.mxu0
      %v879 = vpop.f32.mrf.mxu0
      %v880 = vadd.f32 %v265, %v879
      %v881 = vpop.f32.mrf.mxu0
      %882 = vmatprep.mubr.bf16.mxu0 %v665
      %883 = vmatmul.mubr.bf16.gmra.mxu0 %v495
      %v884 = vpop.f32.mrf.mxu0
      %v885 = vadd.f32 %v265, %v884
      %v886 = vpop.f32.mrf.mxu0
      %v887 = vpop.f32.mrf.mxu0
      %v888 = vadd.f32 %v265, %v887
      %v889 = vpop.f32.mrf.mxu0
      %890 = vmatprep.mubr.bf16.mxu0 %v668
      %891 = vmatmul.mubr.bf16.gmra.mxu0 %v497
      %v892 = vpop.f32.mrf.mxu0
      %v893 = vadd.f32 %v265, %v892
      %v894 = vpop.f32.mrf.mxu0
      %v895 = vpop.f32.mrf.mxu0
      %v896 = vadd.f32 %v265, %v895
      %v897 = vpop.f32.mrf.mxu0
      %898 = vmatprep.mubr.bf16.mxu0 %v671
      %899 = vmatmul.mubr.bf16.gmra.mxu0 %v499
      %v900 = vpop.f32.mrf.mxu0
      %v901 = vadd.f32 %v265, %v900
      %v902 = vpop.f32.mrf.mxu0
      %v903 = vpop.f32.mrf.mxu0
      %v904 = vadd.f32 %v265, %v903
      %v905 = vpop.f32.mrf.mxu0
      %906 = vmatprep.mubr.bf16.mxu0 %v674
      %907 = vmatmul.mubr.bf16.gmra.mxu0 %v501
      %v908 = vpop.f32.mrf.mxu0
      %v909 = vadd.f32 %v265, %v908
      %v910 = vpop.f32.mrf.mxu0
      %v911 = vpop.f32.mrf.mxu0
      %v912 = vadd.f32 %v265, %v911
      %v913 = vpop.f32.mrf.mxu0
      %914 = vmatprep.mubr.bf16.mxu0 %v677
      %915 = vmatmul.mubr.bf16.gmra.mxu0 %v503
      %v916 = vpop.f32.mrf.mxu0
      %v917 = vadd.f32 %v265, %v916
      %v918 = vpop.f32.mrf.mxu0
      %v919 = vpop.f32.mrf.mxu0
      %v920 = vadd.f32 %v265, %v919
      %v921 = vpop.f32.mrf.mxu0
      %922 = vmatprep.mubr.bf16.mxu0 %v680
      %923 = vmatmul.mubr.bf16.gmra.mxu0 %v505
      %v924 = vpop.f32.mrf.mxu0
      %v925 = vadd.f32 %v265, %v924
      %v926 = vpop.f32.mrf.mxu0
      %v927 = vpop.f32.mrf.mxu0
      %v928 = vadd.f32 %v265, %v927
      %v929 = vpop.f32.mrf.mxu0
      %930 = vmatprep.mubr.bf16.mxu0 %v683
      %931 = vmatmul.mubr.bf16.gmra.mxu0 %v507
      %v932 = vpop.f32.mrf.mxu0
      %v933 = vadd.f32 %v265, %v932
      %v934 = vpop.f32.mrf.mxu0
      %v935 = vpop.f32.mrf.mxu0
      %v936 = vadd.f32 %v265, %v935
      %v937 = vpop.f32.mrf.mxu0
      %938 = vmatprep.mubr.bf16.mxu0 %v686
      %939 = vmatmul.mubr.bf16.gmra.mxu0 %v509
      %v940 = vpop.f32.mrf.mxu0
      %v941 = vadd.f32 %v265, %v940
      %v942 = vpop.f32.mrf.mxu0
      %v943 = vpop.f32.mrf.mxu0
      %v944 = vadd.f32 %v265, %v943
      %v945 = vpop.f32.mrf.mxu0
      %946 = vmatprep.mubr.bf16.mxu0 %v689
      %947 = vmatmul.mubr.bf16.gmra.mxu0 %v511
      %v948 = vpop.f32.mrf.mxu0
      %v949 = vadd.f32 %v265, %v948
      %v950 = vpop.f32.mrf.mxu0
      %v951 = vpop.f32.mrf.mxu0
      %v952 = vadd.f32 %v265, %v951
      %v953 = vpop.f32.mrf.mxu0
      %954 = vmatprep.mubr.bf16.mxu0 %v692
      %955 = vmatmul.mubr.bf16.gmra.mxu0 %v513
      %v956 = vpop.f32.mrf.mxu0
      %v957 = vadd.f32 %v265, %v956
      %v958 = vpop.f32.mrf.mxu0
      %v959 = vpop.f32.mrf.mxu0
      %v960 = vadd.f32 %v265, %v959
      %v961 = vpop.f32.mrf.mxu0
      %962 = vmatprep.mubr.bf16.mxu0 %v695
      %963 = vmatmul.mubr.bf16.gmra.mxu0 %v515
      %v964 = vpop.f32.mrf.mxu0
      %v965 = vadd.f32 %v265, %v964
      %v966 = vpop.f32.mrf.mxu0
      %v967 = vpop.f32.mrf.mxu0
      %v968 = vadd.f32 %v265, %v967
      %v969 = vpop.f32.mrf.mxu0
      %970 = vmatprep.mubr.bf16.mxu0 %v698
      %971 = vmatmul.mubr.bf16.gmra.mxu0 %v517
      %v972 = vpop.f32.mrf.mxu0
      %v973 = vadd.f32 %v265, %v972
      %v974 = vpop.f32.mrf.mxu0
      %v975 = vpop.f32.mrf.mxu0
      %v976 = vadd.f32 %v265, %v975
      %v977 = vpop.f32.mrf.mxu0
      %978 = vmatprep.mubr.bf16.mxu0 %v701
      %979 = vmatmul.mubr.bf16.gmra.mxu0 %v519
      %v980 = vpop.f32.mrf.mxu0
      %v981 = vadd.f32 %v265, %v980
      %v982 = vpop.f32.mrf.mxu0
      %v983 = vpop.f32.mrf.mxu0
      %v984 = vadd.f32 %v265, %v983
      %v985 = vpop.f32.mrf.mxu0
      %986 = vmatprep.mubr.bf16.mxu0 %v704
      %987 = vmatmul.mubr.bf16.gmra.mxu0 %v521
      %v988 = vpop.f32.mrf.mxu0
      %v989 = vadd.f32 %v265, %v988
      %v990 = vpop.f32.mrf.mxu0
      %v991 = vpop.f32.mrf.mxu0
      %v992 = vadd.f32 %v265, %v991
      %v993 = vpop.f32.mrf.mxu0
      %994 = vdwg.mxu0
      %v995 = vmax.f32 %v741, 0.0
      %v996 = vmax.f32 %v744, 0.0
      %v997 = vmax.f32 %v749, 0.0
      %v998 = vmax.f32 %v752, 0.0
      %v999 = vmax.f32 %v757, 0.0
      %v1000 = vmax.f32 %v760, 0.0
      %v1001 = vmax.f32 %v765, 0.0
      %v1002 = vmax.f32 %v768, 0.0
      %v1003 = vmax.f32 %v773, 0.0
      %v1004 = vmax.f32 %v776, 0.0
      %v1005 = vmax.f32 %v781, 0.0
      %v1006 = vmax.f32 %v784, 0.0
      %v1007 = vmax.f32 %v789, 0.0
      %v1008 = vmax.f32 %v792, 0.0
      %v1009 = vmax.f32 %v797, 0.0
      %v1010 = vmax.f32 %v800, 0.0
      %v1011 = vmax.f32 %v805, 0.0
      %v1012 = vmax.f32 %v808, 0.0
      %v1013 = vmax.f32 %v813, 0.0
      %v1014 = vmax.f32 %v816, 0.0
      %v1015 = vmax.f32 %v821, 0.0
      %v1016 = vmax.f32 %v824, 0.0
      %v1017 = vmax.f32 %v829, 0.0
      %v1018 = vmax.f32 %v832, 0.0
      %v1019 = vmax.f32 %v837, 0.0
      %v1020 = vmax.f32 %v840, 0.0
      %v1021 = vmax.f32 %v845, 0.0
      %v1022 = vmax.f32 %v848, 0.0
      %v1023 = vmax.f32 %v853, 0.0
      %v1024 = vmax.f32 %v856, 0.0
      %v1025 = vmax.f32 %v861, 0.0
      %v1026 = vmax.f32 %v864, 0.0
      %v1027 = vmax.f32 %v869, 0.0
      %v1028 = vmax.f32 %v872, 0.0
      %v1029 = vmax.f32 %v877, 0.0
      %v1030 = vmax.f32 %v880, 0.0
      %v1031 = vmax.f32 %v885, 0.0
      %v1032 = vmax.f32 %v888, 0.0
      %v1033 = vmax.f32 %v893, 0.0
      %v1034 = vmax.f32 %v896, 0.0
      %v1035 = vmax.f32 %v901, 0.0
      %v1036 = vmax.f32 %v904, 0.0
      %v1037 = vmax.f32 %v909, 0.0
      %v1038 = vmax.f32 %v912, 0.0
      %v1039 = vmax.f32 %v917, 0.0
      %v1040 = vmax.f32 %v920, 0.0
      %v1041 = vmax.f32 %v925, 0.0
      %v1042 = vmax.f32 %v928, 0.0
      %v1043 = vmax.f32 %v933, 0.0
      %v1044 = vmax.f32 %v936, 0.0
      %v1045 = vmax.f32 %v941, 0.0
      %v1046 = vmax.f32 %v944, 0.0
      %v1047 = vmax.f32 %v949, 0.0
      %v1048 = vmax.f32 %v952, 0.0
      %v1049 = vmax.f32 %v957, 0.0
      %v1050 = vmax.f32 %v960, 0.0
      %v1051 = vmax.f32 %v965, 0.0
      %v1052 = vmax.f32 %v968, 0.0
      %v1053 = vmax.f32 %v973, 0.0
      %v1054 = vmax.f32 %v976, 0.0
      %v1055 = vmax.f32 %v981, 0.0
      %v1056 = vmax.f32 %v984, 0.0
      %v1057 = vmax.f32 %v989, 0.0
      %v1058 = vmax.f32 %v992, 0.0
      %vm1059 = vcmask 64512
      %1060 = vst.msk [vmem:[%s175] sm:$0xff] %vm1059, %v995
      %1061 = vst.msk [vmem:[%s175 + $0x8] sm:$0xff] %vm1059, %v996
      %1062 = vst.msk [vmem:[%s175 + $0x10] sm:$0xff] %vm1059, %v997
      %1063 = vst.msk [vmem:[%s175 + $0x18] sm:$0xff] %vm1059, %v998
      %1064 = vst.msk [vmem:[%s175 + $0x20] sm:$0xff] %vm1059, %v999
      %1065 = vst.msk [vmem:[%s175 + $0x28] sm:$0xff] %vm1059, %v1000
      %1066 = vst.msk [vmem:[%s175 + $0x30] sm:$0xff] %vm1059, %v1001
      %1067 = vst.msk [vmem:[%s175 + $0x38] sm:$0xff] %vm1059, %v1002
      %1068 = vst.msk [vmem:[%s175 + $0x40] sm:$0xff] %vm1059, %v1003
      %1069 = vst.msk [vmem:[%s175 + $0x48] sm:$0xff] %vm1059, %v1004
      %1070 = vst.msk [vmem:[%s175 + $0x50] sm:$0xff] %vm1059, %v1005
      %1071 = vst.msk [vmem:[%s175 + $0x58] sm:$0xff] %vm1059, %v1006
      %1072 = vst.msk [vmem:[%s175 + $0x60] sm:$0xff] %vm1059, %v1007
      %1073 = vst.msk [vmem:[%s175 + $0x68] sm:$0xff] %vm1059, %v1008
      %1074 = vst.msk [vmem:[%s175 + $0x70] sm:$0xff] %vm1059, %v1009
      %1075 = vst.msk [vmem:[%s175 + $0x78] sm:$0xff] %vm1059, %v1010
      %1076 = vst.msk [vmem:[%s175 + $0x80] sm:$0xff] %vm1059, %v1011
      %1077 = vst.msk [vmem:[%s175 + $0x88] sm:$0xff] %vm1059, %v1012
      %1078 = vst.msk [vmem:[%s175 + $0x90] sm:$0xff] %vm1059, %v1013
      %1079 = vst.msk [vmem:[%s175 + $0x98] sm:$0xff] %vm1059, %v1014
      %1080 = vst.msk [vmem:[%s175 + $0xa0] sm:$0xff] %vm1059, %v1015
      %1081 = vst.msk [vmem:[%s175 + $0xa8] sm:$0xff] %vm1059, %v1016
      %1082 = vst.msk [vmem:[%s175 + $0xb0] sm:$0xff] %vm1059, %v1017
      %1083 = vst.msk [vmem:[%s175 + $0xb8] sm:$0xff] %vm1059, %v1018
      %1084 = vst.msk [vmem:[%s175 + $0xc0] sm:$0xff] %vm1059, %v1019
      %1085 = vst.msk [vmem:[%s175 + $0xc8] sm:$0xff] %vm1059, %v1020
      %1086 = vst.msk [vmem:[%s175 + $0xd0] sm:$0xff] %vm1059, %v1021
      %1087 = vst.msk [vmem:[%s175 + $0xd8] sm:$0xff] %vm1059, %v1022
      %1088 = vst.msk [vmem:[%s175 + $0xe0] sm:$0xff] %vm1059, %v1023
      %1089 = vst.msk [vmem:[%s175 + $0xe8] sm:$0xff] %vm1059, %v1024
      %1090 = vst.msk [vmem:[%s175 + $0xf0] sm:$0xff] %vm1059, %v1025
      %1091 = vst.msk [vmem:[%s175 + $0xf8] sm:$0xff] %vm1059, %v1026
      %1092 = vst.msk [vmem:[%s175 + $0x100] sm:$0xff] %vm1059, %v1027
      %1093 = vst.msk [vmem:[%s175 + $0x108] sm:$0xff] %vm1059, %v1028
      %1094 = vst.msk [vmem:[%s175 + $0x110] sm:$0xff] %vm1059, %v1029
      %1095 = vst.msk [vmem:[%s175 + $0x118] sm:$0xff] %vm1059, %v1030
      %1096 = vst.msk [vmem:[%s175 + $0x120] sm:$0xff] %vm1059, %v1031
      %1097 = vst.msk [vmem:[%s175 + $0x128] sm:$0xff] %vm1059, %v1032
      %1098 = vst.msk [vmem:[%s175 + $0x130] sm:$0xff] %vm1059, %v1033
      %1099 = vst.msk [vmem:[%s175 + $0x138] sm:$0xff] %vm1059, %v1034
      %1100 = vst.msk [vmem:[%s175 + $0x140] sm:$0xff] %vm1059, %v1035
      %1101 = vst.msk [vmem:[%s175 + $0x148] sm:$0xff] %vm1059, %v1036
      %1102 = vst.msk [vmem:[%s175 + $0x150] sm:$0xff] %vm1059, %v1037
      %1103 = vst.msk [vmem:[%s175 + $0x158] sm:$0xff] %vm1059, %v1038
      %1104 = vst.msk [vmem:[%s175 + $0x160] sm:$0xff] %vm1059, %v1039
      %1105 = vst.msk [vmem:[%s175 + $0x168] sm:$0xff] %vm1059, %v1040
      %1106 = vst.msk [vmem:[%s175 + $0x170] sm:$0xff] %vm1059, %v1041
      %1107 = vst.msk [vmem:[%s175 + $0x178] sm:$0xff] %vm1059, %v1042
      %1108 = vst.msk [vmem:[%s175 + $0x180] sm:$0xff] %vm1059, %v1043
      %1109 = vst.msk [vmem:[%s175 + $0x188] sm:$0xff] %vm1059, %v1044
      %1110 = vst.msk [vmem:[%s175 + $0x190] sm:$0xff] %vm1059, %v1045
      %1111 = vst.msk [vmem:[%s175 + $0x198] sm:$0xff] %vm1059, %v1046
      %1112 = vst.msk [vmem:[%s175 + $0x1a0] sm:$0xff] %vm1059, %v1047
      %1113 = vst.msk [vmem:[%s175 + $0x1a8] sm:$0xff] %vm1059, %v1048
      %1114 = vst.msk [vmem:[%s175 + $0x1b0] sm:$0xff] %vm1059, %v1049
      %1115 = vst.msk [vmem:[%s175 + $0x1b8] sm:$0xff] %vm1059, %v1050
      %1116 = vst.msk [vmem:[%s175 + $0x1c0] sm:$0xff] %vm1059, %v1051
      %1117 = vst.msk [vmem:[%s175 + $0x1c8] sm:$0xff] %vm1059, %v1052
      %1118 = vst.msk [vmem:[%s175 + $0x1d0] sm:$0xff] %vm1059, %v1053
      %1119 = vst.msk [vmem:[%s175 + $0x1d8] sm:$0xff] %vm1059, %v1054
      %1120 = vst.msk [vmem:[%s175 + $0x1e0] sm:$0xff] %vm1059, %v1055
      %1121 = vst.msk [vmem:[%s175 + $0x1e8] sm:$0xff] %vm1059, %v1056
      %1122 = vst.msk [vmem:[%s175 + $0x1f0] sm:$0xff] %vm1059, %v1057
      %1123 = vst.msk [vmem:[%s175 + $0x1f8] sm:$0xff] %vm1059, %v1058
      %s1124 = smul.u32 64, %s14
      %p1125 = scmp.lt.s32.totalorder %s1124, 255
      %s1126 = scalar_select %p1125, %s1124, 255
      %s1127 = smul.addr %s1126, 8
      %s1128 = scalar_lea.vmem %s3, %s1127
      // Predicated region
      $region33: #{_lambda_.12} parent=31 // pred_check
        %p1129 = pneg %p100
      $region34: #{_lambda_.12} parent=31 // pred_check_branch
        %1131 = sbr.rel (%p1129) target = $region36
      $region35: #{_lambda_.12} parent=31 // pred_region
        %s1132 = smul.u32 64, %s14
      $region36: #{_lambda_.12} parent=31 // pred_fallthru
        _
    $region32: #{_lambda_.12} parent=5 // pred_fallthru
      _
    %p1133 = scmp.le.s32.totalorder 2, %s9
    // Predicated region
    $region37: #{_lambda_.12} parent=5 // pred_check
      %p1134 = pneg %p1133
    $region38: #{_lambda_.12} parent=5 // pred_check_branch
      %1136 = sbr.rel (%p1134) target = $region40
    $region39: #{_lambda_.12} parent=5 // pred_region
      %s1137 = ssub.s32 %s9, 2
      // Predicated region
      $region41: #{_lambda_.12} parent=39 // pred_check
        %p1138 = pneg %p106
      $region42: #{_lambda_.12} parent=39 // pred_check_branch
        %1140 = sbr.rel (%p1138) target = $region44
      $region43: #{_lambda_.12} parent=39 // pred_region
        %s1141 = smul.u32 64, %s15
        %p1142 = scmp.lt.s32.totalorder %s1141, 255
        %s1143 = scalar_select %p1142, %s1141, 255
        %s1144 = smul.addr %s1143, 8
        %s1145 = scalar_lea.vmem %s3, %s1144
      $region44: #{_lambda_.12} parent=39 // pred_fallthru
        _
    $region40: #{_lambda_.12} parent=5 // pred_fallthru
      _
  $region6: #{_lambda_.12} parent=0 // loop_footer
    %s13 = sadd.s32 1, %s9
  $region7: #{_lambda_.12} parent=0 // loop_footer_branch
    %8 = sbr.rel target = $region3
  $region8: #{_lambda_.12} parent=0 // loop_exit
    _

// kernel: _lambda_.13
$region0: #{_lambda_.13}
  #allocation0 [shape = 'u32[]', space=smem, size = 0x4, offset = 0x4, fixed_abs, tag = 'smem constant byte address 0x4 - core index']
  #allocation1 [shape = 'u32[144,128]{1,0:T(1,128)}', space=vmem, size = 0x12000, scoped, tag = 'internal scratch']
  #allocation2 [shape = 'f32[1,1]{1,0:T(1,128)S(1)}', space=vmem, size = 0x200, scoped, tag = 'scoped memory for _lambda_.13']
  %s0 = inlined_call_operand.vmem [shape: bf16[2048,72], index: 0, kind: input, shape index: {}]
  %s1 = inlined_call_operand.vmem [shape: bf16[72,1], index: 1, kind: input, shape index: {}]
  %s2 = inlined_call_operand.<no memory space> [shape: f32[1,1], index: 2, kind: input, shape index: {}]
  %s3 = inlined_call_operand.vmem [shape: f32[2048,1], index: 3, kind: output, shape index: {}]
  %s4 = sld [smem:[#allocation0]]
  $region45: #{_lambda_.13} parent=0
    _
  %s6 = ssub.s32 1, %s4
  %s7 = scalar_select 0, %s6, %s4
  %v8 = vstv %s2
  %9 = vst [vmem:[#allocation2] sm:$0x1] %v8
  loop: start=0, step=1, limit=6
  $region2: #{_lambda_.13} parent=0 // loop_pre_header
    _
  $region3: #{_lambda_.13} parent=0 // loop_header
    %s11 = sphi 0, %s15
    %p12 = scmp.ge.s32.totalorder %s11, 6
    %s21 = sphi 0, %s23
    %s24 = sphi 0, %s21
    %s25 = sphi 0, %s24
    %s41 = sphi 0, %s25
    %s45 = sphi 0, %s45
    %s47 = sphi 0, %s45
    %s48 = sphi 0, %s47
    %s62 = sphi 0, %s48
    %s66 = sphi 0, %s66
    %s68 = sphi 0, %s66
    %s69 = sphi 0, %s68
    %s83 = sphi 0, %s69
    %s89 = sphi 0, %s91
    %s92 = sphi 0, %s89
    %s93 = sphi 0, %s92
    %s109 = sphi 0, %s93
  $region4: #{_lambda_.13} parent=0 // loop_header_branch
    %14 = sbr.rel (%p12) target = $region8
  $region5: #{_lambda_.13} parent=0 // loop_body
    %s16 = ssub.s32 %s11, 1
    %s17 = ssub.s32 %s11, 2
    %s18 = sadd.s32 %s11, 1
    %s19 = ssub.s32 %s11, %s18
    %p20 = scmp.eq.s32.totalorder %s19, 0
    %s22 = sadd.s32 %s21, 1
    %s23 = scalar_select %p20, %s21, %s22
    %p26 = pneg %p20
    %p27 = scmp.eq.s32.totalorder %s11, 3
    %p28 = por %p26, %p27
    %p29 = scmp.ne.s32.totalorder %s21, %s24
    %p30 = scmp.eq.s32.totalorder %s11, 0
    %p31 = por %p29, %p30
    %p32 = scmp.ne.s32.totalorder %s21, %s24
    %p33 = scmp.eq.s32.totalorder %s16, 3
    %p34 = por %p32, %p33
    %p35 = scmp.ne.s32.totalorder %s24, %s25
    %p36 = scmp.eq.s32.totalorder %s16, 0
    %p37 = por %p35, %p36
    %p38 = scmp.ne.s32.totalorder %s24, %s25
    %p39 = scmp.eq.s32.totalorder %s17, 3
    %p40 = por %p38, %p39
    %p42 = scmp.ne.s32.totalorder %s25, %s41
    %p43 = scmp.eq.s32.totalorder %s17, 0
    %p44 = por %p42, %p43
    %s46 = sadd.s32 %s45, 1
    %p49 = scmp.eq.s32.totalorder %s11, 3
    %p50 = scmp.ne.s32.totalorder %s45, %s47
    %p51 = scmp.eq.s32.totalorder %s11, 0
    %p52 = por %p50, %p51
    %p53 = scmp.ne.s32.totalorder %s45, %s47
    %p54 = scmp.eq.s32.totalorder %s16, 3
    %p55 = por %p53, %p54
    %p56 = scmp.ne.s32.totalorder %s47, %s48
    %p57 = scmp.eq.s32.totalorder %s16, 0
    %p58 = por %p56, %p57
    %p59 = scmp.ne.s32.totalorder %s47, %s48
    %p60 = scmp.eq.s32.totalorder %s17, 3
    %p61 = por %p59, %p60
    %p63 = scmp.ne.s32.totalorder %s48, %s62
    %p64 = scmp.eq.s32.totalorder %s17, 0
    %p65 = por %p63, %p64
    %s67 = sadd.s32 %s66, 1
    %p70 = scmp.eq.s32.totalorder %s11, 3
    %p71 = scmp.ne.s32.totalorder %s66, %s68
    %p72 = scmp.eq.s32.totalorder %s11, 0
    %p73 = por %p71, %p72
    %p74 = scmp.ne.s32.totalorder %s66, %s68
    %p75 = scmp.eq.s32.totalorder %s16, 3
    %p76 = por %p74, %p75
    %p77 = scmp.ne.s32.totalorder %s68, %s69
    %p78 = scmp.eq.s32.totalorder %s16, 0
    %p79 = por %p77, %p78
    %p80 = scmp.ne.s32.totalorder %s68, %s69
    %p81 = scmp.eq.s32.totalorder %s17, 3
    %p82 = por %p80, %p81
    %p84 = scmp.ne.s32.totalorder %s69, %s83
    %p85 = scmp.eq.s32.totalorder %s17, 0
    %p86 = por %p84, %p85
    %s87 = ssub.s32 %s11, %s18
    %p88 = scmp.eq.s32.totalorder %s87, 0
    %s90 = sadd.s32 %s89, 1
    %s91 = scalar_select %p88, %s89, %s90
    %p94 = pneg %p88
    %p95 = scmp.eq.s32.totalorder %s11, 3
    %p96 = por %p94, %p95
    %p97 = scmp.ne.s32.totalorder %s89, %s92
    %p98 = scmp.eq.s32.totalorder %s11, 0
    %p99 = por %p97, %p98
    %p100 = scmp.ne.s32.totalorder %s89, %s92
    %p101 = scmp.eq.s32.totalorder %s16, 3
    %p102 = por %p100, %p101
    %p103 = scmp.ne.s32.totalorder %s92, %s93
    %p104 = scmp.eq.s32.totalorder %s16, 0
    %p105 = por %p103, %p104
    %p106 = scmp.ne.s32.totalorder %s92, %s93
    %p107 = scmp.eq.s32.totalorder %s17, 3
    %p108 = por %p106, %p107
    %p110 = scmp.ne.s32.totalorder %s93, %s109
    %p111 = scmp.eq.s32.totalorder %s17, 0
    %p112 = por %p110, %p111
    %p113 = scmp.le.s32.totalorder 1, %s11
    %p114 = scmp.lt.s32.totalorder %s11, 5
    %p115 = pnand %p113, %p114
    %p116 = pneg %p115
    // Predicated region
    $region9: #{_lambda_.13} parent=5 // pred_check
      _
    $region10: #{_lambda_.13} parent=5 // pred_check_branch
      %118 = sbr.rel (%p115) target = $region12
    $region11: #{_lambda_.13} parent=5 // pred_region
      %s119 = ssub.s32 %s11, 1
      // Predicated region
      $region13: #{_lambda_.13} parent=11 // pred_check
        %p120 = pneg %p58
      $region14: #{_lambda_.13} parent=11 // pred_check_branch
        %122 = sbr.rel (%p120) target = $region16
      $region15: #{_lambda_.13} parent=11 // pred_region
        _
      $region16: #{_lambda_.13} parent=11 // pred_fallthru
        _
      // Predicated region
      $region17: #{_lambda_.13} parent=11 // pred_check
        %p123 = pneg %p79
      $region18: #{_lambda_.13} parent=11 // pred_check_branch
        %125 = sbr.rel (%p123) target = $region20
      $region19: #{_lambda_.13} parent=11 // pred_region
        _
      $region20: #{_lambda_.13} parent=11 // pred_fallthru
        _
    $region12: #{_lambda_.13} parent=5 // pred_fallthru
      _
    %p126 = scmp.lt.s32.totalorder %s11, 4
    // Predicated region
    $region21: #{_lambda_.13} parent=5 // pred_check
      %p127 = pneg %p126
    $region22: #{_lambda_.13} parent=5 // pred_check_branch
      %129 = sbr.rel (%p127) target = $region24
    $region23: #{_lambda_.13} parent=5 // pred_region
      // Predicated region
      $region25: #{_lambda_.13} parent=23 // pred_check
        %p130 = pneg %p31
      $region26: #{_lambda_.13} parent=23 // pred_check_branch
        %132 = sbr.rel (%p130) target = $region28
      $region27: #{_lambda_.13} parent=23 // pred_region
        %s133 = smul.u32 64, %s11
        %p134 = scmp.lt.s32.totalorder %s133, 255
        %s135 = scalar_select %p134, %s133, 255
        %s136 = smul.addr %s135, 4
        %s137 = scalar_lea.vmem %s0, %s136
        %s138 = smul.u32 64, %s11
      $region28: #{_lambda_.13} parent=23 // pred_fallthru
        _
    $region24: #{_lambda_.13} parent=5 // pred_fallthru
      _
    %p139 = scmp.le.s32.totalorder 1, %s11
    %p140 = scmp.lt.s32.totalorder %s11, 5
    %p141 = pnand %p139, %p140
    %p142 = pneg %p141
    // Predicated region
    $region29: #{_lambda_.13} parent=5 // pred_check
      _
    $region30: #{_lambda_.13} parent=5 // pred_check_branch
      %144 = sbr.rel (%p141) target = $region32
    $region31: #{_lambda_.13} parent=5 // pred_region
      %s145 = ssub.s32 %s11, 1
      %s146 = smul.u32 64, %s16
      %p147 = scmp.lt.s32.totalorder %s146, 255
      %s148 = scalar_select %p147, %s146, 255
      %s149 = smul.addr %s148, 4
      %s150 = scalar_lea.vmem %s0, %s149
      %p151 = pneg %p37
      %p152 = pneg %p34
      %p153 = pneg %p58
      %p154 = pneg %p55
      %p155 = pneg %p79
      %p156 = pneg %p76
      %p157 = pneg %p105
      %p158 = pneg %p102
      %s159 = smul.u32 64, %s16
      %p160 = scmp.lt.s32.totalorder %s159, 255
      %s161 = scalar_select %p160, %s159, 255
      %s162 = smul.addr %s161, 8
      %s163 = scalar_lea.vmem %s3, %s162
      %s164 = smul.u32 64, %s16
      %p165 = scmp.lt.s32.totalorder %s164, 255
      %s166 = scalar_select %p165, %s164, 255
      %s167 = smul.addr %s166, 4
      %s168 = scalar_lea.vmem %s0, %s167
      %s169 = smul.u32 64, %s16
      %s170 = smul.u32 64, %s16
      %p171 = scmp.lt.s32.totalorder %s170, 255
      %s172 = scalar_select %p171, %s170, 255
      %s173 = smul.addr %s172, 8
      %s174 = scalar_lea.vmem %s3, %s173
      %s175 = smul.u32 64, %s16
      %v177 = vld [vmem:[%s168] sm:$0xf]
      %v178 = vld [vmem:[%s168 + $0x4] sm:$0xf]
      %v179 = vld [vmem:[%s168 + $0x8] sm:$0xf]
      %v180 = vld [vmem:[%s168 + $0xc] sm:$0xf]
      %v181 = vld [vmem:[%s168 + $0x10] sm:$0xf]
      %v182 = vld [vmem:[%s168 + $0x14] sm:$0xf]
      %v183 = vld [vmem:[%s168 + $0x18] sm:$0xf]
      %v184 = vld [vmem:[%s168 + $0x1c] sm:$0xf]
      %v185 = vld [vmem:[%s168 + $0x20] sm:$0xf]
      %v186 = vld [vmem:[%s168 + $0x24] sm:$0xf]
      %v187 = vld [vmem:[%s168 + $0x28] sm:$0xf]
      %v188 = vld [vmem:[%s168 + $0x2c] sm:$0xf]
      %v189 = vld [vmem:[%s168 + $0x30] sm:$0xf]
      %v190 = vld [vmem:[%s168 + $0x34] sm:$0xf]
      %v191 = vld [vmem:[%s168 + $0x38] sm:$0xf]
      %v192 = vld [vmem:[%s168 + $0x3c] sm:$0xf]
      %v193 = vld [vmem:[%s168 + $0x40] sm:$0xf]
      %v194 = vld [vmem:[%s168 + $0x44] sm:$0xf]
      %v195 = vld [vmem:[%s168 + $0x48] sm:$0xf]
      %v196 = vld [vmem:[%s168 + $0x4c] sm:$0xf]
      %v197 = vld [vmem:[%s168 + $0x50] sm:$0xf]
      %v198 = vld [vmem:[%s168 + $0x54] sm:$0xf]
      %v199 = vld [vmem:[%s168 + $0x58] sm:$0xf]
      %v200 = vld [vmem:[%s168 + $0x5c] sm:$0xf]
      %v201 = vld [vmem:[%s168 + $0x60] sm:$0xf]
      %v202 = vld [vmem:[%s168 + $0x64] sm:$0xf]
      %v203 = vld [vmem:[%s168 + $0x68] sm:$0xf]
      %v204 = vld [vmem:[%s168 + $0x6c] sm:$0xf]
      %v205 = vld [vmem:[%s168 + $0x70] sm:$0xf]
      %v206 = vld [vmem:[%s168 + $0x74] sm:$0xf]
      %v207 = vld [vmem:[%s168 + $0x78] sm:$0xf]
      %v208 = vld [vmem:[%s168 + $0x7c] sm:$0xf]
      %v209 = vld [vmem:[%s168 + $0x80] sm:$0xf]
      %v210 = vld [vmem:[%s168 + $0x84] sm:$0xf]
      %v211 = vld [vmem:[%s168 + $0x88] sm:$0xf]
      %v212 = vld [vmem:[%s168 + $0x8c] sm:$0xf]
      %v213 = vld [vmem:[%s168 + $0x90] sm:$0xf]
      %v214 = vld [vmem:[%s168 + $0x94] sm:$0xf]
      %v215 = vld [vmem:[%s168 + $0x98] sm:$0xf]
      %v216 = vld [vmem:[%s168 + $0x9c] sm:$0xf]
      %v217 = vld [vmem:[%s168 + $0xa0] sm:$0xf]
      %v218 = vld [vmem:[%s168 + $0xa4] sm:$0xf]
      %v219 = vld [vmem:[%s168 + $0xa8] sm:$0xf]
      %v220 = vld [vmem:[%s168 + $0xac] sm:$0xf]
      %v221 = vld [vmem:[%s168 + $0xb0] sm:$0xf]
      %v222 = vld [vmem:[%s168 + $0xb4] sm:$0xf]
      %v223 = vld [vmem:[%s168 + $0xb8] sm:$0xf]
      %v224 = vld [vmem:[%s168 + $0xbc] sm:$0xf]
      %v225 = vld [vmem:[%s168 + $0xc0] sm:$0xf]
      %v226 = vld [vmem:[%s168 + $0xc4] sm:$0xf]
      %v227 = vld [vmem:[%s168 + $0xc8] sm:$0xf]
      %v228 = vld [vmem:[%s168 + $0xcc] sm:$0xf]
      %v229 = vld [vmem:[%s168 + $0xd0] sm:$0xf]
      %v230 = vld [vmem:[%s168 + $0xd4] sm:$0xf]
      %v231 = vld [vmem:[%s168 + $0xd8] sm:$0xf]
      %v232 = vld [vmem:[%s168 + $0xdc] sm:$0xf]
      %v233 = vld [vmem:[%s168 + $0xe0] sm:$0xf]
      %v234 = vld [vmem:[%s168 + $0xe4] sm:$0xf]
      %v235 = vld [vmem:[%s168 + $0xe8] sm:$0xf]
      %v236 = vld [vmem:[%s168 + $0xec] sm:$0xf]
      %v237 = vld [vmem:[%s168 + $0xf0] sm:$0xf]
      %v238 = vld [vmem:[%s168 + $0xf4] sm:$0xf]
      %v239 = vld [vmem:[%s168 + $0xf8] sm:$0xf]
      %v240 = vld [vmem:[%s168 + $0xfc] sm:$0xf]
      %v241 = vld [vmem:[%s1] sm:$0xf]
      %v242 = vld [vmem:[%s1 + $0x4] sm:$0xf]
      %v243 = vld [vmem:[%s1 + $0x8] sm:$0xf]
      %v244 = vld [vmem:[%s1 + $0xc] sm:$0xf]
      %v245 = vld [vmem:[%s1 + $0x10] sm:$0xf]
      %v246 = vld [vmem:[%s1 + $0x14] sm:$0xf]
      %v247 = vld [vmem:[%s1 + $0x18] sm:$0xf]
      %v248 = vld [vmem:[%s1 + $0x1c] sm:$0xf]
      %v249 = vld [vmem:[%s1 + $0x20] sm:$0xf]
      %v250 = vld [vmem:[#allocation2] sm:$0x1]
      %v252 = vlaneseq
      %v253 = vshrl.u32 %v252, 7
      %v254 = vsub.s32 0, %v253
      %v255 = vrot.slane %v250, %v254
      %v321 = vunpack.c.l.b16 %v177
      %v322 = vunpack.c.l.b16 %v178
      %v323 = vunpack.c.l.b16 %v179
      %v324 = vunpack.c.l.b16 %v180
      %v325 = vunpack.c.l.b16 %v181
      %v326 = vunpack.c.l.b16 %v182
      %v327 = vunpack.c.l.b16 %v183
      %v328 = vunpack.c.l.b16 %v184
      %v329 = vunpack.c.l.b16 %v185
      %v330 = vunpack.c.l.b16 %v186
      %v331 = vunpack.c.l.b16 %v187
      %v332 = vunpack.c.l.b16 %v188
      %v333 = vunpack.c.l.b16 %v189
      %v334 = vunpack.c.l.b16 %v190
      %v335 = vunpack.c.l.b16 %v191
      %v336 = vunpack.c.l.b16 %v192
      %v337 = vunpack.c.l.b16 %v193
      %v338 = vunpack.c.l.b16 %v194
      %v339 = vunpack.c.l.b16 %v195
      %v340 = vunpack.c.l.b16 %v196
      %v341 = vunpack.c.l.b16 %v197
      %v342 = vunpack.c.l.b16 %v198
      %v343 = vunpack.c.l.b16 %v199
      %v344 = vunpack.c.l.b16 %v200
      %v345 = vunpack.c.l.b16 %v201
      %v346 = vunpack.c.l.b16 %v202
      %v347 = vunpack.c.l.b16 %v203
      %v348 = vunpack.c.l.b16 %v204
      %v349 = vunpack.c.l.b16 %v205
      %v350 = vunpack.c.l.b16 %v206
      %v351 = vunpack.c.l.b16 %v207
      %v352 = vunpack.c.l.b16 %v208
      %v353 = vunpack.c.l.b16 %v209
      %v354 = vunpack.c.l.b16 %v210
      %v355 = vunpack.c.l.b16 %v211
      %v356 = vunpack.c.l.b16 %v212
      %v357 = vunpack.c.l.b16 %v213
      %v358 = vunpack.c.l.b16 %v214
      %v359 = vunpack.c.l.b16 %v215
      %v360 = vunpack.c.l.b16 %v216
      %v361 = vunpack.c.l.b16 %v217
      %v362 = vunpack.c.l.b16 %v218
      %v363 = vunpack.c.l.b16 %v219
      %v364 = vunpack.c.l.b16 %v220
      %v365 = vunpack.c.l.b16 %v221
      %v366 = vunpack.c.l.b16 %v222
      %v367 = vunpack.c.l.b16 %v223
      %v368 = vunpack.c.l.b16 %v224
      %v369 = vunpack.c.l.b16 %v225
      %v370 = vunpack.c.l.b16 %v226
      %v371 = vunpack.c.l.b16 %v227
      %v372 = vunpack.c.l.b16 %v228
      %v373 = vunpack.c.l.b16 %v229
      %v374 = vunpack.c.l.b16 %v230
      %v375 = vunpack.c.l.b16 %v231
      %v376 = vunpack.c.l.b16 %v232
      %v377 = vunpack.c.l.b16 %v233
      %v378 = vunpack.c.l.b16 %v234
      %v379 = vunpack.c.l.b16 %v235
      %v380 = vunpack.c.l.b16 %v236
      %v381 = vunpack.c.l.b16 %v237
      %v382 = vunpack.c.l.b16 %v238
      %v383 = vunpack.c.l.b16 %v239
      %v384 = vunpack.c.l.b16 %v240
      %v385 = vpack.c.b16 %v322, %v321
      %v386 = vpack.c.b16 %v324, %v323
      %v387 = vpack.c.b16 %v326, %v325
      %v388 = vpack.c.b16 %v328, %v327
      %v389 = vpack.c.b16 %v330, %v329
      %v390 = vpack.c.b16 %v332, %v331
      %v391 = vpack.c.b16 %v334, %v333
      %v392 = vpack.c.b16 %v336, %v335
      %v393 = vpack.c.b16 %v338, %v337
      %v394 = vpack.c.b16 %v340, %v339
      %v395 = vpack.c.b16 %v342, %v341
      %v396 = vpack.c.b16 %v344, %v343
      %v397 = vpack.c.b16 %v346, %v345
      %v398 = vpack.c.b16 %v348, %v347
      %v399 = vpack.c.b16 %v350, %v349
      %v400 = vpack.c.b16 %v352, %v351
      %v401 = vpack.c.b16 %v354, %v353
      %v402 = vpack.c.b16 %v356, %v355
      %v403 = vpack.c.b16 %v358, %v357
      %v404 = vpack.c.b16 %v360, %v359
      %v405 = vpack.c.b16 %v362, %v361
      %v406 = vpack.c.b16 %v364, %v363
      %v407 = vpack.c.b16 %v366, %v365
      %v408 = vpack.c.b16 %v368, %v367
      %v409 = vpack.c.b16 %v370, %v369
      %v410 = vpack.c.b16 %v372, %v371
      %v411 = vpack.c.b16 %v374, %v373
      %v412 = vpack.c.b16 %v376, %v375
      %v413 = vpack.c.b16 %v378, %v377
      %v414 = vpack.c.b16 %v380, %v379
      %v415 = vpack.c.b16 %v382, %v381
      %v416 = vpack.c.b16 %v384, %v383
      %v426 = vunpack.c.l.b16 %v241
      %v427 = vunpack.c.l.b16 %v242
      %v428 = vunpack.c.l.b16 %v243
      %v429 = vunpack.c.l.b16 %v244
      %v430 = vunpack.c.l.b16 %v245
      %v431 = vunpack.c.l.b16 %v246
      %v432 = vunpack.c.l.b16 %v247
      %v433 = vunpack.c.l.b16 %v248
      %v434 = vunpack.c.l.b16 %v249
      %v435 = vpack.c.b16 %v427, %v426
      %v436 = vpack.c.b16 %v429, %v428
      %v437 = vpack.c.b16 %v431, %v430
      %v438 = vpack.c.b16 %v433, %v432
      %v439 = vpack.c.b16 %v434, %v434
      %vm444 = vcmask 588800
      %v446 = vsel %vm444, %v385, 0
      %v449 = vsel %vm444, %v386, 0
      %v452 = vsel %vm444, %v387, 0
      %v455 = vsel %vm444, %v388, 0
      %v458 = vsel %vm444, %v389, 0
      %v461 = vsel %vm444, %v390, 0
      %v464 = vsel %vm444, %v391, 0
      %v467 = vsel %vm444, %v392, 0
      %v470 = vsel %vm444, %v393, 0
      %v473 = vsel %vm444, %v394, 0
      %v476 = vsel %vm444, %v395, 0
      %v479 = vsel %vm444, %v396, 0
      %v482 = vsel %vm444, %v397, 0
      %v485 = vsel %vm444, %v398, 0
      %v488 = vsel %vm444, %v399, 0
      %v491 = vsel %vm444, %v400, 0
      %v494 = vsel %vm444, %v401, 0
      %v497 = vsel %vm444, %v402, 0
      %v500 = vsel %vm444, %v403, 0
      %v503 = vsel %vm444, %v404, 0
      %v506 = vsel %vm444, %v405, 0
      %v509 = vsel %vm444, %v406, 0
      %v512 = vsel %vm444, %v407, 0
      %v515 = vsel %vm444, %v408, 0
      %v518 = vsel %vm444, %v409, 0
      %v521 = vsel %vm444, %v410, 0
      %v524 = vsel %vm444, %v411, 0
      %v527 = vsel %vm444, %v412, 0
      %v530 = vsel %vm444, %v413, 0
      %v533 = vsel %vm444, %v414, 0
      %v536 = vsel %vm444, %v415, 0
      %v539 = vsel %vm444, %v416, 0
      %vm541 = vcmask 1043456
      %v543 = vsel %vm541, %v439, 0
      %545 = vmatprep.subr.bf16.mxu0 0
      %546 = vmatpush1.bf16.msra.mxu0 0
      %547 = vmatprep.subr.bf16.mxu0 0
      %548 = vmatpush1.bf16.msra.mxu0 0
      %549 = vmatprep.subr.bf16.mxu0 0
      %550 = vmatpush1.bf16.msra.mxu0 0
      %551 = vmatprep.subr.bf16.mxu0 0
      %552 = vmatpush1.bf16.msra.mxu0 %v543
      %553 = vmatprep.subr.bf16.mxu0 0
      %554 = vmatpush1.bf16.msra.mxu0 %v438
      %555 = vmatprep.subr.bf16.mxu0 0
      %556 = vmatpush1.bf16.msra.mxu0 %v437
      %557 = vmatprep.subr.bf16.mxu0 0
      %558 = vmatpush1.bf16.msra.mxu0 %v436
      %559 = vmatprep.subr.bf16.mxu0 0
      %560 = vmatpush1.bf16.msra.mxu0 %v435
      %561 = vmatprep.subr.bf16.mxu0 0
      %562 = vmatpush2.bf16.msra.mxu0 0
      %563 = vmatprep.subr.bf16.mxu0 0
      %564 = vmatpush2.bf16.msra.mxu0 0
      %565 = vmatprep.subr.bf16.mxu0 0
      %566 = vmatpush2.bf16.msra.mxu0 0
      %567 = vmatprep.subr.bf16.mxu0 0
      %568 = vmatpush2.bf16.msra.mxu0 0
      %569 = vmatprep.subr.bf16.mxu0 0
      %570 = vmatpush2.bf16.msra.mxu0 0
      %571 = vmatprep.subr.bf16.mxu0 0
      %572 = vmatpush2.bf16.msra.mxu0 0
      %573 = vmatprep.subr.bf16.mxu0 0
      %574 = vmatpush2.bf16.msra.mxu0 0
      %575 = vmatprep.subr.bf16.mxu0 0
      %576 = vmatpush2.bf16.msra.mxu0 0
      %577 = vmatprep.mubr.bf16.mxu0 0
      %578 = vmatmul.mubr.bf16.gmra.mxu0 %v446
      %v579 = vpop.f32.mrf.mxu0
      %v580 = vadd.f32 %v255, %v579
      %v581 = vpop.f32.mrf.mxu0
      %v582 = vpop.f32.mrf.mxu0
      %v583 = vadd.f32 %v255, %v582
      %v584 = vpop.f32.mrf.mxu0
      %585 = vmatprep.mubr.bf16.mxu0 0
      %586 = vmatmul.mubr.bf16.gmra.mxu0 %v449
      %v587 = vpop.f32.mrf.mxu0
      %v588 = vadd.f32 %v255, %v587
      %v589 = vpop.f32.mrf.mxu0
      %v590 = vpop.f32.mrf.mxu0
      %v591 = vadd.f32 %v255, %v590
      %v592 = vpop.f32.mrf.mxu0
      %593 = vmatprep.mubr.bf16.mxu0 0
      %594 = vmatmul.mubr.bf16.gmra.mxu0 %v452
      %v595 = vpop.f32.mrf.mxu0
      %v596 = vadd.f32 %v255, %v595
      %v597 = vpop.f32.mrf.mxu0
      %v598 = vpop.f32.mrf.mxu0
      %v599 = vadd.f32 %v255, %v598
      %v600 = vpop.f32.mrf.mxu0
      %601 = vmatprep.mubr.bf16.mxu0 0
      %602 = vmatmul.mubr.bf16.gmra.mxu0 %v455
      %v603 = vpop.f32.mrf.mxu0
      %v604 = vadd.f32 %v255, %v603
      %v605 = vpop.f32.mrf.mxu0
      %v606 = vpop.f32.mrf.mxu0
      %v607 = vadd.f32 %v255, %v606
      %v608 = vpop.f32.mrf.mxu0
      %609 = vmatprep.mubr.bf16.mxu0 0
      %610 = vmatmul.mubr.bf16.gmra.mxu0 %v458
      %v611 = vpop.f32.mrf.mxu0
      %v612 = vadd.f32 %v255, %v611
      %v613 = vpop.f32.mrf.mxu0
      %v614 = vpop.f32.mrf.mxu0
      %v615 = vadd.f32 %v255, %v614
      %v616 = vpop.f32.mrf.mxu0
      %617 = vmatprep.mubr.bf16.mxu0 0
      %618 = vmatmul.mubr.bf16.gmra.mxu0 %v461
      %v619 = vpop.f32.mrf.mxu0
      %v620 = vadd.f32 %v255, %v619
      %v621 = vpop.f32.mrf.mxu0
      %v622 = vpop.f32.mrf.mxu0
      %v623 = vadd.f32 %v255, %v622
      %v624 = vpop.f32.mrf.mxu0
      %625 = vmatprep.mubr.bf16.mxu0 0
      %626 = vmatmul.mubr.bf16.gmra.mxu0 %v464
      %v627 = vpop.f32.mrf.mxu0
      %v628 = vadd.f32 %v255, %v627
      %v629 = vpop.f32.mrf.mxu0
      %v630 = vpop.f32.mrf.mxu0
      %v631 = vadd.f32 %v255, %v630
      %v632 = vpop.f32.mrf.mxu0
      %633 = vmatprep.mubr.bf16.mxu0 0
      %634 = vmatmul.mubr.bf16.gmra.mxu0 %v467
      %v635 = vpop.f32.mrf.mxu0
      %v636 = vadd.f32 %v255, %v635
      %v637 = vpop.f32.mrf.mxu0
      %v638 = vpop.f32.mrf.mxu0
      %v639 = vadd.f32 %v255, %v638
      %v640 = vpop.f32.mrf.mxu0
      %641 = vmatprep.mubr.bf16.mxu0 0
      %642 = vmatmul.mubr.bf16.gmra.mxu0 %v470
      %v643 = vpop.f32.mrf.mxu0
      %v644 = vadd.f32 %v255, %v643
      %v645 = vpop.f32.mrf.mxu0
      %v646 = vpop.f32.mrf.mxu0
      %v647 = vadd.f32 %v255, %v646
      %v648 = vpop.f32.mrf.mxu0
      %649 = vmatprep.mubr.bf16.mxu0 0
      %650 = vmatmul.mubr.bf16.gmra.mxu0 %v473
      %v651 = vpop.f32.mrf.mxu0
      %v652 = vadd.f32 %v255, %v651
      %v653 = vpop.f32.mrf.mxu0
      %v654 = vpop.f32.mrf.mxu0
      %v655 = vadd.f32 %v255, %v654
      %v656 = vpop.f32.mrf.mxu0
      %657 = vmatprep.mubr.bf16.mxu0 0
      %658 = vmatmul.mubr.bf16.gmra.mxu0 %v476
      %v659 = vpop.f32.mrf.mxu0
      %v660 = vadd.f32 %v255, %v659
      %v661 = vpop.f32.mrf.mxu0
      %v662 = vpop.f32.mrf.mxu0
      %v663 = vadd.f32 %v255, %v662
      %v664 = vpop.f32.mrf.mxu0
      %665 = vmatprep.mubr.bf16.mxu0 0
      %666 = vmatmul.mubr.bf16.gmra.mxu0 %v479
      %v667 = vpop.f32.mrf.mxu0
      %v668 = vadd.f32 %v255, %v667
      %v669 = vpop.f32.mrf.mxu0
      %v670 = vpop.f32.mrf.mxu0
      %v671 = vadd.f32 %v255, %v670
      %v672 = vpop.f32.mrf.mxu0
      %673 = vmatprep.mubr.bf16.mxu0 0
      %674 = vmatmul.mubr.bf16.gmra.mxu0 %v482
      %v675 = vpop.f32.mrf.mxu0
      %v676 = vadd.f32 %v255, %v675
      %v677 = vpop.f32.mrf.mxu0
      %v678 = vpop.f32.mrf.mxu0
      %v679 = vadd.f32 %v255, %v678
      %v680 = vpop.f32.mrf.mxu0
      %681 = vmatprep.mubr.bf16.mxu0 0
      %682 = vmatmul.mubr.bf16.gmra.mxu0 %v485
      %v683 = vpop.f32.mrf.mxu0
      %v684 = vadd.f32 %v255, %v683
      %v685 = vpop.f32.mrf.mxu0
      %v686 = vpop.f32.mrf.mxu0
      %v687 = vadd.f32 %v255, %v686
      %v688 = vpop.f32.mrf.mxu0
      %689 = vmatprep.mubr.bf16.mxu0 0
      %690 = vmatmul.mubr.bf16.gmra.mxu0 %v488
      %v691 = vpop.f32.mrf.mxu0
      %v692 = vadd.f32 %v255, %v691
      %v693 = vpop.f32.mrf.mxu0
      %v694 = vpop.f32.mrf.mxu0
      %v695 = vadd.f32 %v255, %v694
      %v696 = vpop.f32.mrf.mxu0
      %697 = vmatprep.mubr.bf16.mxu0 0
      %698 = vmatmul.mubr.bf16.gmra.mxu0 %v491
      %v699 = vpop.f32.mrf.mxu0
      %v700 = vadd.f32 %v255, %v699
      %v701 = vpop.f32.mrf.mxu0
      %v702 = vpop.f32.mrf.mxu0
      %v703 = vadd.f32 %v255, %v702
      %v704 = vpop.f32.mrf.mxu0
      %705 = vmatprep.mubr.bf16.mxu0 0
      %706 = vmatmul.mubr.bf16.gmra.mxu0 %v494
      %v707 = vpop.f32.mrf.mxu0
      %v708 = vadd.f32 %v255, %v707
      %v709 = vpop.f32.mrf.mxu0
      %v710 = vpop.f32.mrf.mxu0
      %v711 = vadd.f32 %v255, %v710
      %v712 = vpop.f32.mrf.mxu0
      %713 = vmatprep.mubr.bf16.mxu0 0
      %714 = vmatmul.mubr.bf16.gmra.mxu0 %v497
      %v715 = vpop.f32.mrf.mxu0
      %v716 = vadd.f32 %v255, %v715
      %v717 = vpop.f32.mrf.mxu0
      %v718 = vpop.f32.mrf.mxu0
      %v719 = vadd.f32 %v255, %v718
      %v720 = vpop.f32.mrf.mxu0
      %721 = vmatprep.mubr.bf16.mxu0 0
      %722 = vmatmul.mubr.bf16.gmra.mxu0 %v500
      %v723 = vpop.f32.mrf.mxu0
      %v724 = vadd.f32 %v255, %v723
      %v725 = vpop.f32.mrf.mxu0
      %v726 = vpop.f32.mrf.mxu0
      %v727 = vadd.f32 %v255, %v726
      %v728 = vpop.f32.mrf.mxu0
      %729 = vmatprep.mubr.bf16.mxu0 0
      %730 = vmatmul.mubr.bf16.gmra.mxu0 %v503
      %v731 = vpop.f32.mrf.mxu0
      %v732 = vadd.f32 %v255, %v731
      %v733 = vpop.f32.mrf.mxu0
      %v734 = vpop.f32.mrf.mxu0
      %v735 = vadd.f32 %v255, %v734
      %v736 = vpop.f32.mrf.mxu0
      %737 = vmatprep.mubr.bf16.mxu0 0
      %738 = vmatmul.mubr.bf16.gmra.mxu0 %v506
      %v739 = vpop.f32.mrf.mxu0
      %v740 = vadd.f32 %v255, %v739
      %v741 = vpop.f32.mrf.mxu0
      %v742 = vpop.f32.mrf.mxu0
      %v743 = vadd.f32 %v255, %v742
      %v744 = vpop.f32.mrf.mxu0
      %745 = vmatprep.mubr.bf16.mxu0 0
      %746 = vmatmul.mubr.bf16.gmra.mxu0 %v509
      %v747 = vpop.f32.mrf.mxu0
      %v748 = vadd.f32 %v255, %v747
      %v749 = vpop.f32.mrf.mxu0
      %v750 = vpop.f32.mrf.mxu0
      %v751 = vadd.f32 %v255, %v750
      %v752 = vpop.f32.mrf.mxu0
      %753 = vmatprep.mubr.bf16.mxu0 0
      %754 = vmatmul.mubr.bf16.gmra.mxu0 %v512
      %v755 = vpop.f32.mrf.mxu0
      %v756 = vadd.f32 %v255, %v755
      %v757 = vpop.f32.mrf.mxu0
      %v758 = vpop.f32.mrf.mxu0
      %v759 = vadd.f32 %v255, %v758
      %v760 = vpop.f32.mrf.mxu0
      %761 = vmatprep.mubr.bf16.mxu0 0
      %762 = vmatmul.mubr.bf16.gmra.mxu0 %v515
      %v763 = vpop.f32.mrf.mxu0
      %v764 = vadd.f32 %v255, %v763
      %v765 = vpop.f32.mrf.mxu0
      %v766 = vpop.f32.mrf.mxu0
      %v767 = vadd.f32 %v255, %v766
      %v768 = vpop.f32.mrf.mxu0
      %769 = vmatprep.mubr.bf16.mxu0 0
      %770 = vmatmul.mubr.bf16.gmra.mxu0 %v518
      %v771 = vpop.f32.mrf.mxu0
      %v772 = vadd.f32 %v255, %v771
      %v773 = vpop.f32.mrf.mxu0
      %v774 = vpop.f32.mrf.mxu0
      %v775 = vadd.f32 %v255, %v774
      %v776 = vpop.f32.mrf.mxu0
      %777 = vmatprep.mubr.bf16.mxu0 0
      %778 = vmatmul.mubr.bf16.gmra.mxu0 %v521
      %v779 = vpop.f32.mrf.mxu0
      %v780 = vadd.f32 %v255, %v779
      %v781 = vpop.f32.mrf.mxu0
      %v782 = vpop.f32.mrf.mxu0
      %v783 = vadd.f32 %v255, %v782
      %v784 = vpop.f32.mrf.mxu0
      %785 = vmatprep.mubr.bf16.mxu0 0
      %786 = vmatmul.mubr.bf16.gmra.mxu0 %v524
      %v787 = vpop.f32.mrf.mxu0
      %v788 = vadd.f32 %v255, %v787
      %v789 = vpop.f32.mrf.mxu0
      %v790 = vpop.f32.mrf.mxu0
      %v791 = vadd.f32 %v255, %v790
      %v792 = vpop.f32.mrf.mxu0
      %793 = vmatprep.mubr.bf16.mxu0 0
      %794 = vmatmul.mubr.bf16.gmra.mxu0 %v527
      %v795 = vpop.f32.mrf.mxu0
      %v796 = vadd.f32 %v255, %v795
      %v797 = vpop.f32.mrf.mxu0
      %v798 = vpop.f32.mrf.mxu0
      %v799 = vadd.f32 %v255, %v798
      %v800 = vpop.f32.mrf.mxu0
      %801 = vmatprep.mubr.bf16.mxu0 0
      %802 = vmatmul.mubr.bf16.gmra.mxu0 %v530
      %v803 = vpop.f32.mrf.mxu0
      %v804 = vadd.f32 %v255, %v803
      %v805 = vpop.f32.mrf.mxu0
      %v806 = vpop.f32.mrf.mxu0
      %v807 = vadd.f32 %v255, %v806
      %v808 = vpop.f32.mrf.mxu0
      %809 = vmatprep.mubr.bf16.mxu0 0
      %810 = vmatmul.mubr.bf16.gmra.mxu0 %v533
      %v811 = vpop.f32.mrf.mxu0
      %v812 = vadd.f32 %v255, %v811
      %v813 = vpop.f32.mrf.mxu0
      %v814 = vpop.f32.mrf.mxu0
      %v815 = vadd.f32 %v255, %v814
      %v816 = vpop.f32.mrf.mxu0
      %817 = vmatprep.mubr.bf16.mxu0 0
      %818 = vmatmul.mubr.bf16.gmra.mxu0 %v536
      %v819 = vpop.f32.mrf.mxu0
      %v820 = vadd.f32 %v255, %v819
      %v821 = vpop.f32.mrf.mxu0
      %v822 = vpop.f32.mrf.mxu0
      %v823 = vadd.f32 %v255, %v822
      %v824 = vpop.f32.mrf.mxu0
      %825 = vmatprep.mubr.bf16.mxu0 0
      %826 = vmatmul.mubr.bf16.gmra.mxu0 %v539
      %v827 = vpop.f32.mrf.mxu0
      %v828 = vadd.f32 %v255, %v827
      %v829 = vpop.f32.mrf.mxu0
      %v830 = vpop.f32.mrf.mxu0
      %v831 = vadd.f32 %v255, %v830
      %v832 = vpop.f32.mrf.mxu0
      %833 = vdwg.mxu0
      %vm834 = vcmask 7168
      %835 = vst.msk [vmem:[%s174] sm:$0xff] %vm834, %v580
      %836 = vst.msk [vmem:[%s174 + $0x8] sm:$0xff] %vm834, %v583
      %837 = vst.msk [vmem:[%s174 + $0x10] sm:$0xff] %vm834, %v588
      %838 = vst.msk [vmem:[%s174 + $0x18] sm:$0xff] %vm834, %v591
      %839 = vst.msk [vmem:[%s174 + $0x20] sm:$0xff] %vm834, %v596
      %840 = vst.msk [vmem:[%s174 + $0x28] sm:$0xff] %vm834, %v599
      %841 = vst.msk [vmem:[%s174 + $0x30] sm:$0xff] %vm834, %v604
      %842 = vst.msk [vmem:[%s174 + $0x38] sm:$0xff] %vm834, %v607
      %843 = vst.msk [vmem:[%s174 + $0x40] sm:$0xff] %vm834, %v612
      %844 = vst.msk [vmem:[%s174 + $0x48] sm:$0xff] %vm834, %v615
      %845 = vst.msk [vmem:[%s174 + $0x50] sm:$0xff] %vm834, %v620
      %846 = vst.msk [vmem:[%s174 + $0x58] sm:$0xff] %vm834, %v623
      %847 = vst.msk [vmem:[%s174 + $0x60] sm:$0xff] %vm834, %v628
      %848 = vst.msk [vmem:[%s174 + $0x68] sm:$0xff] %vm834, %v631
      %849 = vst.msk [vmem:[%s174 + $0x70] sm:$0xff] %vm834, %v636
      %850 = vst.msk [vmem:[%s174 + $0x78] sm:$0xff] %vm834, %v639
      %851 = vst.msk [vmem:[%s174 + $0x80] sm:$0xff] %vm834, %v644
      %852 = vst.msk [vmem:[%s174 + $0x88] sm:$0xff] %vm834, %v647
      %853 = vst.msk [vmem:[%s174 + $0x90] sm:$0xff] %vm834, %v652
      %854 = vst.msk [vmem:[%s174 + $0x98] sm:$0xff] %vm834, %v655
      %855 = vst.msk [vmem:[%s174 + $0xa0] sm:$0xff] %vm834, %v660
      %856 = vst.msk [vmem:[%s174 + $0xa8] sm:$0xff] %vm834, %v663
      %857 = vst.msk [vmem:[%s174 + $0xb0] sm:$0xff] %vm834, %v668
      %858 = vst.msk [vmem:[%s174 + $0xb8] sm:$0xff] %vm834, %v671
      %859 = vst.msk [vmem:[%s174 + $0xc0] sm:$0xff] %vm834, %v676
      %860 = vst.msk [vmem:[%s174 + $0xc8] sm:$0xff] %vm834, %v679
      %861 = vst.msk [vmem:[%s174 + $0xd0] sm:$0xff] %vm834, %v684
      %862 = vst.msk [vmem:[%s174 + $0xd8] sm:$0xff] %vm834, %v687
      %863 = vst.msk [vmem:[%s174 + $0xe0] sm:$0xff] %vm834, %v692
      %864 = vst.msk [vmem:[%s174 + $0xe8] sm:$0xff] %vm834, %v695
      %865 = vst.msk [vmem:[%s174 + $0xf0] sm:$0xff] %vm834, %v700
      %866 = vst.msk [vmem:[%s174 + $0xf8] sm:$0xff] %vm834, %v703
      %867 = vst.msk [vmem:[%s174 + $0x100] sm:$0xff] %vm834, %v708
      %868 = vst.msk [vmem:[%s174 + $0x108] sm:$0xff] %vm834, %v711
      %869 = vst.msk [vmem:[%s174 + $0x110] sm:$0xff] %vm834, %v716
      %870 = vst.msk [vmem:[%s174 + $0x118] sm:$0xff] %vm834, %v719
      %871 = vst.msk [vmem:[%s174 + $0x120] sm:$0xff] %vm834, %v724
      %872 = vst.msk [vmem:[%s174 + $0x128] sm:$0xff] %vm834, %v727
      %873 = vst.msk [vmem:[%s174 + $0x130] sm:$0xff] %vm834, %v732
      %874 = vst.msk [vmem:[%s174 + $0x138] sm:$0xff] %vm834, %v735
      %875 = vst.msk [vmem:[%s174 + $0x140] sm:$0xff] %vm834, %v740
      %876 = vst.msk [vmem:[%s174 + $0x148] sm:$0xff] %vm834, %v743
      %877 = vst.msk [vmem:[%s174 + $0x150] sm:$0xff] %vm834, %v748
      %878 = vst.msk [vmem:[%s174 + $0x158] sm:$0xff] %vm834, %v751
      %879 = vst.msk [vmem:[%s174 + $0x160] sm:$0xff] %vm834, %v756
      %880 = vst.msk [vmem:[%s174 + $0x168] sm:$0xff] %vm834, %v759
      %881 = vst.msk [vmem:[%s174 + $0x170] sm:$0xff] %vm834, %v764
      %882 = vst.msk [vmem:[%s174 + $0x178] sm:$0xff] %vm834, %v767
      %883 = vst.msk [vmem:[%s174 + $0x180] sm:$0xff] %vm834, %v772
      %884 = vst.msk [vmem:[%s174 + $0x188] sm:$0xff] %vm834, %v775
      %885 = vst.msk [vmem:[%s174 + $0x190] sm:$0xff] %vm834, %v780
      %886 = vst.msk [vmem:[%s174 + $0x198] sm:$0xff] %vm834, %v783
      %887 = vst.msk [vmem:[%s174 + $0x1a0] sm:$0xff] %vm834, %v788
      %888 = vst.msk [vmem:[%s174 + $0x1a8] sm:$0xff] %vm834, %v791
      %889 = vst.msk [vmem:[%s174 + $0x1b0] sm:$0xff] %vm834, %v796
      %890 = vst.msk [vmem:[%s174 + $0x1b8] sm:$0xff] %vm834, %v799
      %891 = vst.msk [vmem:[%s174 + $0x1c0] sm:$0xff] %vm834, %v804
      %892 = vst.msk [vmem:[%s174 + $0x1c8] sm:$0xff] %vm834, %v807
      %893 = vst.msk [vmem:[%s174 + $0x1d0] sm:$0xff] %vm834, %v812
      %894 = vst.msk [vmem:[%s174 + $0x1d8] sm:$0xff] %vm834, %v815
      %895 = vst.msk [vmem:[%s174 + $0x1e0] sm:$0xff] %vm834, %v820
      %896 = vst.msk [vmem:[%s174 + $0x1e8] sm:$0xff] %vm834, %v823
      %897 = vst.msk [vmem:[%s174 + $0x1f0] sm:$0xff] %vm834, %v828
      %898 = vst.msk [vmem:[%s174 + $0x1f8] sm:$0xff] %vm834, %v831
      %s899 = smul.u32 64, %s16
      %p900 = scmp.lt.s32.totalorder %s899, 255
      %s901 = scalar_select %p900, %s899, 255
      %s902 = smul.addr %s901, 8
      %s903 = scalar_lea.vmem %s3, %s902
      // Predicated region
      $region33: #{_lambda_.13} parent=31 // pred_check
        %p904 = pneg %p102
      $region34: #{_lambda_.13} parent=31 // pred_check_branch
        %906 = sbr.rel (%p904) target = $region36
      $region35: #{_lambda_.13} parent=31 // pred_region
        %s907 = smul.u32 64, %s16
      $region36: #{_lambda_.13} parent=31 // pred_fallthru
        _
    $region32: #{_lambda_.13} parent=5 // pred_fallthru
      _
    %p908 = scmp.le.s32.totalorder 2, %s11
    // Predicated region
    $region37: #{_lambda_.13} parent=5 // pred_check
      %p909 = pneg %p908
    $region38: #{_lambda_.13} parent=5 // pred_check_branch
      %911 = sbr.rel (%p909) target = $region40
    $region39: #{_lambda_.13} parent=5 // pred_region
      %s912 = ssub.s32 %s11, 2
      // Predicated region
      $region41: #{_lambda_.13} parent=39 // pred_check
        %p913 = pneg %p108
      $region42: #{_lambda_.13} parent=39 // pred_check_branch
        %915 = sbr.rel (%p913) target = $region44
      $region43: #{_lambda_.13} parent=39 // pred_region
        %s916 = smul.u32 64, %s17
        %p917 = scmp.lt.s32.totalorder %s916, 255
        %s918 = scalar_select %p917, %s916, 255
        %s919 = smul.addr %s918, 8
        %s920 = scalar_lea.vmem %s3, %s919
      $region44: #{_lambda_.13} parent=39 // pred_fallthru
        _
    $region40: #{_lambda_.13} parent=5 // pred_fallthru
      _
  $region6: #{_lambda_.13} parent=0 // loop_footer
    %s15 = sadd.s32 1, %s11
  $region7: #{_lambda_.13} parent=0 // loop_footer_branch
    %10 = sbr.rel target = $region3
  $region8: #{_lambda_.13} parent=0 // loop_exit
    _

</llo_original>
